<compile_context>
chip_gen: v5e
topology: v5e:2x2
jax: 0.10.0
libtpu: 0.0.40
codegen_flags: <defaults>
</compile_context>

<pallas_src>
import functools

import jax
import jax.numpy as jnp
from jax.experimental import pallas as pl
from jax.experimental.pallas import tpu as pltpu


def _round_up(x, m):
    return ((x + m - 1) // m) * m


@functools.lru_cache(maxsize=1)
def _device_kind():
    try:
        return jax.devices()[0].device_kind.lower()
    except Exception:
        return ""


def _is_v7x():
    return "v7" in _device_kind()


def _mxu_multiple():
    kind = _device_kind()
    # v6e / v7x MXUs are 2x256^2 -> pad contraction/lane dims to 256.
    # v2..v5 are 128-wide -> 128 is already optimal (less padding, less VMEM).
    if ("v6" in kind) or ("v7" in kind):
        return 256
    return 128


def _epd_kernel(x_ref,
                we_ref, be_ref,
                wb1_ref, bb1_ref, wb2_ref, bb2_ref, wb3_ref, bb3_ref,
                wd_ref, bd_ref,
                o_ref,
                *, num_blocks, compute_dtype):
    cd = compute_dtype

    # encode: cat(v, s) @ We + be   (inputs already concatenated in the wrapper)
    x = (jnp.dot(x_ref[...], we_ref[...], preferred_element_type=jnp.float32)
         + be_ref[...])                                    # f32 (block_b, latent_p)

    # residual process blocks (statically unrolled; weights are VMEM resident)
    for blk in range(num_blocks):
        h = jnp.dot(x.astype(cd), wb1_ref[blk],
                    preferred_element_type=jnp.float32) + bb1_ref[blk]
        h = jnp.maximum(h, 0.0)
        h = jnp.dot(h.astype(cd), wb2_ref[blk],
                    preferred_element_type=jnp.float32) + bb2_ref[blk]
        h = jnp.maximum(h, 0.0)
        h = jnp.dot(h.astype(cd), wb3_ref[blk],
                    preferred_element_type=jnp.float32) + bb3_ref[blk]
        x = x + h                                          # residual add, f32

    # decode (lane-padded to 128 output columns -> unmasked stores)
    out = jnp.dot(x.astype(cd), wd_ref[...],
                  preferred_element_type=jnp.float32) + bd_ref[...]
    o_ref[...] = out.astype(o_ref.dtype)


@functools.partial(jax.jit, static_argnames=("block_b", "compute_dtype"))
def epd_forward(vertical, surface, params, *, block_b=None,
                compute_dtype=jnp.bfloat16):
    """vertical: (B, vE) f32, surface: (B, sE) f32 -> (B, 6) f32."""
    B, vE = vertical.shape
    Bs, sE = surface.shape
    assert B == Bs
    E = vE + sE

    we = params["we"]                       # (vE + sE, latent)
    latent = we.shape[1]
    hidden = params["wb2"].shape[1]
    num_blocks = params["wb1"].shape[0]
    out_f = params["wd"].shape[1]

    cd = jnp.dtype(compute_dtype)
    itemsize = cd.itemsize

    # ---- MXU-friendly zero padding of latent/hidden + lane-dense output ----
    mxu = _mxu_multiple()
    latent_p = _round_up(latent, mxu)
    hidden_p = _round_up(hidden, mxu)
    out_p = _round_up(max(out_f, 128), 128)

    def pad2(w, rows, cols):
        return jnp.pad(w, ((0, rows - w.shape[0]), (0, cols - w.shape[1])))

    def pad3(w, rows, cols):
        return jnp.pad(w, ((0, 0), (0, rows - w.shape[1]), (0, cols - w.shape[2])))

    # Matmul operands in compute_dtype (bf16 halves weight VMEM + DMA and uses
    # the native bf16 MXU path); biases stay f32 (all VPU work is f32).
    we_p = pad2(we, E, latent_p).astype(cd)
    be_p = jnp.pad(params["be"], (0, latent_p - latent)
                   ).reshape(1, latent_p).astype(jnp.float32)
    wb1 = pad3(params["wb1"], latent_p, hidden_p).astype(cd)
    bb1 = jnp.pad(params["bb1"], ((0, 0), (0, hidden_p - hidden))
                  ).reshape(num_blocks, 1, hidden_p).astype(jnp.float32)
    wb2 = pad3(params["wb2"], hidden_p, hidden_p).astype(cd)
    bb2 = jnp.pad(params["bb2"], ((0, 0), (0, hidden_p - hidden))
                  ).reshape(num_blocks, 1, hidden_p).astype(jnp.float32)
    wb3 = pad3(params["wb3"], hidden_p, latent_p).astype(cd)
    bb3 = jnp.pad(params["bb3"], ((0, 0), (0, latent_p - latent))
                  ).reshape(num_blocks, 1, latent_p).astype(jnp.float32)
    wd = pad2(params["wd"], latent_p, out_p).astype(cd)
    bd = jnp.pad(params["bd"], (0, out_p - out_f)
                 ).reshape(1, out_p).astype(jnp.float32)

    # Fused encode input: one (B, vE+sE) stream instead of two narrow ones.
    x = jnp.concatenate([vertical, surface], axis=-1).astype(cd)

    # ---- batch tiling -------------------------------------------------------
    row_mult = max(8, 32 // itemsize)       # 8 for f32, 16 for bf16, 32 for int8
    if block_b is None:
        block_b = 1024 if B >= 4096 else 512
    block_b = max(row_mult, (block_b // row_mult) * row_mult)
    block_b = min(block_b, _round_up(B, row_mult))   # don't overshoot the batch
    if _is_v7x():
        # keep >= 2 grid steps so the "parallel" axis covers both TensorCores
        half = _round_up(pl.cdiv(B, 2), row_mult)
        block_b = min(block_b, max(row_mult, half))
    n_steps = pl.cdiv(B, block_b)
    Bp = n_steps * block_b
    if Bp != B:
        x = jnp.pad(x, ((0, Bp - B), (0, 0)))

    # ---- explicit VMEM budget (generation-aware) ----------------------------
    def _nbytes(a):
        return a.size * a.dtype.itemsize
    weight_bytes = sum(_nbytes(a) for a in
                       (we_p, be_p, wb1, bb1, wb2, bb2, wb3, bb3, wd, bd))
    io_bytes = 2 * block_b * E * itemsize + 2 * block_b * out_p * 4
    act_bytes = 6 * block_b * max(latent_p, hidden_p) * 4
    needed = 2 * weight_bytes + io_bytes + act_bytes + (4 << 20)
    cap = (48 << 20) if _is_v7x() else (100 << 20)
    vmem_limit = int(min(max(needed, 32 << 20), cap))

    def resident(shape):
        # Whole (small) parameter kept VMEM-resident for every grid step.
        # Block index never changes -> single buffer is enough.
        n = len(shape)
        idx = lambda i, _n=n: (0,) * _n
        try:
            return pl.BlockSpec(shape, idx, pipeline_mode=pl.Buffered(1))
        except TypeError:       # very old BlockSpec without pipeline_mode
            return pl.BlockSpec(shape, idx)

    kernel = functools.partial(_epd_kernel, num_blocks=num_blocks,
                               compute_dtype=cd)

    out = pl.pallas_call(
        kernel,
        out_shape=jax.ShapeDtypeStruct((Bp, out_p), jnp.float32),
        grid_spec=pltpu.PrefetchScalarGridSpec(
            num_scalar_prefetch=0,
            grid=(n_steps,),
            in_specs=[
                pl.BlockSpec((block_b, E), lambda i: (i, 0)),
                resident(we_p.shape), resident(be_p.shape),
                resident(wb1.shape), resident(bb1.shape),
                resident(wb2.shape), resident(bb2.shape),
                resident(wb3.shape), resident(bb3.shape),
                resident(wd.shape), resident(bd.shape),
            ],
            out_specs=pl.BlockSpec((block_b, out_p), lambda i: (i, 0)),
        ),
        compiler_params=pltpu.CompilerParams(
            dimension_semantics=("parallel",),
            vmem_limit_bytes=vmem_limit),
    )(x, we_p, be_p, wb1, bb1, wb2, bb2, wb3, bb3, wd, bd)

    return out[:B, :out_f]


def init_params(key, vE, sE, latent, hidden, num_blocks, out_f=6):
    """Init mimicking nn.Linear default (U[-1/sqrt(fan_in), +1/sqrt(fan_in)])."""
    def linear(k, fan_in, fan_out):
        kw, kb = jax.random.split(k)
        bound = 1.0 / jnp.sqrt(jnp.float32(fan_in))
        w = jax.random.uniform(kw, (fan_in, fan_out), jnp.float32, -bound, bound)
        b = jax.random.uniform(kb, (fan_out,), jnp.float32, -bound, bound)
        return w, b

    keys = jax.random.split(key, 2 + 3 * num_blocks)
    params = {}
    params["we"], params["be"] = linear(keys[0], vE + sE, latent)
    w1s, b1s, w2s, b2s, w3s, b3s = [], [], [], [], [], []
    for i in range(num_blocks):
        w1, b1 = linear(keys[2 + 3 * i + 0], latent, hidden)
        w2, b2 = linear(keys[2 + 3 * i + 1], hidden, hidden)
        w3, b3 = linear(keys[2 + 3 * i + 2], hidden, latent)
        w1s.append(w1); b1s.append(b1)
        w2s.append(w2); b2s.append(b2)
        w3s.append(w3); b3s.append(b3)
    params["wb1"] = jnp.stack(w1s); params["bb1"] = jnp.stack(b1s)
    params["wb2"] = jnp.stack(w2s); params["bb2"] = jnp.stack(b2s)
    params["wb3"] = jnp.stack(w3s); params["bb3"] = jnp.stack(b3s)
    params["wd"], params["bd"] = linear(keys[1], latent, out_f)
    return params


def reference_forward(xv, xs, params, compute_dtype=jnp.float32):
    """Pure-JAX reference with the same matmul-operand dtypes as the kernel."""
    cd = compute_dtype
    x = jnp.concatenate([xv, xs], axis=-1)
    x = (jnp.dot(x.astype(cd), params["we"].astype(cd),
                 preferred_element_type=jnp.float32) + params["be"])
    nb = params["wb1"].shape[0]
    for i in range(nb):
        h = jnp.maximum(
            jnp.dot(x.astype(cd), params["wb1"][i].astype(cd),
                    preferred_element_type=jnp.float32) + params["bb1"][i], 0.0)
        h = jnp.maximum(
            jnp.dot(h.astype(cd), params["wb2"][i].astype(cd),
                    preferred_element_type=jnp.float32) + params["bb2"][i], 0.0)
        h = jnp.dot(h.astype(cd), params["wb3"][i].astype(cd),
                    preferred_element_type=jnp.float32) + params["bb3"][i]
        x = x + h
    return (jnp.dot(x.astype(cd), params["wd"].astype(cd),
                    preferred_element_type=jnp.float32) + params["bd"])


if __name__ == "__main__":
    key = jax.random.PRNGKey(0)

    # Small shapes consistent with the module (defaults would be 384/384/5).
    vE, sE = 16, 8
    latent, hidden, num_blocks = 256, 256, 2
    B = 256

    kv, ks, kp = jax.random.split(key, 3)
    vertical = jax.random.normal(kv, (B, vE), jnp.float32)
    surface = jax.random.normal(ks, (B, sE), jnp.float32)
    params = init_params(kp, vE, sE, latent, hidden, num_blocks)

    ref_f32 = reference_forward(vertical, surface, params)
    ref_bf16 = reference_forward(vertical, surface, params,
                                 compute_dtype=jnp.bfloat16)

    # Default path: bf16 matmul operands, f32 accumulation/bias/ReLU/residual.
    out = jax.block_until_ready(epd_forward(vertical, surface, params))
    assert out.shape == (B, 6)
    assert jnp.allclose(out, ref_bf16, atol=5e-2, rtol=5e-2), \
        "bf16 mismatch vs bf16 reference"

    # f32 operand path (tight check against the f32 reference).
    out_f32 = jax.block_until_ready(
        epd_forward(vertical, surface, params, compute_dtype=jnp.float32))
    assert out_f32.shape == (B, 6)
    assert jnp.allclose(out_f32, ref_f32, atol=1e-4, rtol=1e-4), \
        "f32 mismatch vs reference"

    # Ragged batch (no divisibility requirement): padded internally, sliced back.
    B2 = 100
    out_ragged = jax.block_until_ready(
        epd_forward(vertical[:B2], surface[:B2], params))
    assert out_ragged.shape == (B2, 6)
    assert jnp.allclose(out_ragged, ref_bf16[:B2], atol=5e-2, rtol=5e-2), \
        "ragged-batch mismatch vs reference"

    print("KERNEL_OK")
</pallas_src>

<mosaic_0001>
module attributes {stable_mosaic.version = 11 : i64} {
  func.func @_epd_kernel(%arg0: i32, %arg1: memref<256x24xbf16, #tpu.memory_space<vmem>>, %arg2: memref<24x256xbf16, #tpu.memory_space<vmem>>, %arg3: memref<1x256xf32, #tpu.memory_space<vmem>>, %arg4: memref<2x256x256xbf16, #tpu.memory_space<vmem>>, %arg5: memref<2x1x256xf32, #tpu.memory_space<vmem>>, %arg6: memref<2x256x256xbf16, #tpu.memory_space<vmem>>, %arg7: memref<2x1x256xf32, #tpu.memory_space<vmem>>, %arg8: memref<2x256x256xbf16, #tpu.memory_space<vmem>>, %arg9: memref<2x1x256xf32, #tpu.memory_space<vmem>>, %arg10: memref<256x128xbf16, #tpu.memory_space<vmem>>, %arg11: memref<1x128xf32, #tpu.memory_space<vmem>>, %arg12: memref<256x128xf32, #tpu.memory_space<vmem>>) attributes {dimension_semantics = [#tpu.dimension_semantics<parallel>], iteration_bounds = array<i64: 1>, scalar_prefetch = 0 : i64, scratch_operands = 0 : i64, tpu.core_type = #tpu.core_type<tc>, window_params = [{transform_indices = @transform_0, window_bounds = array<i64: 256, 24>}, {pipeline_mode = #tpu.pipeline_mode<synchronous>, transform_indices = @transform_1, window_bounds = array<i64: 24, 256>}, {pipeline_mode = #tpu.pipeline_mode<synchronous>, transform_indices = @transform_2, window_bounds = array<i64: 1, 256>}, {pipeline_mode = #tpu.pipeline_mode<synchronous>, transform_indices = @transform_3, window_bounds = array<i64: 2, 256, 256>}, {pipeline_mode = #tpu.pipeline_mode<synchronous>, transform_indices = @transform_4, window_bounds = array<i64: 2, 1, 256>}, {pipeline_mode = #tpu.pipeline_mode<synchronous>, transform_indices = @transform_5, window_bounds = array<i64: 2, 256, 256>}, {pipeline_mode = #tpu.pipeline_mode<synchronous>, transform_indices = @transform_6, window_bounds = array<i64: 2, 1, 256>}, {pipeline_mode = #tpu.pipeline_mode<synchronous>, transform_indices = @transform_7, window_bounds = array<i64: 2, 256, 256>}, {pipeline_mode = #tpu.pipeline_mode<synchronous>, transform_indices = @transform_8, window_bounds = array<i64: 2, 1, 256>}, {pipeline_mode = #tpu.pipeline_mode<synchronous>, transform_indices = @transform_9, window_bounds = array<i64: 256, 128>}, {pipeline_mode = #tpu.pipeline_mode<synchronous>, transform_indices = @transform_10, window_bounds = array<i64: 1, 128>}, {transform_indices = @transform_11, window_bounds = array<i64: 256, 128>}]} {
    %c0 = arith.constant 0 : index
    %c0_0 = arith.constant 0 : index
    %0 = vector.load %arg1[%c0, %c0_0] : memref<256x24xbf16, #tpu.memory_space<vmem>>, vector<256x24xbf16>
    %c0_1 = arith.constant 0 : index
    %c0_2 = arith.constant 0 : index
    %1 = vector.load %arg2[%c0_1, %c0_2] : memref<24x256xbf16, #tpu.memory_space<vmem>>, vector<24x256xbf16>
    %cst = arith.constant dense<0.000000e+00> : vector<256x256xf32>
    %2 = tpu.matmul %0, %1, %cst {dimension_numbers = #tpu.dot_dimension_numbers<[1], [0], [0], [1], [0, 0, 1, 1], [], []>} : vector<256x24xbf16>, vector<24x256xbf16>, vector<256x256xf32> -> vector<256x256xf32>
    %c0_3 = arith.constant 0 : index
    %c0_4 = arith.constant 0 : index
    %3 = vector.load %arg3[%c0_3, %c0_4] : memref<1x256xf32, #tpu.memory_space<vmem>>, vector<1x256xf32>
    %4 = vector.broadcast %3 : vector<1x256xf32> to vector<256x256xf32>
    %5 = arith.addf %2, %4 : vector<256x256xf32>
    %6 = arith.truncf %5 : vector<256x256xf32> to vector<256x256xbf16>
    %c0_5 = arith.constant 0 : index
    %c0_6 = arith.constant 0 : index
    %c0_7 = arith.constant 0 : index
    %7 = vector.load %arg4[%c0_5, %c0_6, %c0_7] : memref<2x256x256xbf16, #tpu.memory_space<vmem>>, vector<1x256x256xbf16>
    %8 = vector.shape_cast %7 : vector<1x256x256xbf16> to vector<256x256xbf16>
    %cst_8 = arith.constant dense<0.000000e+00> : vector<256x256xf32>
    %9 = tpu.matmul %6, %8, %cst_8 {dimension_numbers = #tpu.dot_dimension_numbers<[1], [0], [0], [1], [0, 0, 1, 1], [], []>} : vector<256x256xbf16>, vector<256x256xbf16>, vector<256x256xf32> -> vector<256x256xf32>
    %c0_9 = arith.constant 0 : index
    %c0_10 = arith.constant 0 : index
    %c0_11 = arith.constant 0 : index
    %10 = vector.load %arg5[%c0_9, %c0_10, %c0_11] : memref<2x1x256xf32, #tpu.memory_space<vmem>>, vector<1x1x256xf32>
    %11 = vector.shape_cast %10 : vector<1x1x256xf32> to vector<1x256xf32>
    %12 = vector.broadcast %11 : vector<1x256xf32> to vector<256x256xf32>
    %13 = arith.addf %9, %12 : vector<256x256xf32>
    %cst_12 = arith.constant 0.000000e+00 : f32
    %14 = vector.broadcast %cst_12 : f32 to vector<256x256xf32>
    %15 = arith.maximumf %13, %14 : vector<256x256xf32>
    %16 = arith.truncf %15 : vector<256x256xf32> to vector<256x256xbf16>
    %c0_13 = arith.constant 0 : index
    %c0_14 = arith.constant 0 : index
    %c0_15 = arith.constant 0 : index
    %17 = vector.load %arg6[%c0_13, %c0_14, %c0_15] : memref<2x256x256xbf16, #tpu.memory_space<vmem>>, vector<1x256x256xbf16>
    %18 = vector.shape_cast %17 : vector<1x256x256xbf16> to vector<256x256xbf16>
    %cst_16 = arith.constant dense<0.000000e+00> : vector<256x256xf32>
    %19 = tpu.matmul %16, %18, %cst_16 {dimension_numbers = #tpu.dot_dimension_numbers<[1], [0], [0], [1], [0, 0, 1, 1], [], []>} : vector<256x256xbf16>, vector<256x256xbf16>, vector<256x256xf32> -> vector<256x256xf32>
    %c0_17 = arith.constant 0 : index
    %c0_18 = arith.constant 0 : index
    %c0_19 = arith.constant 0 : index
    %20 = vector.load %arg7[%c0_17, %c0_18, %c0_19] : memref<2x1x256xf32, #tpu.memory_space<vmem>>, vector<1x1x256xf32>
    %21 = vector.shape_cast %20 : vector<1x1x256xf32> to vector<1x256xf32>
    %22 = vector.broadcast %21 : vector<1x256xf32> to vector<256x256xf32>
    %23 = arith.addf %19, %22 : vector<256x256xf32>
    %cst_20 = arith.constant 0.000000e+00 : f32
    %24 = vector.broadcast %cst_20 : f32 to vector<256x256xf32>
    %25 = arith.maximumf %23, %24 : vector<256x256xf32>
    %26 = arith.truncf %25 : vector<256x256xf32> to vector<256x256xbf16>
    %c0_21 = arith.constant 0 : index
    %c0_22 = arith.constant 0 : index
    %c0_23 = arith.constant 0 : index
    %27 = vector.load %arg8[%c0_21, %c0_22, %c0_23] : memref<2x256x256xbf16, #tpu.memory_space<vmem>>, vector<1x256x256xbf16>
    %28 = vector.shape_cast %27 : vector<1x256x256xbf16> to vector<256x256xbf16>
    %cst_24 = arith.constant dense<0.000000e+00> : vector<256x256xf32>
    %29 = tpu.matmul %26, %28, %cst_24 {dimension_numbers = #tpu.dot_dimension_numbers<[1], [0], [0], [1], [0, 0, 1, 1], [], []>} : vector<256x256xbf16>, vector<256x256xbf16>, vector<256x256xf32> -> vector<256x256xf32>
    %c0_25 = arith.constant 0 : index
    %c0_26 = arith.constant 0 : index
    %c0_27 = arith.constant 0 : index
    %30 = vector.load %arg9[%c0_25, %c0_26, %c0_27] : memref<2x1x256xf32, #tpu.memory_space<vmem>>, vector<1x1x256xf32>
    %31 = vector.shape_cast %30 : vector<1x1x256xf32> to vector<1x256xf32>
    %32 = vector.broadcast %31 : vector<1x256xf32> to vector<256x256xf32>
    %33 = arith.addf %29, %32 : vector<256x256xf32>
    %34 = arith.addf %5, %33 : vector<256x256xf32>
    %35 = arith.truncf %34 : vector<256x256xf32> to vector<256x256xbf16>
    %c1 = arith.constant 1 : index
    %c0_28 = arith.constant 0 : index
    %c0_29 = arith.constant 0 : index
    %36 = vector.load %arg4[%c1, %c0_28, %c0_29] : memref<2x256x256xbf16, #tpu.memory_space<vmem>>, vector<1x256x256xbf16>
    %37 = vector.shape_cast %36 : vector<1x256x256xbf16> to vector<256x256xbf16>
    %cst_30 = arith.constant dense<0.000000e+00> : vector<256x256xf32>
    %38 = tpu.matmul %35, %37, %cst_30 {dimension_numbers = #tpu.dot_dimension_numbers<[1], [0], [0], [1], [0, 0, 1, 1], [], []>} : vector<256x256xbf16>, vector<256x256xbf16>, vector<256x256xf32> -> vector<256x256xf32>
    %c1_31 = arith.constant 1 : index
    %c0_32 = arith.constant 0 : index
    %c0_33 = arith.constant 0 : index
    %39 = vector.load %arg5[%c1_31, %c0_32, %c0_33] : memref<2x1x256xf32, #tpu.memory_space<vmem>>, vector<1x1x256xf32>
    %40 = vector.shape_cast %39 : vector<1x1x256xf32> to vector<1x256xf32>
    %41 = vector.broadcast %40 : vector<1x256xf32> to vector<256x256xf32>
    %42 = arith.addf %38, %41 : vector<256x256xf32>
    %cst_34 = arith.constant 0.000000e+00 : f32
    %43 = vector.broadcast %cst_34 : f32 to vector<256x256xf32>
    %44 = arith.maximumf %42, %43 : vector<256x256xf32>
    %45 = arith.truncf %44 : vector<256x256xf32> to vector<256x256xbf16>
    %c1_35 = arith.constant 1 : index
    %c0_36 = arith.constant 0 : index
    %c0_37 = arith.constant 0 : index
    %46 = vector.load %arg6[%c1_35, %c0_36, %c0_37] : memref<2x256x256xbf16, #tpu.memory_space<vmem>>, vector<1x256x256xbf16>
    %47 = vector.shape_cast %46 : vector<1x256x256xbf16> to vector<256x256xbf16>
    %cst_38 = arith.constant dense<0.000000e+00> : vector<256x256xf32>
    %48 = tpu.matmul %45, %47, %cst_38 {dimension_numbers = #tpu.dot_dimension_numbers<[1], [0], [0], [1], [0, 0, 1, 1], [], []>} : vector<256x256xbf16>, vector<256x256xbf16>, vector<256x256xf32> -> vector<256x256xf32>
    %c1_39 = arith.constant 1 : index
    %c0_40 = arith.constant 0 : index
    %c0_41 = arith.constant 0 : index
    %49 = vector.load %arg7[%c1_39, %c0_40, %c0_41] : memref<2x1x256xf32, #tpu.memory_space<vmem>>, vector<1x1x256xf32>
    %50 = vector.shape_cast %49 : vector<1x1x256xf32> to vector<1x256xf32>
    %51 = vector.broadcast %50 : vector<1x256xf32> to vector<256x256xf32>
    %52 = arith.addf %48, %51 : vector<256x256xf32>
    %cst_42 = arith.constant 0.000000e+00 : f32
    %53 = vector.broadcast %cst_42 : f32 to vector<256x256xf32>
    %54 = arith.maximumf %52, %53 : vector<256x256xf32>
    %55 = arith.truncf %54 : vector<256x256xf32> to vector<256x256xbf16>
    %c1_43 = arith.constant 1 : index
    %c0_44 = arith.constant 0 : index
    %c0_45 = arith.constant 0 : index
    %56 = vector.load %arg8[%c1_43, %c0_44, %c0_45] : memref<2x256x256xbf16, #tpu.memory_space<vmem>>, vector<1x256x256xbf16>
    %57 = vector.shape_cast %56 : vector<1x256x256xbf16> to vector<256x256xbf16>
    %cst_46 = arith.constant dense<0.000000e+00> : vector<256x256xf32>
    %58 = tpu.matmul %55, %57, %cst_46 {dimension_numbers = #tpu.dot_dimension_numbers<[1], [0], [0], [1], [0, 0, 1, 1], [], []>} : vector<256x256xbf16>, vector<256x256xbf16>, vector<256x256xf32> -> vector<256x256xf32>
    %c1_47 = arith.constant 1 : index
    %c0_48 = arith.constant 0 : index
    %c0_49 = arith.constant 0 : index
    %59 = vector.load %arg9[%c1_47, %c0_48, %c0_49] : memref<2x1x256xf32, #tpu.memory_space<vmem>>, vector<1x1x256xf32>
    %60 = vector.shape_cast %59 : vector<1x1x256xf32> to vector<1x256xf32>
    %61 = vector.broadcast %60 : vector<1x256xf32> to vector<256x256xf32>
    %62 = arith.addf %58, %61 : vector<256x256xf32>
    %63 = arith.addf %34, %62 : vector<256x256xf32>
    %64 = arith.truncf %63 : vector<256x256xf32> to vector<256x256xbf16>
    %c0_50 = arith.constant 0 : index
    %c0_51 = arith.constant 0 : index
    %65 = vector.load %arg10[%c0_50, %c0_51] : memref<256x128xbf16, #tpu.memory_space<vmem>>, vector<256x128xbf16>
    %cst_52 = arith.constant dense<0.000000e+00> : vector<256x128xf32>
    %66 = tpu.matmul %64, %65, %cst_52 {dimension_numbers = #tpu.dot_dimension_numbers<[1], [0], [0], [1], [0, 0, 1, 1], [], []>} : vector<256x256xbf16>, vector<256x128xbf16>, vector<256x128xf32> -> vector<256x128xf32>
    %c0_53 = arith.constant 0 : index
    %c0_54 = arith.constant 0 : index
    %67 = vector.load %arg11[%c0_53, %c0_54] : memref<1x128xf32, #tpu.memory_space<vmem>>, vector<1x128xf32>
    %68 = vector.broadcast %67 : vector<1x128xf32> to vector<256x128xf32>
    %69 = arith.addf %66, %68 : vector<256x128xf32>
    %c0_55 = arith.constant 0 : index
    %c0_56 = arith.constant 0 : index
    %70 = vector.load %arg12[%c0_55, %c0_56] : memref<256x128xf32, #tpu.memory_space<vmem>>, vector<256x128xf32>
    tpu.vector_store %arg12[%c0_55, %c0_56], %69 {strides = array<i32>} : memref<256x128xf32, #tpu.memory_space<vmem>>, vector<256x128xf32>,
    return
  }
  func.func @transform_0(%arg0: i32) -> (i32, i32) {
    %c0_i32 = arith.constant 0 : i32
    %c0_i32_0 = arith.constant 0 : i32
    return %arg0, %c0_i32 : i32, i32
  }
  func.func @transform_1(%arg0: i32) -> (i32, i32) {
    %c0_i32 = arith.constant 0 : i32
    %c0_i32_0 = arith.constant 0 : i32
    %c0_i32_1 = arith.constant 0 : i32
    return %c0_i32, %c0_i32_0 : i32, i32
  }
  func.func @transform_2(%arg0: i32) -> (i32, i32) {
    %c0_i32 = arith.constant 0 : i32
    %c0_i32_0 = arith.constant 0 : i32
    %c0_i32_1 = arith.constant 0 : i32
    return %c0_i32, %c0_i32_0 : i32, i32
  }
  func.func @transform_3(%arg0: i32) -> (i32, i32, i32) {
    %c0_i32 = arith.constant 0 : i32
    %c0_i32_0 = arith.constant 0 : i32
    %c0_i32_1 = arith.constant 0 : i32
    %c0_i32_2 = arith.constant 0 : i32
    return %c0_i32, %c0_i32_0, %c0_i32_1 : i32, i32, i32
  }
  func.func @transform_4(%arg0: i32) -> (i32, i32, i32) {
    %c0_i32 = arith.constant 0 : i32
    %c0_i32_0 = arith.constant 0 : i32
    %c0_i32_1 = arith.constant 0 : i32
    %c0_i32_2 = arith.constant 0 : i32
    return %c0_i32, %c0_i32_0, %c0_i32_1 : i32, i32, i32
  }
  func.func @transform_5(%arg0: i32) -> (i32, i32, i32) {
    %c0_i32 = arith.constant 0 : i32
    %c0_i32_0 = arith.constant 0 : i32
    %c0_i32_1 = arith.constant 0 : i32
    %c0_i32_2 = arith.constant 0 : i32
    return %c0_i32, %c0_i32_0, %c0_i32_1 : i32, i32, i32
  }
  func.func @transform_6(%arg0: i32) -> (i32, i32, i32) {
    %c0_i32 = arith.constant 0 : i32
    %c0_i32_0 = arith.constant 0 : i32
    %c0_i32_1 = arith.constant 0 : i32
    %c0_i32_2 = arith.constant 0 : i32
    return %c0_i32, %c0_i32_0, %c0_i32_1 : i32, i32, i32
  }
  func.func @transform_7(%arg0: i32) -> (i32, i32, i32) {
    %c0_i32 = arith.constant 0 : i32
    %c0_i32_0 = arith.constant 0 : i32
    %c0_i32_1 = arith.constant 0 : i32
    %c0_i32_2 = arith.constant 0 : i32
    return %c0_i32, %c0_i32_0, %c0_i32_1 : i32, i32, i32
  }
  func.func @transform_8(%arg0: i32) -> (i32, i32, i32) {
    %c0_i32 = arith.constant 0 : i32
    %c0_i32_0 = arith.constant 0 : i32
    %c0_i32_1 = arith.constant 0 : i32
    %c0_i32_2 = arith.constant 0 : i32
    return %c0_i32, %c0_i32_0, %c0_i32_1 : i32, i32, i32
  }
  func.func @transform_9(%arg0: i32) -> (i32, i32) {
    %c0_i32 = arith.constant 0 : i32
    %c0_i32_0 = arith.constant 0 : i32
    %c0_i32_1 = arith.constant 0 : i32
    return %c0_i32, %c0_i32_0 : i32, i32
  }
  func.func @transform_10(%arg0: i32) -> (i32, i32) {
    %c0_i32 = arith.constant 0 : i32
    %c0_i32_0 = arith.constant 0 : i32
    %c0_i32_1 = arith.constant 0 : i32
    return %c0_i32, %c0_i32_0 : i32, i32
  }
  func.func @transform_11(%arg0: i32) -> (i32, i32) {
    %c0_i32 = arith.constant 0 : i32
    %c0_i32_0 = arith.constant 0 : i32
    return %arg0, %c0_i32 : i32, i32
  }
}

</mosaic_0001>

<llo_original>
// kernel: epd_forward.1
$region0: #{epd_forward.1}
  #allocation0 [shape = 'u32[]', space=smem, size = 0x4, offset = 0x4, fixed_abs, tag = 'smem constant byte address 0x4 - core index']
  #allocation1 [shape = 'u32[72,128]{1,0:T(1,128)}', space=vmem, size = 0x9000, scoped, tag = 'internal scratch']
  %s0 = inlined_call_operand.vmem [shape: bf16[256,24], index: 0, kind: input, shape index: {}]
  %s1 = inlined_call_operand.vmem [shape: bf16[24,256], index: 1, kind: input, shape index: {}]
  %s2 = inlined_call_operand.vmem [shape: f32[1,256], index: 2, kind: input, shape index: {}]
  %s3 = inlined_call_operand.vmem [shape: bf16[2,256,256], index: 3, kind: input, shape index: {}]
  %s4 = inlined_call_operand.vmem [shape: f32[2,1,256], index: 4, kind: input, shape index: {}]
  %s5 = inlined_call_operand.vmem [shape: bf16[2,256,256], index: 5, kind: input, shape index: {}]
  %s6 = inlined_call_operand.vmem [shape: f32[2,1,256], index: 6, kind: input, shape index: {}]
  %s7 = inlined_call_operand.vmem [shape: bf16[2,256,256], index: 7, kind: input, shape index: {}]
  %s8 = inlined_call_operand.vmem [shape: f32[2,1,256], index: 8, kind: input, shape index: {}]
  %s9 = inlined_call_operand.vmem [shape: bf16[256,128], index: 9, kind: input, shape index: {}]
  %s10 = inlined_call_operand.vmem [shape: f32[1,128], index: 10, kind: input, shape index: {}]
  %s11 = inlined_call_operand.vmem [shape: f32[256,128], index: 11, kind: output, shape index: {}]
  %s12 = sld [smem:[#allocation0]]
  $region54: #{epd_forward.1} parent=0
    _
  %s14 = ssub.s32 1, %s12
  %s15 = scalar_select 0, %s14, %s12
  // Predicated region
  $region2: #{epd_forward.1} parent=0 // pred_check
    _
  $region3: #{epd_forward.1} parent=0 // pred_check_branch
    %17 = sbr.rel (0) target = $region5
  $region4: #{epd_forward.1} parent=0 // pred_region
    _
  $region5: #{epd_forward.1} parent=0 // pred_fallthru
    _
  // Predicated region
  $region6: #{epd_forward.1} parent=0 // pred_check
    _
  $region7: #{epd_forward.1} parent=0 // pred_check_branch
    %19 = sbr.rel (0) target = $region9
  $region8: #{epd_forward.1} parent=0 // pred_region
    _
  $region9: #{epd_forward.1} parent=0 // pred_fallthru
    _
  // Predicated region
  $region10: #{epd_forward.1} parent=0 // pred_check
    _
  $region11: #{epd_forward.1} parent=0 // pred_check_branch
    %21 = sbr.rel (0) target = $region13
  $region12: #{epd_forward.1} parent=0 // pred_region
    _
  $region13: #{epd_forward.1} parent=0 // pred_fallthru
    _
  // Predicated region
  $region14: #{epd_forward.1} parent=0 // pred_check
    _
  $region15: #{epd_forward.1} parent=0 // pred_check_branch
    %23 = sbr.rel (0) target = $region17
  $region16: #{epd_forward.1} parent=0 // pred_region
    _
  $region17: #{epd_forward.1} parent=0 // pred_fallthru
    _
  // Predicated region
  $region18: #{epd_forward.1} parent=0 // pred_check
    _
  $region19: #{epd_forward.1} parent=0 // pred_check_branch
    %25 = sbr.rel (0) target = $region21
  $region20: #{epd_forward.1} parent=0 // pred_region
    _
  $region21: #{epd_forward.1} parent=0 // pred_fallthru
    _
  // Predicated region
  $region22: #{epd_forward.1} parent=0 // pred_check
    _
  $region23: #{epd_forward.1} parent=0 // pred_check_branch
    %27 = sbr.rel (0) target = $region25
  $region24: #{epd_forward.1} parent=0 // pred_region
    _
  $region25: #{epd_forward.1} parent=0 // pred_fallthru
    _
  // Predicated region
  $region26: #{epd_forward.1} parent=0 // pred_check
    _
  $region27: #{epd_forward.1} parent=0 // pred_check_branch
    %29 = sbr.rel (0) target = $region29
  $region28: #{epd_forward.1} parent=0 // pred_region
    _
  $region29: #{epd_forward.1} parent=0 // pred_fallthru
    _
  // Predicated region
  $region30: #{epd_forward.1} parent=0 // pred_check
    _
  $region31: #{epd_forward.1} parent=0 // pred_check_branch
    %31 = sbr.rel (0) target = $region33
  $region32: #{epd_forward.1} parent=0 // pred_region
    _
  $region33: #{epd_forward.1} parent=0 // pred_fallthru
    _
  // Predicated region
  $region34: #{epd_forward.1} parent=0 // pred_check
    _
  $region35: #{epd_forward.1} parent=0 // pred_check_branch
    %33 = sbr.rel (0) target = $region37
  $region36: #{epd_forward.1} parent=0 // pred_region
    _
  $region37: #{epd_forward.1} parent=0 // pred_fallthru
    _
  // Predicated region
  $region38: #{epd_forward.1} parent=0 // pred_check
    _
  $region39: #{epd_forward.1} parent=0 // pred_check_branch
    %35 = sbr.rel (0) target = $region41
  $region40: #{epd_forward.1} parent=0 // pred_region
    _
  $region41: #{epd_forward.1} parent=0 // pred_fallthru
    _
  // Predicated region
  $region42: #{epd_forward.1} parent=0 // pred_check
    _
  $region43: #{epd_forward.1} parent=0 // pred_check_branch
    %37 = sbr.rel (0) target = $region45
  $region44: #{epd_forward.1} parent=0 // pred_region
    _
  $region45: #{epd_forward.1} parent=0 // pred_fallthru
    _
  %v39 = vld [vmem:[%s0] sm:$0xf]
  %v40 = vld [vmem:[%s0 + $0x4] sm:$0xf]
  %v41 = vld [vmem:[%s0 + $0x8] sm:$0xf]
  %v42 = vld [vmem:[%s0 + $0xc] sm:$0xf]
  %v43 = vld [vmem:[%s0 + $0x10] sm:$0xf]
  %v44 = vld [vmem:[%s0 + $0x14] sm:$0xf]
  %v45 = vld [vmem:[%s0 + $0x18] sm:$0xf]
  %v46 = vld [vmem:[%s0 + $0x1c] sm:$0xf]
  %v47 = vld [vmem:[%s0 + $0x20] sm:$0xf]
  %v48 = vld [vmem:[%s0 + $0x24] sm:$0xf]
  %v49 = vld [vmem:[%s0 + $0x28] sm:$0xf]
  %v50 = vld [vmem:[%s0 + $0x2c] sm:$0xf]
  %v51 = vld [vmem:[%s0 + $0x30] sm:$0xf]
  %v52 = vld [vmem:[%s0 + $0x34] sm:$0xf]
  %v53 = vld [vmem:[%s0 + $0x38] sm:$0xf]
  %v54 = vld [vmem:[%s0 + $0x3c] sm:$0xf]
  %v55 = vld [vmem:[%s0 + $0x40] sm:$0xf]
  %v56 = vld [vmem:[%s0 + $0x44] sm:$0xf]
  %v57 = vld [vmem:[%s0 + $0x48] sm:$0xf]
  %v58 = vld [vmem:[%s0 + $0x4c] sm:$0xf]
  %v59 = vld [vmem:[%s0 + $0x50] sm:$0xf]
  %v60 = vld [vmem:[%s0 + $0x54] sm:$0xf]
  %v61 = vld [vmem:[%s0 + $0x58] sm:$0xf]
  %v62 = vld [vmem:[%s0 + $0x5c] sm:$0xf]
  %v63 = vld [vmem:[%s0 + $0x60] sm:$0xf]
  %v64 = vld [vmem:[%s0 + $0x64] sm:$0xf]
  %v65 = vld [vmem:[%s0 + $0x68] sm:$0xf]
  %v66 = vld [vmem:[%s0 + $0x6c] sm:$0xf]
  %v67 = vld [vmem:[%s0 + $0x70] sm:$0xf]
  %v68 = vld [vmem:[%s0 + $0x74] sm:$0xf]
  %v69 = vld [vmem:[%s0 + $0x78] sm:$0xf]
  %v70 = vld [vmem:[%s0 + $0x7c] sm:$0xf]
  %v71 = vld [vmem:[%s1] sm:$0xff]
  %v72 = vld [vmem:[%s1 + $0x8] sm:$0xff]
  %v73 = vld [vmem:[%s1 + $0x10] sm:$0xff]
  %v74 = vld [vmem:[%s2] sm:$0x3]
  %v76 = vperm.slane %v74, 0
  %v77 = vperm.slane %v74, 1
  %v112 = vunpack.c.l.b16 %v39
  %v113 = vunpack.c.l.b16 %v40
  %v114 = vunpack.c.l.b16 %v41
  %v115 = vunpack.c.l.b16 %v42
  %v116 = vunpack.c.l.b16 %v43
  %v117 = vunpack.c.l.b16 %v44
  %v118 = vunpack.c.l.b16 %v45
  %v119 = vunpack.c.l.b16 %v46
  %v120 = vunpack.c.l.b16 %v47
  %v121 = vunpack.c.l.b16 %v48
  %v122 = vunpack.c.l.b16 %v49
  %v123 = vunpack.c.l.b16 %v50
  %v124 = vunpack.c.l.b16 %v51
  %v125 = vunpack.c.l.b16 %v52
  %v126 = vunpack.c.l.b16 %v53
  %v127 = vunpack.c.l.b16 %v54
  %v128 = vunpack.c.l.b16 %v55
  %v129 = vunpack.c.l.b16 %v56
  %v130 = vunpack.c.l.b16 %v57
  %v131 = vunpack.c.l.b16 %v58
  %v132 = vunpack.c.l.b16 %v59
  %v133 = vunpack.c.l.b16 %v60
  %v134 = vunpack.c.l.b16 %v61
  %v135 = vunpack.c.l.b16 %v62
  %v136 = vunpack.c.l.b16 %v63
  %v137 = vunpack.c.l.b16 %v64
  %v138 = vunpack.c.l.b16 %v65
  %v139 = vunpack.c.l.b16 %v66
  %v140 = vunpack.c.l.b16 %v67
  %v141 = vunpack.c.l.b16 %v68
  %v142 = vunpack.c.l.b16 %v69
  %v143 = vunpack.c.l.b16 %v70
  %v144 = vpack.c.b16 %v113, %v112
  %v145 = vpack.c.b16 %v115, %v114
  %v146 = vpack.c.b16 %v117, %v116
  %v147 = vpack.c.b16 %v119, %v118
  %v148 = vpack.c.b16 %v121, %v120
  %v149 = vpack.c.b16 %v123, %v122
  %v150 = vpack.c.b16 %v125, %v124
  %v151 = vpack.c.b16 %v127, %v126
  %v152 = vpack.c.b16 %v129, %v128
  %v153 = vpack.c.b16 %v131, %v130
  %v154 = vpack.c.b16 %v133, %v132
  %v155 = vpack.c.b16 %v135, %v134
  %v156 = vpack.c.b16 %v137, %v136
  %v157 = vpack.c.b16 %v139, %v138
  %v158 = vpack.c.b16 %v141, %v140
  %v159 = vpack.c.b16 %v143, %v142
  %v163 = vunpack.c.l.b16 %v71
  %v164 = vunpack.c.h.b16 %v71
  %v165 = vunpack.c.l.b16 %v72
  %v166 = vunpack.c.h.b16 %v72
  %v167 = vunpack.c.l.b16 %v73
  %v168 = vunpack.c.h.b16 %v73
  %v169 = vpack.c.b16 %v165, %v163
  %v170 = vpack.c.b16 %v166, %v164
  %v171 = vpack.c.b16 %v167, %v167
  %v172 = vpack.c.b16 %v168, %v168
  %vm175 = vcmask 195584
  %v177 = vsel %vm175, %v144, 0
  %v180 = vsel %vm175, %v145, 0
  %v183 = vsel %vm175, %v146, 0
  %v186 = vsel %vm175, %v147, 0
  %v189 = vsel %vm175, %v148, 0
  %v192 = vsel %vm175, %v149, 0
  %v195 = vsel %vm175, %v150, 0
  %v198 = vsel %vm175, %v151, 0
  %v201 = vsel %vm175, %v152, 0
  %v204 = vsel %vm175, %v153, 0
  %v207 = vsel %vm175, %v154, 0
  %v210 = vsel %vm175, %v155, 0
  %v213 = vsel %vm175, %v156, 0
  %v216 = vsel %vm175, %v157, 0
  %v219 = vsel %vm175, %v158, 0
  %v222 = vsel %vm175, %v159, 0
  %vm224 = vcmask 1043456
  %v226 = vsel %vm224, %v171, 0
  %v229 = vsel %vm224, %v172, 0
  %231 = vmatpush.bf16.msra.mxu0 0
  %232 = vmatpush.bf16.msra.mxu0 0
  %233 = vmatpush.bf16.msra.mxu0 0
  %234 = vmatpush.bf16.msra.mxu0 0
  %235 = vmatpush.bf16.msra.mxu0 0
  %236 = vmatpush.bf16.msra.mxu0 0
  %237 = vmatpush.bf16.msra.mxu0 %v226
  %238 = vmatpush.bf16.msra.mxu0 %v169
  %239 = vmatmul.bf16.gmra.mxu0 %v177
  %v240 = vpop.f32.mrf.mxu0
  %v241 = vadd.f32 %v76, %v240
  %v242 = vpop.f32.mrf.mxu0
  %v243 = vadd.f32 %v76, %v242
  %244 = vmatmul.bf16.gmra.mxu0 %v180
  %v245 = vpop.f32.mrf.mxu0
  %v246 = vadd.f32 %v76, %v245
  %v247 = vpop.f32.mrf.mxu0
  %v248 = vadd.f32 %v76, %v247
  %249 = vmatmul.bf16.gmra.mxu0 %v183
  %v250 = vpop.f32.mrf.mxu0
  %v251 = vadd.f32 %v76, %v250
  %v252 = vpop.f32.mrf.mxu0
  %v253 = vadd.f32 %v76, %v252
  %254 = vmatmul.bf16.gmra.mxu0 %v186
  %v255 = vpop.f32.mrf.mxu0
  %v256 = vadd.f32 %v76, %v255
  %v257 = vpop.f32.mrf.mxu0
  %v258 = vadd.f32 %v76, %v257
  %259 = vmatmul.bf16.gmra.mxu0 %v189
  %v260 = vpop.f32.mrf.mxu0
  %v261 = vadd.f32 %v76, %v260
  %v262 = vpop.f32.mrf.mxu0
  %v263 = vadd.f32 %v76, %v262
  %264 = vmatmul.bf16.gmra.mxu0 %v192
  %v265 = vpop.f32.mrf.mxu0
  %v266 = vadd.f32 %v76, %v265
  %v267 = vpop.f32.mrf.mxu0
  %v268 = vadd.f32 %v76, %v267
  %269 = vmatmul.bf16.gmra.mxu0 %v195
  %v270 = vpop.f32.mrf.mxu0
  %v271 = vadd.f32 %v76, %v270
  %v272 = vpop.f32.mrf.mxu0
  %v273 = vadd.f32 %v76, %v272
  %274 = vmatmul.bf16.gmra.mxu0 %v198
  %v275 = vpop.f32.mrf.mxu0
  %v276 = vadd.f32 %v76, %v275
  %v277 = vpop.f32.mrf.mxu0
  %v278 = vadd.f32 %v76, %v277
  %279 = vmatmul.bf16.gmra.mxu0 %v201
  %v280 = vpop.f32.mrf.mxu0
  %v281 = vadd.f32 %v76, %v280
  %v282 = vpop.f32.mrf.mxu0
  %v283 = vadd.f32 %v76, %v282
  %284 = vmatmul.bf16.gmra.mxu0 %v204
  %v285 = vpop.f32.mrf.mxu0
  %v286 = vadd.f32 %v76, %v285
  %v287 = vpop.f32.mrf.mxu0
  %v288 = vadd.f32 %v76, %v287
  %289 = vmatmul.bf16.gmra.mxu0 %v207
  %v290 = vpop.f32.mrf.mxu0
  %v291 = vadd.f32 %v76, %v290
  %v292 = vpop.f32.mrf.mxu0
  %v293 = vadd.f32 %v76, %v292
  %294 = vmatmul.bf16.gmra.mxu0 %v210
  %v295 = vpop.f32.mrf.mxu0
  %v296 = vadd.f32 %v76, %v295
  %v297 = vpop.f32.mrf.mxu0
  %v298 = vadd.f32 %v76, %v297
  %299 = vmatmul.bf16.gmra.mxu0 %v213
  %v300 = vpop.f32.mrf.mxu0
  %v301 = vadd.f32 %v76, %v300
  %v302 = vpop.f32.mrf.mxu0
  %v303 = vadd.f32 %v76, %v302
  %304 = vmatmul.bf16.gmra.mxu0 %v216
  %v305 = vpop.f32.mrf.mxu0
  %v306 = vadd.f32 %v76, %v305
  %v307 = vpop.f32.mrf.mxu0
  %v308 = vadd.f32 %v76, %v307
  %309 = vmatmul.bf16.gmra.mxu0 %v219
  %v310 = vpop.f32.mrf.mxu0
  %v311 = vadd.f32 %v76, %v310
  %v312 = vpop.f32.mrf.mxu0
  %v313 = vadd.f32 %v76, %v312
  %314 = vmatmul.bf16.gmra.mxu0 %v222
  %v315 = vpop.f32.mrf.mxu0
  %v316 = vadd.f32 %v76, %v315
  %v317 = vpop.f32.mrf.mxu0
  %v318 = vadd.f32 %v76, %v317
  %319 = vdwg.mxu0
  %320 = vmatpush.bf16.msra.mxu0 0
  %321 = vmatpush.bf16.msra.mxu0 0
  %322 = vmatpush.bf16.msra.mxu0 0
  %323 = vmatpush.bf16.msra.mxu0 0
  %324 = vmatpush.bf16.msra.mxu0 0
  %325 = vmatpush.bf16.msra.mxu0 0
  %326 = vmatpush.bf16.msra.mxu0 %v229
  %327 = vmatpush.bf16.msra.mxu0 %v170
  %328 = vmatmul.bf16.gmra.mxu0 %v177
  %v329 = vpop.f32.mrf.mxu0
  %v330 = vadd.f32 %v77, %v329
  %v331 = vpop.f32.mrf.mxu0
  %v332 = vadd.f32 %v77, %v331
  %333 = vmatmul.bf16.gmra.mxu0 %v180
  %v334 = vpop.f32.mrf.mxu0
  %v335 = vadd.f32 %v77, %v334
  %v336 = vpop.f32.mrf.mxu0
  %v337 = vadd.f32 %v77, %v336
  %338 = vmatmul.bf16.gmra.mxu0 %v183
  %v339 = vpop.f32.mrf.mxu0
  %v340 = vadd.f32 %v77, %v339
  %v341 = vpop.f32.mrf.mxu0
  %v342 = vadd.f32 %v77, %v341
  %343 = vmatmul.bf16.gmra.mxu0 %v186
  %v344 = vpop.f32.mrf.mxu0
  %v345 = vadd.f32 %v77, %v344
  %v346 = vpop.f32.mrf.mxu0
  %v347 = vadd.f32 %v77, %v346
  %348 = vmatmul.bf16.gmra.mxu0 %v189
  %v349 = vpop.f32.mrf.mxu0
  %v350 = vadd.f32 %v77, %v349
  %v351 = vpop.f32.mrf.mxu0
  %v352 = vadd.f32 %v77, %v351
  %353 = vmatmul.bf16.gmra.mxu0 %v192
  %v354 = vpop.f32.mrf.mxu0
  %v355 = vadd.f32 %v77, %v354
  %v356 = vpop.f32.mrf.mxu0
  %v357 = vadd.f32 %v77, %v356
  %358 = vmatmul.bf16.gmra.mxu0 %v195
  %v359 = vpop.f32.mrf.mxu0
  %v360 = vadd.f32 %v77, %v359
  %v361 = vpop.f32.mrf.mxu0
  %v362 = vadd.f32 %v77, %v361
  %363 = vmatmul.bf16.gmra.mxu0 %v198
  %v364 = vpop.f32.mrf.mxu0
  %v365 = vadd.f32 %v77, %v364
  %v366 = vpop.f32.mrf.mxu0
  %v367 = vadd.f32 %v77, %v366
  %368 = vmatmul.bf16.gmra.mxu0 %v201
  %v369 = vpop.f32.mrf.mxu0
  %v370 = vadd.f32 %v77, %v369
  %v371 = vpop.f32.mrf.mxu0
  %v372 = vadd.f32 %v77, %v371
  %373 = vmatmul.bf16.gmra.mxu0 %v204
  %v374 = vpop.f32.mrf.mxu0
  %v375 = vadd.f32 %v77, %v374
  %v376 = vpop.f32.mrf.mxu0
  %v377 = vadd.f32 %v77, %v376
  %378 = vmatmul.bf16.gmra.mxu0 %v207
  %v379 = vpop.f32.mrf.mxu0
  %v380 = vadd.f32 %v77, %v379
  %v381 = vpop.f32.mrf.mxu0
  %v382 = vadd.f32 %v77, %v381
  %383 = vmatmul.bf16.gmra.mxu0 %v210
  %v384 = vpop.f32.mrf.mxu0
  %v385 = vadd.f32 %v77, %v384
  %v386 = vpop.f32.mrf.mxu0
  %v387 = vadd.f32 %v77, %v386
  %388 = vmatmul.bf16.gmra.mxu0 %v213
  %v389 = vpop.f32.mrf.mxu0
  %v390 = vadd.f32 %v77, %v389
  %v391 = vpop.f32.mrf.mxu0
  %v392 = vadd.f32 %v77, %v391
  %393 = vmatmul.bf16.gmra.mxu0 %v216
  %v394 = vpop.f32.mrf.mxu0
  %v395 = vadd.f32 %v77, %v394
  %v396 = vpop.f32.mrf.mxu0
  %v397 = vadd.f32 %v77, %v396
  %398 = vmatmul.bf16.gmra.mxu0 %v219
  %v399 = vpop.f32.mrf.mxu0
  %v400 = vadd.f32 %v77, %v399
  %v401 = vpop.f32.mrf.mxu0
  %v402 = vadd.f32 %v77, %v401
  %403 = vmatmul.bf16.gmra.mxu0 %v222
  %v404 = vpop.f32.mrf.mxu0
  %v405 = vadd.f32 %v77, %v404
  %v406 = vpop.f32.mrf.mxu0
  %v407 = vadd.f32 %v77, %v406
  %408 = vdwg.mxu0
  %v409 = vpack.c.bf16 %v243, %v241
  %v410 = vpack.c.bf16 %v332, %v330
  %v411 = vpack.c.bf16 %v248, %v246
  %v412 = vpack.c.bf16 %v337, %v335
  %v413 = vpack.c.bf16 %v253, %v251
  %v414 = vpack.c.bf16 %v342, %v340
  %v415 = vpack.c.bf16 %v258, %v256
  %v416 = vpack.c.bf16 %v347, %v345
  %v417 = vpack.c.bf16 %v263, %v261
  %v418 = vpack.c.bf16 %v352, %v350
  %v419 = vpack.c.bf16 %v268, %v266
  %v420 = vpack.c.bf16 %v357, %v355
  %v421 = vpack.c.bf16 %v273, %v271
  %v422 = vpack.c.bf16 %v362, %v360
  %v423 = vpack.c.bf16 %v278, %v276
  %v424 = vpack.c.bf16 %v367, %v365
  %v425 = vpack.c.bf16 %v283, %v281
  %v426 = vpack.c.bf16 %v372, %v370
  %v427 = vpack.c.bf16 %v288, %v286
  %v428 = vpack.c.bf16 %v377, %v375
  %v429 = vpack.c.bf16 %v293, %v291
  %v430 = vpack.c.bf16 %v382, %v380
  %v431 = vpack.c.bf16 %v298, %v296
  %v432 = vpack.c.bf16 %v387, %v385
  %v433 = vpack.c.bf16 %v303, %v301
  %v434 = vpack.c.bf16 %v392, %v390
  %v435 = vpack.c.bf16 %v308, %v306
  %v436 = vpack.c.bf16 %v397, %v395
  %v437 = vpack.c.bf16 %v313, %v311
  %v438 = vpack.c.bf16 %v402, %v400
  %v439 = vpack.c.bf16 %v318, %v316
  %v440 = vpack.c.bf16 %v407, %v405
  %v441 = vld [vmem:[%s3] sm:$0xff]
  %v442 = vld [vmem:[%s3 + $0x8] sm:$0xff]
  %v443 = vld [vmem:[%s3 + $0x10] sm:$0xff]
  %v444 = vld [vmem:[%s3 + $0x18] sm:$0xff]
  %v445 = vld [vmem:[%s3 + $0x20] sm:$0xff]
  %v446 = vld [vmem:[%s3 + $0x28] sm:$0xff]
  %v447 = vld [vmem:[%s3 + $0x30] sm:$0xff]
  %v448 = vld [vmem:[%s3 + $0x38] sm:$0xff]
  %v449 = vld [vmem:[%s3 + $0x40] sm:$0xff]
  %v450 = vld [vmem:[%s3 + $0x48] sm:$0xff]
  %v451 = vld [vmem:[%s3 + $0x50] sm:$0xff]
  %v452 = vld [vmem:[%s3 + $0x58] sm:$0xff]
  %v453 = vld [vmem:[%s3 + $0x60] sm:$0xff]
  %v454 = vld [vmem:[%s3 + $0x68] sm:$0xff]
  %v455 = vld [vmem:[%s3 + $0x70] sm:$0xff]
  %v456 = vld [vmem:[%s3 + $0x78] sm:$0xff]
  %v457 = vld [vmem:[%s3 + $0x80] sm:$0xff]
  %v458 = vld [vmem:[%s3 + $0x88] sm:$0xff]
  %v459 = vld [vmem:[%s3 + $0x90] sm:$0xff]
  %v460 = vld [vmem:[%s3 + $0x98] sm:$0xff]
  %v461 = vld [vmem:[%s3 + $0xa0] sm:$0xff]
  %v462 = vld [vmem:[%s3 + $0xa8] sm:$0xff]
  %v463 = vld [vmem:[%s3 + $0xb0] sm:$0xff]
  %v464 = vld [vmem:[%s3 + $0xb8] sm:$0xff]
  %v465 = vld [vmem:[%s3 + $0xc0] sm:$0xff]
  %v466 = vld [vmem:[%s3 + $0xc8] sm:$0xff]
  %v467 = vld [vmem:[%s3 + $0xd0] sm:$0xff]
  %v468 = vld [vmem:[%s3 + $0xd8] sm:$0xff]
  %v469 = vld [vmem:[%s3 + $0xe0] sm:$0xff]
  %v470 = vld [vmem:[%s3 + $0xe8] sm:$0xff]
  %v471 = vld [vmem:[%s3 + $0xf0] sm:$0xff]
  %v472 = vld [vmem:[%s3 + $0xf8] sm:$0xff]
  %v473 = vld [vmem:[%s4] sm:$0x3]
  %v475 = vperm.slane %v473, 0
  %v476 = vperm.slane %v473, 1
  %v511 = vunpack.c.l.b16 %v441
  %v512 = vunpack.c.h.b16 %v441
  %v513 = vunpack.c.l.b16 %v442
  %v514 = vunpack.c.h.b16 %v442
  %v515 = vunpack.c.l.b16 %v443
  %v516 = vunpack.c.h.b16 %v443
  %v517 = vunpack.c.l.b16 %v444
  %v518 = vunpack.c.h.b16 %v444
  %v519 = vunpack.c.l.b16 %v445
  %v520 = vunpack.c.h.b16 %v445
  %v521 = vunpack.c.l.b16 %v446
  %v522 = vunpack.c.h.b16 %v446
  %v523 = vunpack.c.l.b16 %v447
  %v524 = vunpack.c.h.b16 %v447
  %v525 = vunpack.c.l.b16 %v448
  %v526 = vunpack.c.h.b16 %v448
  %v527 = vunpack.c.l.b16 %v449
  %v528 = vunpack.c.h.b16 %v449
  %v529 = vunpack.c.l.b16 %v450
  %v530 = vunpack.c.h.b16 %v450
  %v531 = vunpack.c.l.b16 %v451
  %v532 = vunpack.c.h.b16 %v451
  %v533 = vunpack.c.l.b16 %v452
  %v534 = vunpack.c.h.b16 %v452
  %v535 = vunpack.c.l.b16 %v453
  %v536 = vunpack.c.h.b16 %v453
  %v537 = vunpack.c.l.b16 %v454
  %v538 = vunpack.c.h.b16 %v454
  %v539 = vunpack.c.l.b16 %v455
  %v540 = vunpack.c.h.b16 %v455
  %v541 = vunpack.c.l.b16 %v456
  %v542 = vunpack.c.h.b16 %v456
  %v543 = vunpack.c.l.b16 %v457
  %v544 = vunpack.c.h.b16 %v457
  %v545 = vunpack.c.l.b16 %v458
  %v546 = vunpack.c.h.b16 %v458
  %v547 = vunpack.c.l.b16 %v459
  %v548 = vunpack.c.h.b16 %v459
  %v549 = vunpack.c.l.b16 %v460
  %v550 = vunpack.c.h.b16 %v460
  %v551 = vunpack.c.l.b16 %v461
  %v552 = vunpack.c.h.b16 %v461
  %v553 = vunpack.c.l.b16 %v462
  %v554 = vunpack.c.h.b16 %v462
  %v555 = vunpack.c.l.b16 %v463
  %v556 = vunpack.c.h.b16 %v463
  %v557 = vunpack.c.l.b16 %v464
  %v558 = vunpack.c.h.b16 %v464
  %v559 = vunpack.c.l.b16 %v465
  %v560 = vunpack.c.h.b16 %v465
  %v561 = vunpack.c.l.b16 %v466
  %v562 = vunpack.c.h.b16 %v466
  %v563 = vunpack.c.l.b16 %v467
  %v564 = vunpack.c.h.b16 %v467
  %v565 = vunpack.c.l.b16 %v468
  %v566 = vunpack.c.h.b16 %v468
  %v567 = vunpack.c.l.b16 %v469
  %v568 = vunpack.c.h.b16 %v469
  %v569 = vunpack.c.l.b16 %v470
  %v570 = vunpack.c.h.b16 %v470
  %v571 = vunpack.c.l.b16 %v471
  %v572 = vunpack.c.h.b16 %v471
  %v573 = vunpack.c.l.b16 %v472
  %v574 = vunpack.c.h.b16 %v472
  %v575 = vpack.c.b16 %v513, %v511
  %v576 = vpack.c.b16 %v514, %v512
  %v577 = vpack.c.b16 %v517, %v515
  %v578 = vpack.c.b16 %v518, %v516
  %v579 = vpack.c.b16 %v521, %v519
  %v580 = vpack.c.b16 %v522, %v520
  %v581 = vpack.c.b16 %v525, %v523
  %v582 = vpack.c.b16 %v526, %v524
  %v583 = vpack.c.b16 %v529, %v527
  %v584 = vpack.c.b16 %v530, %v528
  %v585 = vpack.c.b16 %v533, %v531
  %v586 = vpack.c.b16 %v534, %v532
  %v587 = vpack.c.b16 %v537, %v535
  %v588 = vpack.c.b16 %v538, %v536
  %v589 = vpack.c.b16 %v541, %v539
  %v590 = vpack.c.b16 %v542, %v540
  %v591 = vpack.c.b16 %v545, %v543
  %v592 = vpack.c.b16 %v546, %v544
  %v593 = vpack.c.b16 %v549, %v547
  %v594 = vpack.c.b16 %v550, %v548
  %v595 = vpack.c.b16 %v553, %v551
  %v596 = vpack.c.b16 %v554, %v552
  %v597 = vpack.c.b16 %v557, %v555
  %v598 = vpack.c.b16 %v558, %v556
  %v599 = vpack.c.b16 %v561, %v559
  %v600 = vpack.c.b16 %v562, %v560
  %v601 = vpack.c.b16 %v565, %v563
  %v602 = vpack.c.b16 %v566, %v564
  %v603 = vpack.c.b16 %v569, %v567
  %v604 = vpack.c.b16 %v570, %v568
  %v605 = vpack.c.b16 %v573, %v571
  %v606 = vpack.c.b16 %v574, %v572
  %639 = vmatpush.bf16.msra.mxu0 %v589
  %640 = vmatpush.bf16.msra.mxu0 %v587
  %641 = vmatpush.bf16.msra.mxu0 %v585
  %642 = vmatpush.bf16.msra.mxu0 %v583
  %643 = vmatpush.bf16.msra.mxu0 %v581
  %644 = vmatpush.bf16.msra.mxu0 %v579
  %645 = vmatpush.bf16.msra.mxu0 %v577
  %646 = vmatpush.bf16.msra.mxu0 %v575
  %647 = vmatmul.bf16.gmra.mxu0 %v409
  %v648 = vpop.f32.mrf.mxu0
  %v649 = vadd.f32 %v475, %v648
  %v650 = vpop.f32.mrf.mxu0
  %v651 = vadd.f32 %v475, %v650
  %652 = vmatmul.bf16.gmra.mxu0 %v411
  %v653 = vpop.f32.mrf.mxu0
  %v654 = vadd.f32 %v475, %v653
  %v655 = vpop.f32.mrf.mxu0
  %v656 = vadd.f32 %v475, %v655
  %657 = vmatmul.bf16.gmra.mxu0 %v413
  %v658 = vpop.f32.mrf.mxu0
  %v659 = vadd.f32 %v475, %v658
  %v660 = vpop.f32.mrf.mxu0
  %v661 = vadd.f32 %v475, %v660
  %662 = vmatmul.bf16.gmra.mxu0 %v415
  %v663 = vpop.f32.mrf.mxu0
  %v664 = vadd.f32 %v475, %v663
  %v665 = vpop.f32.mrf.mxu0
  %v666 = vadd.f32 %v475, %v665
  %667 = vmatmul.bf16.gmra.mxu0 %v417
  %v668 = vpop.f32.mrf.mxu0
  %v669 = vadd.f32 %v475, %v668
  %v670 = vpop.f32.mrf.mxu0
  %v671 = vadd.f32 %v475, %v670
  %672 = vmatmul.bf16.gmra.mxu0 %v419
  %v673 = vpop.f32.mrf.mxu0
  %v674 = vadd.f32 %v475, %v673
  %v675 = vpop.f32.mrf.mxu0
  %v676 = vadd.f32 %v475, %v675
  %677 = vmatmul.bf16.gmra.mxu0 %v421
  %v678 = vpop.f32.mrf.mxu0
  %v679 = vadd.f32 %v475, %v678
  %v680 = vpop.f32.mrf.mxu0
  %v681 = vadd.f32 %v475, %v680
  %682 = vmatmul.bf16.gmra.mxu0 %v423
  %v683 = vpop.f32.mrf.mxu0
  %v684 = vadd.f32 %v475, %v683
  %v685 = vpop.f32.mrf.mxu0
  %v686 = vadd.f32 %v475, %v685
  %687 = vmatmul.bf16.gmra.mxu0 %v425
  %v688 = vpop.f32.mrf.mxu0
  %v689 = vadd.f32 %v475, %v688
  %v690 = vpop.f32.mrf.mxu0
  %v691 = vadd.f32 %v475, %v690
  %692 = vmatmul.bf16.gmra.mxu0 %v427
  %v693 = vpop.f32.mrf.mxu0
  %v694 = vadd.f32 %v475, %v693
  %v695 = vpop.f32.mrf.mxu0
  %v696 = vadd.f32 %v475, %v695
  %697 = vmatmul.bf16.gmra.mxu0 %v429
  %v698 = vpop.f32.mrf.mxu0
  %v699 = vadd.f32 %v475, %v698
  %v700 = vpop.f32.mrf.mxu0
  %v701 = vadd.f32 %v475, %v700
  %702 = vmatmul.bf16.gmra.mxu0 %v431
  %v703 = vpop.f32.mrf.mxu0
  %v704 = vadd.f32 %v475, %v703
  %v705 = vpop.f32.mrf.mxu0
  %v706 = vadd.f32 %v475, %v705
  %707 = vmatmul.bf16.gmra.mxu0 %v433
  %v708 = vpop.f32.mrf.mxu0
  %v709 = vadd.f32 %v475, %v708
  %v710 = vpop.f32.mrf.mxu0
  %v711 = vadd.f32 %v475, %v710
  %712 = vmatmul.bf16.gmra.mxu0 %v435
  %v713 = vpop.f32.mrf.mxu0
  %v714 = vadd.f32 %v475, %v713
  %v715 = vpop.f32.mrf.mxu0
  %v716 = vadd.f32 %v475, %v715
  %717 = vmatmul.bf16.gmra.mxu0 %v437
  %v718 = vpop.f32.mrf.mxu0
  %v719 = vadd.f32 %v475, %v718
  %v720 = vpop.f32.mrf.mxu0
  %v721 = vadd.f32 %v475, %v720
  %722 = vmatmul.bf16.gmra.mxu0 %v439
  %v723 = vpop.f32.mrf.mxu0
  %v724 = vadd.f32 %v475, %v723
  %v725 = vpop.f32.mrf.mxu0
  %v726 = vadd.f32 %v475, %v725
  %727 = vdwg.mxu0
  %728 = vmatpush.bf16.msra.mxu0 %v605
  %729 = vmatpush.bf16.msra.mxu0 %v603
  %730 = vmatpush.bf16.msra.mxu0 %v601
  %731 = vmatpush.bf16.msra.mxu0 %v599
  %732 = vmatpush.bf16.msra.mxu0 %v597
  %733 = vmatpush.bf16.msra.mxu0 %v595
  %734 = vmatpush.bf16.msra.mxu0 %v593
  %735 = vmatpush.bf16.msra.mxu0 %v591
  %736 = vmatmul.bf16.gmra.mxu0 %v410
  %v737 = vpop.f32.mrf.mxu0
  %v738 = vadd.f32 %v649, %v737
  %v739 = vpop.f32.mrf.mxu0
  %v740 = vadd.f32 %v651, %v739
  %741 = vmatmul.bf16.gmra.mxu0 %v412
  %v742 = vpop.f32.mrf.mxu0
  %v743 = vadd.f32 %v654, %v742
  %v744 = vpop.f32.mrf.mxu0
  %v745 = vadd.f32 %v656, %v744
  %746 = vmatmul.bf16.gmra.mxu0 %v414
  %v747 = vpop.f32.mrf.mxu0
  %v748 = vadd.f32 %v659, %v747
  %v749 = vpop.f32.mrf.mxu0
  %v750 = vadd.f32 %v661, %v749
  %751 = vmatmul.bf16.gmra.mxu0 %v416
  %v752 = vpop.f32.mrf.mxu0
  %v753 = vadd.f32 %v664, %v752
  %v754 = vpop.f32.mrf.mxu0
  %v755 = vadd.f32 %v666, %v754
  %756 = vmatmul.bf16.gmra.mxu0 %v418
  %v757 = vpop.f32.mrf.mxu0
  %v758 = vadd.f32 %v669, %v757
  %v759 = vpop.f32.mrf.mxu0
  %v760 = vadd.f32 %v671, %v759
  %761 = vmatmul.bf16.gmra.mxu0 %v420
  %v762 = vpop.f32.mrf.mxu0
  %v763 = vadd.f32 %v674, %v762
  %v764 = vpop.f32.mrf.mxu0
  %v765 = vadd.f32 %v676, %v764
  %766 = vmatmul.bf16.gmra.mxu0 %v422
  %v767 = vpop.f32.mrf.mxu0
  %v768 = vadd.f32 %v679, %v767
  %v769 = vpop.f32.mrf.mxu0
  %v770 = vadd.f32 %v681, %v769
  %771 = vmatmul.bf16.gmra.mxu0 %v424
  %v772 = vpop.f32.mrf.mxu0
  %v773 = vadd.f32 %v684, %v772
  %v774 = vpop.f32.mrf.mxu0
  %v775 = vadd.f32 %v686, %v774
  %776 = vmatmul.bf16.gmra.mxu0 %v426
  %v777 = vpop.f32.mrf.mxu0
  %v778 = vadd.f32 %v689, %v777
  %v779 = vpop.f32.mrf.mxu0
  %v780 = vadd.f32 %v691, %v779
  %781 = vmatmul.bf16.gmra.mxu0 %v428
  %v782 = vpop.f32.mrf.mxu0
  %v783 = vadd.f32 %v694, %v782
  %v784 = vpop.f32.mrf.mxu0
  %v785 = vadd.f32 %v696, %v784
  %786 = vmatmul.bf16.gmra.mxu0 %v430
  %v787 = vpop.f32.mrf.mxu0
  %v788 = vadd.f32 %v699, %v787
  %v789 = vpop.f32.mrf.mxu0
  %v790 = vadd.f32 %v701, %v789
  %791 = vmatmul.bf16.gmra.mxu0 %v432
  %v792 = vpop.f32.mrf.mxu0
  %v793 = vadd.f32 %v704, %v792
  %v794 = vpop.f32.mrf.mxu0
  %v795 = vadd.f32 %v706, %v794
  %796 = vmatmul.bf16.gmra.mxu0 %v434
  %v797 = vpop.f32.mrf.mxu0
  %v798 = vadd.f32 %v709, %v797
  %v799 = vpop.f32.mrf.mxu0
  %v800 = vadd.f32 %v711, %v799
  %801 = vmatmul.bf16.gmra.mxu0 %v436
  %v802 = vpop.f32.mrf.mxu0
  %v803 = vadd.f32 %v714, %v802
  %v804 = vpop.f32.mrf.mxu0
  %v805 = vadd.f32 %v716, %v804
  %806 = vmatmul.bf16.gmra.mxu0 %v438
  %v807 = vpop.f32.mrf.mxu0
  %v808 = vadd.f32 %v719, %v807
  %v809 = vpop.f32.mrf.mxu0
  %v810 = vadd.f32 %v721, %v809
  %811 = vmatmul.bf16.gmra.mxu0 %v440
  %v812 = vpop.f32.mrf.mxu0
  %v813 = vadd.f32 %v724, %v812
  %v814 = vpop.f32.mrf.mxu0
  %v815 = vadd.f32 %v726, %v814
  %816 = vdwg.mxu0
  %817 = vmatpush.bf16.msra.mxu0 %v590
  %818 = vmatpush.bf16.msra.mxu0 %v588
  %819 = vmatpush.bf16.msra.mxu0 %v586
  %820 = vmatpush.bf16.msra.mxu0 %v584
  %821 = vmatpush.bf16.msra.mxu0 %v582
  %822 = vmatpush.bf16.msra.mxu0 %v580
  %823 = vmatpush.bf16.msra.mxu0 %v578
  %824 = vmatpush.bf16.msra.mxu0 %v576
  %825 = vmatmul.bf16.gmra.mxu0 %v409
  %v826 = vpop.f32.mrf.mxu0
  %v827 = vadd.f32 %v476, %v826
  %v828 = vpop.f32.mrf.mxu0
  %v829 = vadd.f32 %v476, %v828
  %830 = vmatmul.bf16.gmra.mxu0 %v411
  %v831 = vpop.f32.mrf.mxu0
  %v832 = vadd.f32 %v476, %v831
  %v833 = vpop.f32.mrf.mxu0
  %v834 = vadd.f32 %v476, %v833
  %835 = vmatmul.bf16.gmra.mxu0 %v413
  %v836 = vpop.f32.mrf.mxu0
  %v837 = vadd.f32 %v476, %v836
  %v838 = vpop.f32.mrf.mxu0
  %v839 = vadd.f32 %v476, %v838
  %840 = vmatmul.bf16.gmra.mxu0 %v415
  %v841 = vpop.f32.mrf.mxu0
  %v842 = vadd.f32 %v476, %v841
  %v843 = vpop.f32.mrf.mxu0
  %v844 = vadd.f32 %v476, %v843
  %845 = vmatmul.bf16.gmra.mxu0 %v417
  %v846 = vpop.f32.mrf.mxu0
  %v847 = vadd.f32 %v476, %v846
  %v848 = vpop.f32.mrf.mxu0
  %v849 = vadd.f32 %v476, %v848
  %850 = vmatmul.bf16.gmra.mxu0 %v419
  %v851 = vpop.f32.mrf.mxu0
  %v852 = vadd.f32 %v476, %v851
  %v853 = vpop.f32.mrf.mxu0
  %v854 = vadd.f32 %v476, %v853
  %855 = vmatmul.bf16.gmra.mxu0 %v421
  %v856 = vpop.f32.mrf.mxu0
  %v857 = vadd.f32 %v476, %v856
  %v858 = vpop.f32.mrf.mxu0
  %v859 = vadd.f32 %v476, %v858
  %860 = vmatmul.bf16.gmra.mxu0 %v423
  %v861 = vpop.f32.mrf.mxu0
  %v862 = vadd.f32 %v476, %v861
  %v863 = vpop.f32.mrf.mxu0
  %v864 = vadd.f32 %v476, %v863
  %865 = vmatmul.bf16.gmra.mxu0 %v425
  %v866 = vpop.f32.mrf.mxu0
  %v867 = vadd.f32 %v476, %v866
  %v868 = vpop.f32.mrf.mxu0
  %v869 = vadd.f32 %v476, %v868
  %870 = vmatmul.bf16.gmra.mxu0 %v427
  %v871 = vpop.f32.mrf.mxu0
  %v872 = vadd.f32 %v476, %v871
  %v873 = vpop.f32.mrf.mxu0
  %v874 = vadd.f32 %v476, %v873
  %875 = vmatmul.bf16.gmra.mxu0 %v429
  %v876 = vpop.f32.mrf.mxu0
  %v877 = vadd.f32 %v476, %v876
  %v878 = vpop.f32.mrf.mxu0
  %v879 = vadd.f32 %v476, %v878
  %880 = vmatmul.bf16.gmra.mxu0 %v431
  %v881 = vpop.f32.mrf.mxu0
  %v882 = vadd.f32 %v476, %v881
  %v883 = vpop.f32.mrf.mxu0
  %v884 = vadd.f32 %v476, %v883
  %885 = vmatmul.bf16.gmra.mxu0 %v433
  %v886 = vpop.f32.mrf.mxu0
  %v887 = vadd.f32 %v476, %v886
  %v888 = vpop.f32.mrf.mxu0
  %v889 = vadd.f32 %v476, %v888
  %890 = vmatmul.bf16.gmra.mxu0 %v435
  %v891 = vpop.f32.mrf.mxu0
  %v892 = vadd.f32 %v476, %v891
  %v893 = vpop.f32.mrf.mxu0
  %v894 = vadd.f32 %v476, %v893
  %895 = vmatmul.bf16.gmra.mxu0 %v437
  %v896 = vpop.f32.mrf.mxu0
  %v897 = vadd.f32 %v476, %v896
  %v898 = vpop.f32.mrf.mxu0
  %v899 = vadd.f32 %v476, %v898
  %900 = vmatmul.bf16.gmra.mxu0 %v439
  %v901 = vpop.f32.mrf.mxu0
  %v902 = vadd.f32 %v476, %v901
  %v903 = vpop.f32.mrf.mxu0
  %v904 = vadd.f32 %v476, %v903
  %905 = vdwg.mxu0
  %906 = vmatpush.bf16.msra.mxu0 %v606
  %907 = vmatpush.bf16.msra.mxu0 %v604
  %908 = vmatpush.bf16.msra.mxu0 %v602
  %909 = vmatpush.bf16.msra.mxu0 %v600
  %910 = vmatpush.bf16.msra.mxu0 %v598
  %911 = vmatpush.bf16.msra.mxu0 %v596
  %912 = vmatpush.bf16.msra.mxu0 %v594
  %913 = vmatpush.bf16.msra.mxu0 %v592
  %914 = vmatmul.bf16.gmra.mxu0 %v410
  %v915 = vpop.f32.mrf.mxu0
  %v916 = vadd.f32 %v827, %v915
  %v917 = vpop.f32.mrf.mxu0
  %v918 = vadd.f32 %v829, %v917
  %919 = vmatmul.bf16.gmra.mxu0 %v412
  %v920 = vpop.f32.mrf.mxu0
  %v921 = vadd.f32 %v832, %v920
  %v922 = vpop.f32.mrf.mxu0
  %v923 = vadd.f32 %v834, %v922
  %924 = vmatmul.bf16.gmra.mxu0 %v414
  %v925 = vpop.f32.mrf.mxu0
  %v926 = vadd.f32 %v837, %v925
  %v927 = vpop.f32.mrf.mxu0
  %v928 = vadd.f32 %v839, %v927
  %929 = vmatmul.bf16.gmra.mxu0 %v416
  %v930 = vpop.f32.mrf.mxu0
  %v931 = vadd.f32 %v842, %v930
  %v932 = vpop.f32.mrf.mxu0
  %v933 = vadd.f32 %v844, %v932
  %934 = vmatmul.bf16.gmra.mxu0 %v418
  %v935 = vpop.f32.mrf.mxu0
  %v936 = vadd.f32 %v847, %v935
  %v937 = vpop.f32.mrf.mxu0
  %v938 = vadd.f32 %v849, %v937
  %939 = vmatmul.bf16.gmra.mxu0 %v420
  %v940 = vpop.f32.mrf.mxu0
  %v941 = vadd.f32 %v852, %v940
  %v942 = vpop.f32.mrf.mxu0
  %v943 = vadd.f32 %v854, %v942
  %944 = vmatmul.bf16.gmra.mxu0 %v422
  %v945 = vpop.f32.mrf.mxu0
  %v946 = vadd.f32 %v857, %v945
  %v947 = vpop.f32.mrf.mxu0
  %v948 = vadd.f32 %v859, %v947
  %949 = vmatmul.bf16.gmra.mxu0 %v424
  %v950 = vpop.f32.mrf.mxu0
  %v951 = vadd.f32 %v862, %v950
  %v952 = vpop.f32.mrf.mxu0
  %v953 = vadd.f32 %v864, %v952
  %954 = vmatmul.bf16.gmra.mxu0 %v426
  %v955 = vpop.f32.mrf.mxu0
  %v956 = vadd.f32 %v867, %v955
  %v957 = vpop.f32.mrf.mxu0
  %v958 = vadd.f32 %v869, %v957
  %959 = vmatmul.bf16.gmra.mxu0 %v428
  %v960 = vpop.f32.mrf.mxu0
  %v961 = vadd.f32 %v872, %v960
  %v962 = vpop.f32.mrf.mxu0
  %v963 = vadd.f32 %v874, %v962
  %964 = vmatmul.bf16.gmra.mxu0 %v430
  %v965 = vpop.f32.mrf.mxu0
  %v966 = vadd.f32 %v877, %v965
  %v967 = vpop.f32.mrf.mxu0
  %v968 = vadd.f32 %v879, %v967
  %969 = vmatmul.bf16.gmra.mxu0 %v432
  %v970 = vpop.f32.mrf.mxu0
  %v971 = vadd.f32 %v882, %v970
  %v972 = vpop.f32.mrf.mxu0
  %v973 = vadd.f32 %v884, %v972
  %974 = vmatmul.bf16.gmra.mxu0 %v434
  %v975 = vpop.f32.mrf.mxu0
  %v976 = vadd.f32 %v887, %v975
  %v977 = vpop.f32.mrf.mxu0
  %v978 = vadd.f32 %v889, %v977
  %979 = vmatmul.bf16.gmra.mxu0 %v436
  %v980 = vpop.f32.mrf.mxu0
  %v981 = vadd.f32 %v892, %v980
  %v982 = vpop.f32.mrf.mxu0
  %v983 = vadd.f32 %v894, %v982
  %984 = vmatmul.bf16.gmra.mxu0 %v438
  %v985 = vpop.f32.mrf.mxu0
  %v986 = vadd.f32 %v897, %v985
  %v987 = vpop.f32.mrf.mxu0
  %v988 = vadd.f32 %v899, %v987
  %989 = vmatmul.bf16.gmra.mxu0 %v440
  %v990 = vpop.f32.mrf.mxu0
  %v991 = vadd.f32 %v902, %v990
  %v992 = vpop.f32.mrf.mxu0
  %v993 = vadd.f32 %v904, %v992
  %994 = vdwg.mxu0
  %v995 = vmax.f32 %v738, 0.0
  %v996 = vmax.f32 %v916, 0.0
  %v997 = vmax.f32 %v740, 0.0
  %v998 = vmax.f32 %v918, 0.0
  %v999 = vmax.f32 %v743, 0.0
  %v1000 = vmax.f32 %v921, 0.0
  %v1001 = vmax.f32 %v745, 0.0
  %v1002 = vmax.f32 %v923, 0.0
  %v1003 = vmax.f32 %v748, 0.0
  %v1004 = vmax.f32 %v926, 0.0
  %v1005 = vmax.f32 %v750, 0.0
  %v1006 = vmax.f32 %v928, 0.0
  %v1007 = vmax.f32 %v753, 0.0
  %v1008 = vmax.f32 %v931, 0.0
  %v1009 = vmax.f32 %v755, 0.0
  %v1010 = vmax.f32 %v933, 0.0
  %v1011 = vmax.f32 %v758, 0.0
  %v1012 = vmax.f32 %v936, 0.0
  %v1013 = vmax.f32 %v760, 0.0
  %v1014 = vmax.f32 %v938, 0.0
  %v1015 = vmax.f32 %v763, 0.0
  %v1016 = vmax.f32 %v941, 0.0
  %v1017 = vmax.f32 %v765, 0.0
  %v1018 = vmax.f32 %v943, 0.0
  %v1019 = vmax.f32 %v768, 0.0
  %v1020 = vmax.f32 %v946, 0.0
  %v1021 = vmax.f32 %v770, 0.0
  %v1022 = vmax.f32 %v948, 0.0
  %v1023 = vmax.f32 %v773, 0.0
  %v1024 = vmax.f32 %v951, 0.0
  %v1025 = vmax.f32 %v775, 0.0
  %v1026 = vmax.f32 %v953, 0.0
  %v1027 = vmax.f32 %v778, 0.0
  %v1028 = vmax.f32 %v956, 0.0
  %v1029 = vmax.f32 %v780, 0.0
  %v1030 = vmax.f32 %v958, 0.0
  %v1031 = vmax.f32 %v783, 0.0
  %v1032 = vmax.f32 %v961, 0.0
  %v1033 = vmax.f32 %v785, 0.0
  %v1034 = vmax.f32 %v963, 0.0
  %v1035 = vmax.f32 %v788, 0.0
  %v1036 = vmax.f32 %v966, 0.0
  %v1037 = vmax.f32 %v790, 0.0
  %v1038 = vmax.f32 %v968, 0.0
  %v1039 = vmax.f32 %v793, 0.0
  %v1040 = vmax.f32 %v971, 0.0
  %v1041 = vmax.f32 %v795, 0.0
  %v1042 = vmax.f32 %v973, 0.0
  %v1043 = vmax.f32 %v798, 0.0
  %v1044 = vmax.f32 %v976, 0.0
  %v1045 = vmax.f32 %v800, 0.0
  %v1046 = vmax.f32 %v978, 0.0
  %v1047 = vmax.f32 %v803, 0.0
  %v1048 = vmax.f32 %v981, 0.0
  %v1049 = vmax.f32 %v805, 0.0
  %v1050 = vmax.f32 %v983, 0.0
  %v1051 = vmax.f32 %v808, 0.0
  %v1052 = vmax.f32 %v986, 0.0
  %v1053 = vmax.f32 %v810, 0.0
  %v1054 = vmax.f32 %v988, 0.0
  %v1055 = vmax.f32 %v813, 0.0
  %v1056 = vmax.f32 %v991, 0.0
  %v1057 = vmax.f32 %v815, 0.0
  %v1058 = vmax.f32 %v993, 0.0
  %v1059 = vpack.c.bf16 %v997, %v995
  %v1060 = vpack.c.bf16 %v998, %v996
  %v1061 = vpack.c.bf16 %v1001, %v999
  %v1062 = vpack.c.bf16 %v1002, %v1000
  %v1063 = vpack.c.bf16 %v1005, %v1003
  %v1064 = vpack.c.bf16 %v1006, %v1004
  %v1065 = vpack.c.bf16 %v1009, %v1007
  %v1066 = vpack.c.bf16 %v1010, %v1008
  %v1067 = vpack.c.bf16 %v1013, %v1011
  %v1068 = vpack.c.bf16 %v1014, %v1012
  %v1069 = vpack.c.bf16 %v1017, %v1015
  %v1070 = vpack.c.bf16 %v1018, %v1016
  %v1071 = vpack.c.bf16 %v1021, %v1019
  %v1072 = vpack.c.bf16 %v1022, %v1020
  %v1073 = vpack.c.bf16 %v1025, %v1023
  %v1074 = vpack.c.bf16 %v1026, %v1024
  %v1075 = vpack.c.bf16 %v1029, %v1027
  %v1076 = vpack.c.bf16 %v1030, %v1028
  %v1077 = vpack.c.bf16 %v1033, %v1031
  %v1078 = vpack.c.bf16 %v1034, %v1032
  %v1079 = vpack.c.bf16 %v1037, %v1035
  %v1080 = vpack.c.bf16 %v1038, %v1036
  %v1081 = vpack.c.bf16 %v1041, %v1039
  %v1082 = vpack.c.bf16 %v1042, %v1040
  %v1083 = vpack.c.bf16 %v1045, %v1043
  %v1084 = vpack.c.bf16 %v1046, %v1044
  %v1085 = vpack.c.bf16 %v1049, %v1047
  %v1086 = vpack.c.bf16 %v1050, %v1048
  %v1087 = vpack.c.bf16 %v1053, %v1051
  %v1088 = vpack.c.bf16 %v1054, %v1052
  %v1089 = vpack.c.bf16 %v1057, %v1055
  %v1090 = vpack.c.bf16 %v1058, %v1056
  %v1091 = vld [vmem:[%s5] sm:$0xff]
  %v1092 = vld [vmem:[%s5 + $0x8] sm:$0xff]
  %v1093 = vld [vmem:[%s5 + $0x10] sm:$0xff]
  %v1094 = vld [vmem:[%s5 + $0x18] sm:$0xff]
  %v1095 = vld [vmem:[%s5 + $0x20] sm:$0xff]
  %v1096 = vld [vmem:[%s5 + $0x28] sm:$0xff]
  %v1097 = vld [vmem:[%s5 + $0x30] sm:$0xff]
  %v1098 = vld [vmem:[%s5 + $0x38] sm:$0xff]
  %v1099 = vld [vmem:[%s5 + $0x40] sm:$0xff]
  %v1100 = vld [vmem:[%s5 + $0x48] sm:$0xff]
  %v1101 = vld [vmem:[%s5 + $0x50] sm:$0xff]
  %v1102 = vld [vmem:[%s5 + $0x58] sm:$0xff]
  %v1103 = vld [vmem:[%s5 + $0x60] sm:$0xff]
  %v1104 = vld [vmem:[%s5 + $0x68] sm:$0xff]
  %v1105 = vld [vmem:[%s5 + $0x70] sm:$0xff]
  %v1106 = vld [vmem:[%s5 + $0x78] sm:$0xff]
  %v1107 = vld [vmem:[%s5 + $0x80] sm:$0xff]
  %v1108 = vld [vmem:[%s5 + $0x88] sm:$0xff]
  %v1109 = vld [vmem:[%s5 + $0x90] sm:$0xff]
  %v1110 = vld [vmem:[%s5 + $0x98] sm:$0xff]
  %v1111 = vld [vmem:[%s5 + $0xa0] sm:$0xff]
  %v1112 = vld [vmem:[%s5 + $0xa8] sm:$0xff]
  %v1113 = vld [vmem:[%s5 + $0xb0] sm:$0xff]
  %v1114 = vld [vmem:[%s5 + $0xb8] sm:$0xff]
  %v1115 = vld [vmem:[%s5 + $0xc0] sm:$0xff]
  %v1116 = vld [vmem:[%s5 + $0xc8] sm:$0xff]
  %v1117 = vld [vmem:[%s5 + $0xd0] sm:$0xff]
  %v1118 = vld [vmem:[%s5 + $0xd8] sm:$0xff]
  %v1119 = vld [vmem:[%s5 + $0xe0] sm:$0xff]
  %v1120 = vld [vmem:[%s5 + $0xe8] sm:$0xff]
  %v1121 = vld [vmem:[%s5 + $0xf0] sm:$0xff]
  %v1122 = vld [vmem:[%s5 + $0xf8] sm:$0xff]
  %v1123 = vld [vmem:[%s6] sm:$0x3]
  %v1125 = vperm.slane %v1123, 0
  %v1126 = vperm.slane %v1123, 1
  %v1161 = vunpack.c.l.b16 %v1091
  %v1162 = vunpack.c.h.b16 %v1091
  %v1163 = vunpack.c.l.b16 %v1092
  %v1164 = vunpack.c.h.b16 %v1092
  %v1165 = vunpack.c.l.b16 %v1093
  %v1166 = vunpack.c.h.b16 %v1093
  %v1167 = vunpack.c.l.b16 %v1094
  %v1168 = vunpack.c.h.b16 %v1094
  %v1169 = vunpack.c.l.b16 %v1095
  %v1170 = vunpack.c.h.b16 %v1095
  %v1171 = vunpack.c.l.b16 %v1096
  %v1172 = vunpack.c.h.b16 %v1096
  %v1173 = vunpack.c.l.b16 %v1097
  %v1174 = vunpack.c.h.b16 %v1097
  %v1175 = vunpack.c.l.b16 %v1098
  %v1176 = vunpack.c.h.b16 %v1098
  %v1177 = vunpack.c.l.b16 %v1099
  %v1178 = vunpack.c.h.b16 %v1099
  %v1179 = vunpack.c.l.b16 %v1100
  %v1180 = vunpack.c.h.b16 %v1100
  %v1181 = vunpack.c.l.b16 %v1101
  %v1182 = vunpack.c.h.b16 %v1101
  %v1183 = vunpack.c.l.b16 %v1102
  %v1184 = vunpack.c.h.b16 %v1102
  %v1185 = vunpack.c.l.b16 %v1103
  %v1186 = vunpack.c.h.b16 %v1103
  %v1187 = vunpack.c.l.b16 %v1104
  %v1188 = vunpack.c.h.b16 %v1104
  %v1189 = vunpack.c.l.b16 %v1105
  %v1190 = vunpack.c.h.b16 %v1105
  %v1191 = vunpack.c.l.b16 %v1106
  %v1192 = vunpack.c.h.b16 %v1106
  %v1193 = vunpack.c.l.b16 %v1107
  %v1194 = vunpack.c.h.b16 %v1107
  %v1195 = vunpack.c.l.b16 %v1108
  %v1196 = vunpack.c.h.b16 %v1108
  %v1197 = vunpack.c.l.b16 %v1109
  %v1198 = vunpack.c.h.b16 %v1109
  %v1199 = vunpack.c.l.b16 %v1110
  %v1200 = vunpack.c.h.b16 %v1110
  %v1201 = vunpack.c.l.b16 %v1111
  %v1202 = vunpack.c.h.b16 %v1111
  %v1203 = vunpack.c.l.b16 %v1112
  %v1204 = vunpack.c.h.b16 %v1112
  %v1205 = vunpack.c.l.b16 %v1113
  %v1206 = vunpack.c.h.b16 %v1113
  %v1207 = vunpack.c.l.b16 %v1114
  %v1208 = vunpack.c.h.b16 %v1114
  %v1209 = vunpack.c.l.b16 %v1115
  %v1210 = vunpack.c.h.b16 %v1115
  %v1211 = vunpack.c.l.b16 %v1116
  %v1212 = vunpack.c.h.b16 %v1116
  %v1213 = vunpack.c.l.b16 %v1117
  %v1214 = vunpack.c.h.b16 %v1117
  %v1215 = vunpack.c.l.b16 %v1118
  %v1216 = vunpack.c.h.b16 %v1118
  %v1217 = vunpack.c.l.b16 %v1119
  %v1218 = vunpack.c.h.b16 %v1119
  %v1219 = vunpack.c.l.b16 %v1120
  %v1220 = vunpack.c.h.b16 %v1120
  %v1221 = vunpack.c.l.b16 %v1121
  %v1222 = vunpack.c.h.b16 %v1121
  %v1223 = vunpack.c.l.b16 %v1122
  %v1224 = vunpack.c.h.b16 %v1122
  %v1225 = vpack.c.b16 %v1163, %v1161
  %v1226 = vpack.c.b16 %v1164, %v1162
  %v1227 = vpack.c.b16 %v1167, %v1165
  %v1228 = vpack.c.b16 %v1168, %v1166
  %v1229 = vpack.c.b16 %v1171, %v1169
  %v1230 = vpack.c.b16 %v1172, %v1170
  %v1231 = vpack.c.b16 %v1175, %v1173
  %v1232 = vpack.c.b16 %v1176, %v1174
  %v1233 = vpack.c.b16 %v1179, %v1177
  %v1234 = vpack.c.b16 %v1180, %v1178
  %v1235 = vpack.c.b16 %v1183, %v1181
  %v1236 = vpack.c.b16 %v1184, %v1182
  %v1237 = vpack.c.b16 %v1187, %v1185
  %v1238 = vpack.c.b16 %v1188, %v1186
  %v1239 = vpack.c.b16 %v1191, %v1189
  %v1240 = vpack.c.b16 %v1192, %v1190
  %v1241 = vpack.c.b16 %v1195, %v1193
  %v1242 = vpack.c.b16 %v1196, %v1194
  %v1243 = vpack.c.b16 %v1199, %v1197
  %v1244 = vpack.c.b16 %v1200, %v1198
  %v1245 = vpack.c.b16 %v1203, %v1201
  %v1246 = vpack.c.b16 %v1204, %v1202
  %v1247 = vpack.c.b16 %v1207, %v1205
  %v1248 = vpack.c.b16 %v1208, %v1206
  %v1249 = vpack.c.b16 %v1211, %v1209
  %v1250 = vpack.c.b16 %v1212, %v1210
  %v1251 = vpack.c.b16 %v1215, %v1213
  %v1252 = vpack.c.b16 %v1216, %v1214
  %v1253 = vpack.c.b16 %v1219, %v1217
  %v1254 = vpack.c.b16 %v1220, %v1218
  %v1255 = vpack.c.b16 %v1223, %v1221
  %v1256 = vpack.c.b16 %v1224, %v1222
  %1289 = vmatpush.bf16.msra.mxu0 %v1239
  %1290 = vmatpush.bf16.msra.mxu0 %v1237
  %1291 = vmatpush.bf16.msra.mxu0 %v1235
  %1292 = vmatpush.bf16.msra.mxu0 %v1233
  %1293 = vmatpush.bf16.msra.mxu0 %v1231
  %1294 = vmatpush.bf16.msra.mxu0 %v1229
  %1295 = vmatpush.bf16.msra.mxu0 %v1227
  %1296 = vmatpush.bf16.msra.mxu0 %v1225
  %1297 = vmatmul.bf16.gmra.mxu0 %v1059
  %v1298 = vpop.f32.mrf.mxu0
  %v1299 = vadd.f32 %v1125, %v1298
  %v1300 = vpop.f32.mrf.mxu0
  %v1301 = vadd.f32 %v1125, %v1300
  %1302 = vmatmul.bf16.gmra.mxu0 %v1061
  %v1303 = vpop.f32.mrf.mxu0
  %v1304 = vadd.f32 %v1125, %v1303
  %v1305 = vpop.f32.mrf.mxu0
  %v1306 = vadd.f32 %v1125, %v1305
  %1307 = vmatmul.bf16.gmra.mxu0 %v1063
  %v1308 = vpop.f32.mrf.mxu0
  %v1309 = vadd.f32 %v1125, %v1308
  %v1310 = vpop.f32.mrf.mxu0
  %v1311 = vadd.f32 %v1125, %v1310
  %1312 = vmatmul.bf16.gmra.mxu0 %v1065
  %v1313 = vpop.f32.mrf.mxu0
  %v1314 = vadd.f32 %v1125, %v1313
  %v1315 = vpop.f32.mrf.mxu0
  %v1316 = vadd.f32 %v1125, %v1315
  %1317 = vmatmul.bf16.gmra.mxu0 %v1067
  %v1318 = vpop.f32.mrf.mxu0
  %v1319 = vadd.f32 %v1125, %v1318
  %v1320 = vpop.f32.mrf.mxu0
  %v1321 = vadd.f32 %v1125, %v1320
  %1322 = vmatmul.bf16.gmra.mxu0 %v1069
  %v1323 = vpop.f32.mrf.mxu0
  %v1324 = vadd.f32 %v1125, %v1323
  %v1325 = vpop.f32.mrf.mxu0
  %v1326 = vadd.f32 %v1125, %v1325
  %1327 = vmatmul.bf16.gmra.mxu0 %v1071
  %v1328 = vpop.f32.mrf.mxu0
  %v1329 = vadd.f32 %v1125, %v1328
  %v1330 = vpop.f32.mrf.mxu0
  %v1331 = vadd.f32 %v1125, %v1330
  %1332 = vmatmul.bf16.gmra.mxu0 %v1073
  %v1333 = vpop.f32.mrf.mxu0
  %v1334 = vadd.f32 %v1125, %v1333
  %v1335 = vpop.f32.mrf.mxu0
  %v1336 = vadd.f32 %v1125, %v1335
  %1337 = vmatmul.bf16.gmra.mxu0 %v1075
  %v1338 = vpop.f32.mrf.mxu0
  %v1339 = vadd.f32 %v1125, %v1338
  %v1340 = vpop.f32.mrf.mxu0
  %v1341 = vadd.f32 %v1125, %v1340
  %1342 = vmatmul.bf16.gmra.mxu0 %v1077
  %v1343 = vpop.f32.mrf.mxu0
  %v1344 = vadd.f32 %v1125, %v1343
  %v1345 = vpop.f32.mrf.mxu0
  %v1346 = vadd.f32 %v1125, %v1345
  %1347 = vmatmul.bf16.gmra.mxu0 %v1079
  %v1348 = vpop.f32.mrf.mxu0
  %v1349 = vadd.f32 %v1125, %v1348
  %v1350 = vpop.f32.mrf.mxu0
  %v1351 = vadd.f32 %v1125, %v1350
  %1352 = vmatmul.bf16.gmra.mxu0 %v1081
  %v1353 = vpop.f32.mrf.mxu0
  %v1354 = vadd.f32 %v1125, %v1353
  %v1355 = vpop.f32.mrf.mxu0
  %v1356 = vadd.f32 %v1125, %v1355
  %1357 = vmatmul.bf16.gmra.mxu0 %v1083
  %v1358 = vpop.f32.mrf.mxu0
  %v1359 = vadd.f32 %v1125, %v1358
  %v1360 = vpop.f32.mrf.mxu0
  %v1361 = vadd.f32 %v1125, %v1360
  %1362 = vmatmul.bf16.gmra.mxu0 %v1085
  %v1363 = vpop.f32.mrf.mxu0
  %v1364 = vadd.f32 %v1125, %v1363
  %v1365 = vpop.f32.mrf.mxu0
  %v1366 = vadd.f32 %v1125, %v1365
  %1367 = vmatmul.bf16.gmra.mxu0 %v1087
  %v1368 = vpop.f32.mrf.mxu0
  %v1369 = vadd.f32 %v1125, %v1368
  %v1370 = vpop.f32.mrf.mxu0
  %v1371 = vadd.f32 %v1125, %v1370
  %1372 = vmatmul.bf16.gmra.mxu0 %v1089
  %v1373 = vpop.f32.mrf.mxu0
  %v1374 = vadd.f32 %v1125, %v1373
  %v1375 = vpop.f32.mrf.mxu0
  %v1376 = vadd.f32 %v1125, %v1375
  %1377 = vdwg.mxu0
  %1378 = vmatpush.bf16.msra.mxu0 %v1255
  %1379 = vmatpush.bf16.msra.mxu0 %v1253
  %1380 = vmatpush.bf16.msra.mxu0 %v1251
  %1381 = vmatpush.bf16.msra.mxu0 %v1249
  %1382 = vmatpush.bf16.msra.mxu0 %v1247
  %1383 = vmatpush.bf16.msra.mxu0 %v1245
  %1384 = vmatpush.bf16.msra.mxu0 %v1243
  %1385 = vmatpush.bf16.msra.mxu0 %v1241
  %1386 = vmatmul.bf16.gmra.mxu0 %v1060
  %v1387 = vpop.f32.mrf.mxu0
  %v1388 = vadd.f32 %v1299, %v1387
  %v1389 = vpop.f32.mrf.mxu0
  %v1390 = vadd.f32 %v1301, %v1389
  %1391 = vmatmul.bf16.gmra.mxu0 %v1062
  %v1392 = vpop.f32.mrf.mxu0
  %v1393 = vadd.f32 %v1304, %v1392
  %v1394 = vpop.f32.mrf.mxu0
  %v1395 = vadd.f32 %v1306, %v1394
  %1396 = vmatmul.bf16.gmra.mxu0 %v1064
  %v1397 = vpop.f32.mrf.mxu0
  %v1398 = vadd.f32 %v1309, %v1397
  %v1399 = vpop.f32.mrf.mxu0
  %v1400 = vadd.f32 %v1311, %v1399
  %1401 = vmatmul.bf16.gmra.mxu0 %v1066
  %v1402 = vpop.f32.mrf.mxu0
  %v1403 = vadd.f32 %v1314, %v1402
  %v1404 = vpop.f32.mrf.mxu0
  %v1405 = vadd.f32 %v1316, %v1404
  %1406 = vmatmul.bf16.gmra.mxu0 %v1068
  %v1407 = vpop.f32.mrf.mxu0
  %v1408 = vadd.f32 %v1319, %v1407
  %v1409 = vpop.f32.mrf.mxu0
  %v1410 = vadd.f32 %v1321, %v1409
  %1411 = vmatmul.bf16.gmra.mxu0 %v1070
  %v1412 = vpop.f32.mrf.mxu0
  %v1413 = vadd.f32 %v1324, %v1412
  %v1414 = vpop.f32.mrf.mxu0
  %v1415 = vadd.f32 %v1326, %v1414
  %1416 = vmatmul.bf16.gmra.mxu0 %v1072
  %v1417 = vpop.f32.mrf.mxu0
  %v1418 = vadd.f32 %v1329, %v1417
  %v1419 = vpop.f32.mrf.mxu0
  %v1420 = vadd.f32 %v1331, %v1419
  %1421 = vmatmul.bf16.gmra.mxu0 %v1074
  %v1422 = vpop.f32.mrf.mxu0
  %v1423 = vadd.f32 %v1334, %v1422
  %v1424 = vpop.f32.mrf.mxu0
  %v1425 = vadd.f32 %v1336, %v1424
  %1426 = vmatmul.bf16.gmra.mxu0 %v1076
  %v1427 = vpop.f32.mrf.mxu0
  %v1428 = vadd.f32 %v1339, %v1427
  %v1429 = vpop.f32.mrf.mxu0
  %v1430 = vadd.f32 %v1341, %v1429
  %1431 = vmatmul.bf16.gmra.mxu0 %v1078
  %v1432 = vpop.f32.mrf.mxu0
  %v1433 = vadd.f32 %v1344, %v1432
  %v1434 = vpop.f32.mrf.mxu0
  %v1435 = vadd.f32 %v1346, %v1434
  %1436 = vmatmul.bf16.gmra.mxu0 %v1080
  %v1437 = vpop.f32.mrf.mxu0
  %v1438 = vadd.f32 %v1349, %v1437
  %v1439 = vpop.f32.mrf.mxu0
  %v1440 = vadd.f32 %v1351, %v1439
  %1441 = vmatmul.bf16.gmra.mxu0 %v1082
  %v1442 = vpop.f32.mrf.mxu0
  %v1443 = vadd.f32 %v1354, %v1442
  %v1444 = vpop.f32.mrf.mxu0
  %v1445 = vadd.f32 %v1356, %v1444
  %1446 = vmatmul.bf16.gmra.mxu0 %v1084
  %v1447 = vpop.f32.mrf.mxu0
  %v1448 = vadd.f32 %v1359, %v1447
  %v1449 = vpop.f32.mrf.mxu0
  %v1450 = vadd.f32 %v1361, %v1449
  %1451 = vmatmul.bf16.gmra.mxu0 %v1086
  %v1452 = vpop.f32.mrf.mxu0
  %v1453 = vadd.f32 %v1364, %v1452
  %v1454 = vpop.f32.mrf.mxu0
  %v1455 = vadd.f32 %v1366, %v1454
  %1456 = vmatmul.bf16.gmra.mxu0 %v1088
  %v1457 = vpop.f32.mrf.mxu0
  %v1458 = vadd.f32 %v1369, %v1457
  %v1459 = vpop.f32.mrf.mxu0
  %v1460 = vadd.f32 %v1371, %v1459
  %1461 = vmatmul.bf16.gmra.mxu0 %v1090
  %v1462 = vpop.f32.mrf.mxu0
  %v1463 = vadd.f32 %v1374, %v1462
  %v1464 = vpop.f32.mrf.mxu0
  %v1465 = vadd.f32 %v1376, %v1464
  %1466 = vdwg.mxu0
  %1467 = vmatpush.bf16.msra.mxu0 %v1240
  %1468 = vmatpush.bf16.msra.mxu0 %v1238
  %1469 = vmatpush.bf16.msra.mxu0 %v1236
  %1470 = vmatpush.bf16.msra.mxu0 %v1234
  %1471 = vmatpush.bf16.msra.mxu0 %v1232
  %1472 = vmatpush.bf16.msra.mxu0 %v1230
  %1473 = vmatpush.bf16.msra.mxu0 %v1228
  %1474 = vmatpush.bf16.msra.mxu0 %v1226
  %1475 = vmatmul.bf16.gmra.mxu0 %v1059
  %v1476 = vpop.f32.mrf.mxu0
  %v1477 = vadd.f32 %v1126, %v1476
  %v1478 = vpop.f32.mrf.mxu0
  %v1479 = vadd.f32 %v1126, %v1478
  %1480 = vmatmul.bf16.gmra.mxu0 %v1061
  %v1481 = vpop.f32.mrf.mxu0
  %v1482 = vadd.f32 %v1126, %v1481
  %v1483 = vpop.f32.mrf.mxu0
  %v1484 = vadd.f32 %v1126, %v1483
  %1485 = vmatmul.bf16.gmra.mxu0 %v1063
  %v1486 = vpop.f32.mrf.mxu0
  %v1487 = vadd.f32 %v1126, %v1486
  %v1488 = vpop.f32.mrf.mxu0
  %v1489 = vadd.f32 %v1126, %v1488
  %1490 = vmatmul.bf16.gmra.mxu0 %v1065
  %v1491 = vpop.f32.mrf.mxu0
  %v1492 = vadd.f32 %v1126, %v1491
  %v1493 = vpop.f32.mrf.mxu0
  %v1494 = vadd.f32 %v1126, %v1493
  %1495 = vmatmul.bf16.gmra.mxu0 %v1067
  %v1496 = vpop.f32.mrf.mxu0
  %v1497 = vadd.f32 %v1126, %v1496
  %v1498 = vpop.f32.mrf.mxu0
  %v1499 = vadd.f32 %v1126, %v1498
  %1500 = vmatmul.bf16.gmra.mxu0 %v1069
  %v1501 = vpop.f32.mrf.mxu0
  %v1502 = vadd.f32 %v1126, %v1501
  %v1503 = vpop.f32.mrf.mxu0
  %v1504 = vadd.f32 %v1126, %v1503
  %1505 = vmatmul.bf16.gmra.mxu0 %v1071
  %v1506 = vpop.f32.mrf.mxu0
  %v1507 = vadd.f32 %v1126, %v1506
  %v1508 = vpop.f32.mrf.mxu0
  %v1509 = vadd.f32 %v1126, %v1508
  %1510 = vmatmul.bf16.gmra.mxu0 %v1073
  %v1511 = vpop.f32.mrf.mxu0
  %v1512 = vadd.f32 %v1126, %v1511
  %v1513 = vpop.f32.mrf.mxu0
  %v1514 = vadd.f32 %v1126, %v1513
  %1515 = vmatmul.bf16.gmra.mxu0 %v1075
  %v1516 = vpop.f32.mrf.mxu0
  %v1517 = vadd.f32 %v1126, %v1516
  %v1518 = vpop.f32.mrf.mxu0
  %v1519 = vadd.f32 %v1126, %v1518
  %1520 = vmatmul.bf16.gmra.mxu0 %v1077
  %v1521 = vpop.f32.mrf.mxu0
  %v1522 = vadd.f32 %v1126, %v1521
  %v1523 = vpop.f32.mrf.mxu0
  %v1524 = vadd.f32 %v1126, %v1523
  %1525 = vmatmul.bf16.gmra.mxu0 %v1079
  %v1526 = vpop.f32.mrf.mxu0
  %v1527 = vadd.f32 %v1126, %v1526
  %v1528 = vpop.f32.mrf.mxu0
  %v1529 = vadd.f32 %v1126, %v1528
  %1530 = vmatmul.bf16.gmra.mxu0 %v1081
  %v1531 = vpop.f32.mrf.mxu0
  %v1532 = vadd.f32 %v1126, %v1531
  %v1533 = vpop.f32.mrf.mxu0
  %v1534 = vadd.f32 %v1126, %v1533
  %1535 = vmatmul.bf16.gmra.mxu0 %v1083
  %v1536 = vpop.f32.mrf.mxu0
  %v1537 = vadd.f32 %v1126, %v1536
  %v1538 = vpop.f32.mrf.mxu0
  %v1539 = vadd.f32 %v1126, %v1538
  %1540 = vmatmul.bf16.gmra.mxu0 %v1085
  %v1541 = vpop.f32.mrf.mxu0
  %v1542 = vadd.f32 %v1126, %v1541
  %v1543 = vpop.f32.mrf.mxu0
  %v1544 = vadd.f32 %v1126, %v1543
  %1545 = vmatmul.bf16.gmra.mxu0 %v1087
  %v1546 = vpop.f32.mrf.mxu0
  %v1547 = vadd.f32 %v1126, %v1546
  %v1548 = vpop.f32.mrf.mxu0
  %v1549 = vadd.f32 %v1126, %v1548
  %1550 = vmatmul.bf16.gmra.mxu0 %v1089
  %v1551 = vpop.f32.mrf.mxu0
  %v1552 = vadd.f32 %v1126, %v1551
  %v1553 = vpop.f32.mrf.mxu0
  %v1554 = vadd.f32 %v1126, %v1553
  %1555 = vdwg.mxu0
  %1556 = vmatpush.bf16.msra.mxu0 %v1256
  %1557 = vmatpush.bf16.msra.mxu0 %v1254
  %1558 = vmatpush.bf16.msra.mxu0 %v1252
  %1559 = vmatpush.bf16.msra.mxu0 %v1250
  %1560 = vmatpush.bf16.msra.mxu0 %v1248
  %1561 = vmatpush.bf16.msra.mxu0 %v1246
  %1562 = vmatpush.bf16.msra.mxu0 %v1244
  %1563 = vmatpush.bf16.msra.mxu0 %v1242
  %1564 = vmatmul.bf16.gmra.mxu0 %v1060
  %v1565 = vpop.f32.mrf.mxu0
  %v1566 = vadd.f32 %v1477, %v1565
  %v1567 = vpop.f32.mrf.mxu0
  %v1568 = vadd.f32 %v1479, %v1567
  %1569 = vmatmul.bf16.gmra.mxu0 %v1062
  %v1570 = vpop.f32.mrf.mxu0
  %v1571 = vadd.f32 %v1482, %v1570
  %v1572 = vpop.f32.mrf.mxu0
  %v1573 = vadd.f32 %v1484, %v1572
  %1574 = vmatmul.bf16.gmra.mxu0 %v1064
  %v1575 = vpop.f32.mrf.mxu0
  %v1576 = vadd.f32 %v1487, %v1575
  %v1577 = vpop.f32.mrf.mxu0
  %v1578 = vadd.f32 %v1489, %v1577
  %1579 = vmatmul.bf16.gmra.mxu0 %v1066
  %v1580 = vpop.f32.mrf.mxu0
  %v1581 = vadd.f32 %v1492, %v1580
  %v1582 = vpop.f32.mrf.mxu0
  %v1583 = vadd.f32 %v1494, %v1582
  %1584 = vmatmul.bf16.gmra.mxu0 %v1068
  %v1585 = vpop.f32.mrf.mxu0
  %v1586 = vadd.f32 %v1497, %v1585
  %v1587 = vpop.f32.mrf.mxu0
  %v1588 = vadd.f32 %v1499, %v1587
  %1589 = vmatmul.bf16.gmra.mxu0 %v1070
  %v1590 = vpop.f32.mrf.mxu0
  %v1591 = vadd.f32 %v1502, %v1590
  %v1592 = vpop.f32.mrf.mxu0
  %v1593 = vadd.f32 %v1504, %v1592
  %1594 = vmatmul.bf16.gmra.mxu0 %v1072
  %v1595 = vpop.f32.mrf.mxu0
  %v1596 = vadd.f32 %v1507, %v1595
  %v1597 = vpop.f32.mrf.mxu0
  %v1598 = vadd.f32 %v1509, %v1597
  %1599 = vmatmul.bf16.gmra.mxu0 %v1074
  %v1600 = vpop.f32.mrf.mxu0
  %v1601 = vadd.f32 %v1512, %v1600
  %v1602 = vpop.f32.mrf.mxu0
  %v1603 = vadd.f32 %v1514, %v1602
  %1604 = vmatmul.bf16.gmra.mxu0 %v1076
  %v1605 = vpop.f32.mrf.mxu0
  %v1606 = vadd.f32 %v1517, %v1605
  %v1607 = vpop.f32.mrf.mxu0
  %v1608 = vadd.f32 %v1519, %v1607
  %1609 = vmatmul.bf16.gmra.mxu0 %v1078
  %v1610 = vpop.f32.mrf.mxu0
  %v1611 = vadd.f32 %v1522, %v1610
  %v1612 = vpop.f32.mrf.mxu0
  %v1613 = vadd.f32 %v1524, %v1612
  %1614 = vmatmul.bf16.gmra.mxu0 %v1080
  %v1615 = vpop.f32.mrf.mxu0
  %v1616 = vadd.f32 %v1527, %v1615
  %v1617 = vpop.f32.mrf.mxu0
  %v1618 = vadd.f32 %v1529, %v1617
  %1619 = vmatmul.bf16.gmra.mxu0 %v1082
  %v1620 = vpop.f32.mrf.mxu0
  %v1621 = vadd.f32 %v1532, %v1620
  %v1622 = vpop.f32.mrf.mxu0
  %v1623 = vadd.f32 %v1534, %v1622
  %1624 = vmatmul.bf16.gmra.mxu0 %v1084
  %v1625 = vpop.f32.mrf.mxu0
  %v1626 = vadd.f32 %v1537, %v1625
  %v1627 = vpop.f32.mrf.mxu0
  %v1628 = vadd.f32 %v1539, %v1627
  %1629 = vmatmul.bf16.gmra.mxu0 %v1086
  %v1630 = vpop.f32.mrf.mxu0
  %v1631 = vadd.f32 %v1542, %v1630
  %v1632 = vpop.f32.mrf.mxu0
  %v1633 = vadd.f32 %v1544, %v1632
  %1634 = vmatmul.bf16.gmra.mxu0 %v1088
  %v1635 = vpop.f32.mrf.mxu0
  %v1636 = vadd.f32 %v1547, %v1635
  %v1637 = vpop.f32.mrf.mxu0
  %v1638 = vadd.f32 %v1549, %v1637
  %1639 = vmatmul.bf16.gmra.mxu0 %v1090
  %v1640 = vpop.f32.mrf.mxu0
  %v1641 = vadd.f32 %v1552, %v1640
  %v1642 = vpop.f32.mrf.mxu0
  %v1643 = vadd.f32 %v1554, %v1642
  %1644 = vdwg.mxu0
  %v1645 = vmax.f32 %v1388, 0.0
  %v1646 = vmax.f32 %v1566, 0.0
  %v1647 = vmax.f32 %v1390, 0.0
  %v1648 = vmax.f32 %v1568, 0.0
  %v1649 = vmax.f32 %v1393, 0.0
  %v1650 = vmax.f32 %v1571, 0.0
  %v1651 = vmax.f32 %v1395, 0.0
  %v1652 = vmax.f32 %v1573, 0.0
  %v1653 = vmax.f32 %v1398, 0.0
  %v1654 = vmax.f32 %v1576, 0.0
  %v1655 = vmax.f32 %v1400, 0.0
  %v1656 = vmax.f32 %v1578, 0.0
  %v1657 = vmax.f32 %v1403, 0.0
  %v1658 = vmax.f32 %v1581, 0.0
  %v1659 = vmax.f32 %v1405, 0.0
  %v1660 = vmax.f32 %v1583, 0.0
  %v1661 = vmax.f32 %v1408, 0.0
  %v1662 = vmax.f32 %v1586, 0.0
  %v1663 = vmax.f32 %v1410, 0.0
  %v1664 = vmax.f32 %v1588, 0.0
  %v1665 = vmax.f32 %v1413, 0.0
  %v1666 = vmax.f32 %v1591, 0.0
  %v1667 = vmax.f32 %v1415, 0.0
  %v1668 = vmax.f32 %v1593, 0.0
  %v1669 = vmax.f32 %v1418, 0.0
  %v1670 = vmax.f32 %v1596, 0.0
  %v1671 = vmax.f32 %v1420, 0.0
  %v1672 = vmax.f32 %v1598, 0.0
  %v1673 = vmax.f32 %v1423, 0.0
  %v1674 = vmax.f32 %v1601, 0.0
  %v1675 = vmax.f32 %v1425, 0.0
  %v1676 = vmax.f32 %v1603, 0.0
  %v1677 = vmax.f32 %v1428, 0.0
  %v1678 = vmax.f32 %v1606, 0.0
  %v1679 = vmax.f32 %v1430, 0.0
  %v1680 = vmax.f32 %v1608, 0.0
  %v1681 = vmax.f32 %v1433, 0.0
  %v1682 = vmax.f32 %v1611, 0.0
  %v1683 = vmax.f32 %v1435, 0.0
  %v1684 = vmax.f32 %v1613, 0.0
  %v1685 = vmax.f32 %v1438, 0.0
  %v1686 = vmax.f32 %v1616, 0.0
  %v1687 = vmax.f32 %v1440, 0.0
  %v1688 = vmax.f32 %v1618, 0.0
  %v1689 = vmax.f32 %v1443, 0.0
  %v1690 = vmax.f32 %v1621, 0.0
  %v1691 = vmax.f32 %v1445, 0.0
  %v1692 = vmax.f32 %v1623, 0.0
  %v1693 = vmax.f32 %v1448, 0.0
  %v1694 = vmax.f32 %v1626, 0.0
  %v1695 = vmax.f32 %v1450, 0.0
  %v1696 = vmax.f32 %v1628, 0.0
  %v1697 = vmax.f32 %v1453, 0.0
  %v1698 = vmax.f32 %v1631, 0.0
  %v1699 = vmax.f32 %v1455, 0.0
  %v1700 = vmax.f32 %v1633, 0.0
  %v1701 = vmax.f32 %v1458, 0.0
  %v1702 = vmax.f32 %v1636, 0.0
  %v1703 = vmax.f32 %v1460, 0.0
  %v1704 = vmax.f32 %v1638, 0.0
  %v1705 = vmax.f32 %v1463, 0.0
  %v1706 = vmax.f32 %v1641, 0.0
  %v1707 = vmax.f32 %v1465, 0.0
  %v1708 = vmax.f32 %v1643, 0.0
  %v1709 = vpack.c.bf16 %v1647, %v1645
  %v1710 = vpack.c.bf16 %v1648, %v1646
  %v1711 = vpack.c.bf16 %v1651, %v1649
  %v1712 = vpack.c.bf16 %v1652, %v1650
  %v1713 = vpack.c.bf16 %v1655, %v1653
  %v1714 = vpack.c.bf16 %v1656, %v1654
  %v1715 = vpack.c.bf16 %v1659, %v1657
  %v1716 = vpack.c.bf16 %v1660, %v1658
  %v1717 = vpack.c.bf16 %v1663, %v1661
  %v1718 = vpack.c.bf16 %v1664, %v1662
  %v1719 = vpack.c.bf16 %v1667, %v1665
  %v1720 = vpack.c.bf16 %v1668, %v1666
  %v1721 = vpack.c.bf16 %v1671, %v1669
  %v1722 = vpack.c.bf16 %v1672, %v1670
  %v1723 = vpack.c.bf16 %v1675, %v1673
  %v1724 = vpack.c.bf16 %v1676, %v1674
  %v1725 = vpack.c.bf16 %v1679, %v1677
  %v1726 = vpack.c.bf16 %v1680, %v1678
  %v1727 = vpack.c.bf16 %v1683, %v1681
  %v1728 = vpack.c.bf16 %v1684, %v1682
  %v1729 = vpack.c.bf16 %v1687, %v1685
  %v1730 = vpack.c.bf16 %v1688, %v1686
  %v1731 = vpack.c.bf16 %v1691, %v1689
  %v1732 = vpack.c.bf16 %v1692, %v1690
  %v1733 = vpack.c.bf16 %v1695, %v1693
  %v1734 = vpack.c.bf16 %v1696, %v1694
  %v1735 = vpack.c.bf16 %v1699, %v1697
  %v1736 = vpack.c.bf16 %v1700, %v1698
  %v1737 = vpack.c.bf16 %v1703, %v1701
  %v1738 = vpack.c.bf16 %v1704, %v1702
  %v1739 = vpack.c.bf16 %v1707, %v1705
  %v1740 = vpack.c.bf16 %v1708, %v1706
  %v1741 = vld [vmem:[%s7] sm:$0xff]
  %v1742 = vld [vmem:[%s7 + $0x8] sm:$0xff]
  %v1743 = vld [vmem:[%s7 + $0x10] sm:$0xff]
  %v1744 = vld [vmem:[%s7 + $0x18] sm:$0xff]
  %v1745 = vld [vmem:[%s7 + $0x20] sm:$0xff]
  %v1746 = vld [vmem:[%s7 + $0x28] sm:$0xff]
  %v1747 = vld [vmem:[%s7 + $0x30] sm:$0xff]
  %v1748 = vld [vmem:[%s7 + $0x38] sm:$0xff]
  %v1749 = vld [vmem:[%s7 + $0x40] sm:$0xff]
  %v1750 = vld [vmem:[%s7 + $0x48] sm:$0xff]
  %v1751 = vld [vmem:[%s7 + $0x50] sm:$0xff]
  %v1752 = vld [vmem:[%s7 + $0x58] sm:$0xff]
  %v1753 = vld [vmem:[%s7 + $0x60] sm:$0xff]
  %v1754 = vld [vmem:[%s7 + $0x68] sm:$0xff]
  %v1755 = vld [vmem:[%s7 + $0x70] sm:$0xff]
  %v1756 = vld [vmem:[%s7 + $0x78] sm:$0xff]
  %v1757 = vld [vmem:[%s7 + $0x80] sm:$0xff]
  %v1758 = vld [vmem:[%s7 + $0x88] sm:$0xff]
  %v1759 = vld [vmem:[%s7 + $0x90] sm:$0xff]
  %v1760 = vld [vmem:[%s7 + $0x98] sm:$0xff]
  %v1761 = vld [vmem:[%s7 + $0xa0] sm:$0xff]
  %v1762 = vld [vmem:[%s7 + $0xa8] sm:$0xff]
  %v1763 = vld [vmem:[%s7 + $0xb0] sm:$0xff]
  %v1764 = vld [vmem:[%s7 + $0xb8] sm:$0xff]
  %v1765 = vld [vmem:[%s7 + $0xc0] sm:$0xff]
  %v1766 = vld [vmem:[%s7 + $0xc8] sm:$0xff]
  %v1767 = vld [vmem:[%s7 + $0xd0] sm:$0xff]
  %v1768 = vld [vmem:[%s7 + $0xd8] sm:$0xff]
  %v1769 = vld [vmem:[%s7 + $0xe0] sm:$0xff]
  %v1770 = vld [vmem:[%s7 + $0xe8] sm:$0xff]
  %v1771 = vld [vmem:[%s7 + $0xf0] sm:$0xff]
  %v1772 = vld [vmem:[%s7 + $0xf8] sm:$0xff]
  %v1773 = vld [vmem:[%s8] sm:$0x3]
  %v1775 = vperm.slane %v1773, 0
  %v1776 = vperm.slane %v1773, 1
  %v1811 = vunpack.c.l.b16 %v1741
  %v1812 = vunpack.c.h.b16 %v1741
  %v1813 = vunpack.c.l.b16 %v1742
  %v1814 = vunpack.c.h.b16 %v1742
  %v1815 = vunpack.c.l.b16 %v1743
  %v1816 = vunpack.c.h.b16 %v1743
  %v1817 = vunpack.c.l.b16 %v1744
  %v1818 = vunpack.c.h.b16 %v1744
  %v1819 = vunpack.c.l.b16 %v1745
  %v1820 = vunpack.c.h.b16 %v1745
  %v1821 = vunpack.c.l.b16 %v1746
  %v1822 = vunpack.c.h.b16 %v1746
  %v1823 = vunpack.c.l.b16 %v1747
  %v1824 = vunpack.c.h.b16 %v1747
  %v1825 = vunpack.c.l.b16 %v1748
  %v1826 = vunpack.c.h.b16 %v1748
  %v1827 = vunpack.c.l.b16 %v1749
  %v1828 = vunpack.c.h.b16 %v1749
  %v1829 = vunpack.c.l.b16 %v1750
  %v1830 = vunpack.c.h.b16 %v1750
  %v1831 = vunpack.c.l.b16 %v1751
  %v1832 = vunpack.c.h.b16 %v1751
  %v1833 = vunpack.c.l.b16 %v1752
  %v1834 = vunpack.c.h.b16 %v1752
  %v1835 = vunpack.c.l.b16 %v1753
  %v1836 = vunpack.c.h.b16 %v1753
  %v1837 = vunpack.c.l.b16 %v1754
  %v1838 = vunpack.c.h.b16 %v1754
  %v1839 = vunpack.c.l.b16 %v1755
  %v1840 = vunpack.c.h.b16 %v1755
  %v1841 = vunpack.c.l.b16 %v1756
  %v1842 = vunpack.c.h.b16 %v1756
  %v1843 = vunpack.c.l.b16 %v1757
  %v1844 = vunpack.c.h.b16 %v1757
  %v1845 = vunpack.c.l.b16 %v1758
  %v1846 = vunpack.c.h.b16 %v1758
  %v1847 = vunpack.c.l.b16 %v1759
  %v1848 = vunpack.c.h.b16 %v1759
  %v1849 = vunpack.c.l.b16 %v1760
  %v1850 = vunpack.c.h.b16 %v1760
  %v1851 = vunpack.c.l.b16 %v1761
  %v1852 = vunpack.c.h.b16 %v1761
  %v1853 = vunpack.c.l.b16 %v1762
  %v1854 = vunpack.c.h.b16 %v1762
  %v1855 = vunpack.c.l.b16 %v1763
  %v1856 = vunpack.c.h.b16 %v1763
  %v1857 = vunpack.c.l.b16 %v1764
  %v1858 = vunpack.c.h.b16 %v1764
  %v1859 = vunpack.c.l.b16 %v1765
  %v1860 = vunpack.c.h.b16 %v1765
  %v1861 = vunpack.c.l.b16 %v1766
  %v1862 = vunpack.c.h.b16 %v1766
  %v1863 = vunpack.c.l.b16 %v1767
  %v1864 = vunpack.c.h.b16 %v1767
  %v1865 = vunpack.c.l.b16 %v1768
  %v1866 = vunpack.c.h.b16 %v1768
  %v1867 = vunpack.c.l.b16 %v1769
  %v1868 = vunpack.c.h.b16 %v1769
  %v1869 = vunpack.c.l.b16 %v1770
  %v1870 = vunpack.c.h.b16 %v1770
  %v1871 = vunpack.c.l.b16 %v1771
  %v1872 = vunpack.c.h.b16 %v1771
  %v1873 = vunpack.c.l.b16 %v1772
  %v1874 = vunpack.c.h.b16 %v1772
  %v1875 = vpack.c.b16 %v1813, %v1811
  %v1876 = vpack.c.b16 %v1814, %v1812
  %v1877 = vpack.c.b16 %v1817, %v1815
  %v1878 = vpack.c.b16 %v1818, %v1816
  %v1879 = vpack.c.b16 %v1821, %v1819
  %v1880 = vpack.c.b16 %v1822, %v1820
  %v1881 = vpack.c.b16 %v1825, %v1823
  %v1882 = vpack.c.b16 %v1826, %v1824
  %v1883 = vpack.c.b16 %v1829, %v1827
  %v1884 = vpack.c.b16 %v1830, %v1828
  %v1885 = vpack.c.b16 %v1833, %v1831
  %v1886 = vpack.c.b16 %v1834, %v1832
  %v1887 = vpack.c.b16 %v1837, %v1835
  %v1888 = vpack.c.b16 %v1838, %v1836
  %v1889 = vpack.c.b16 %v1841, %v1839
  %v1890 = vpack.c.b16 %v1842, %v1840
  %v1891 = vpack.c.b16 %v1845, %v1843
  %v1892 = vpack.c.b16 %v1846, %v1844
  %v1893 = vpack.c.b16 %v1849, %v1847
  %v1894 = vpack.c.b16 %v1850, %v1848
  %v1895 = vpack.c.b16 %v1853, %v1851
  %v1896 = vpack.c.b16 %v1854, %v1852
  %v1897 = vpack.c.b16 %v1857, %v1855
  %v1898 = vpack.c.b16 %v1858, %v1856
  %v1899 = vpack.c.b16 %v1861, %v1859
  %v1900 = vpack.c.b16 %v1862, %v1860
  %v1901 = vpack.c.b16 %v1865, %v1863
  %v1902 = vpack.c.b16 %v1866, %v1864
  %v1903 = vpack.c.b16 %v1869, %v1867
  %v1904 = vpack.c.b16 %v1870, %v1868
  %v1905 = vpack.c.b16 %v1873, %v1871
  %v1906 = vpack.c.b16 %v1874, %v1872
  %1939 = vmatpush.bf16.msra.mxu0 %v1889
  %1940 = vmatpush.bf16.msra.mxu0 %v1887
  %1941 = vmatpush.bf16.msra.mxu0 %v1885
  %1942 = vmatpush.bf16.msra.mxu0 %v1883
  %1943 = vmatpush.bf16.msra.mxu0 %v1881
  %1944 = vmatpush.bf16.msra.mxu0 %v1879
  %1945 = vmatpush.bf16.msra.mxu0 %v1877
  %1946 = vmatpush.bf16.msra.mxu0 %v1875
  %1947 = vmatmul.bf16.gmra.mxu0 %v1709
  %v1948 = vpop.f32.mrf.mxu0
  %v1949 = vadd.f32 %v1775, %v1948
  %v1950 = vpop.f32.mrf.mxu0
  %v1951 = vadd.f32 %v1775, %v1950
  %1952 = vmatmul.bf16.gmra.mxu0 %v1711
  %v1953 = vpop.f32.mrf.mxu0
  %v1954 = vadd.f32 %v1775, %v1953
  %v1955 = vpop.f32.mrf.mxu0
  %v1956 = vadd.f32 %v1775, %v1955
  %1957 = vmatmul.bf16.gmra.mxu0 %v1713
  %v1958 = vpop.f32.mrf.mxu0
  %v1959 = vadd.f32 %v1775, %v1958
  %v1960 = vpop.f32.mrf.mxu0
  %v1961 = vadd.f32 %v1775, %v1960
  %1962 = vmatmul.bf16.gmra.mxu0 %v1715
  %v1963 = vpop.f32.mrf.mxu0
  %v1964 = vadd.f32 %v1775, %v1963
  %v1965 = vpop.f32.mrf.mxu0
  %v1966 = vadd.f32 %v1775, %v1965
  %1967 = vmatmul.bf16.gmra.mxu0 %v1717
  %v1968 = vpop.f32.mrf.mxu0
  %v1969 = vadd.f32 %v1775, %v1968
  %v1970 = vpop.f32.mrf.mxu0
  %v1971 = vadd.f32 %v1775, %v1970
  %1972 = vmatmul.bf16.gmra.mxu0 %v1719
  %v1973 = vpop.f32.mrf.mxu0
  %v1974 = vadd.f32 %v1775, %v1973
  %v1975 = vpop.f32.mrf.mxu0
  %v1976 = vadd.f32 %v1775, %v1975
  %1977 = vmatmul.bf16.gmra.mxu0 %v1721
  %v1978 = vpop.f32.mrf.mxu0
  %v1979 = vadd.f32 %v1775, %v1978
  %v1980 = vpop.f32.mrf.mxu0
  %v1981 = vadd.f32 %v1775, %v1980
  %1982 = vmatmul.bf16.gmra.mxu0 %v1723
  %v1983 = vpop.f32.mrf.mxu0
  %v1984 = vadd.f32 %v1775, %v1983
  %v1985 = vpop.f32.mrf.mxu0
  %v1986 = vadd.f32 %v1775, %v1985
  %1987 = vmatmul.bf16.gmra.mxu0 %v1725
  %v1988 = vpop.f32.mrf.mxu0
  %v1989 = vadd.f32 %v1775, %v1988
  %v1990 = vpop.f32.mrf.mxu0
  %v1991 = vadd.f32 %v1775, %v1990
  %1992 = vmatmul.bf16.gmra.mxu0 %v1727
  %v1993 = vpop.f32.mrf.mxu0
  %v1994 = vadd.f32 %v1775, %v1993
  %v1995 = vpop.f32.mrf.mxu0
  %v1996 = vadd.f32 %v1775, %v1995
  %1997 = vmatmul.bf16.gmra.mxu0 %v1729
  %v1998 = vpop.f32.mrf.mxu0
  %v1999 = vadd.f32 %v1775, %v1998
  %v2000 = vpop.f32.mrf.mxu0
  %v2001 = vadd.f32 %v1775, %v2000
  %2002 = vmatmul.bf16.gmra.mxu0 %v1731
  %v2003 = vpop.f32.mrf.mxu0
  %v2004 = vadd.f32 %v1775, %v2003
  %v2005 = vpop.f32.mrf.mxu0
  %v2006 = vadd.f32 %v1775, %v2005
  %2007 = vmatmul.bf16.gmra.mxu0 %v1733
  %v2008 = vpop.f32.mrf.mxu0
  %v2009 = vadd.f32 %v1775, %v2008
  %v2010 = vpop.f32.mrf.mxu0
  %v2011 = vadd.f32 %v1775, %v2010
  %2012 = vmatmul.bf16.gmra.mxu0 %v1735
  %v2013 = vpop.f32.mrf.mxu0
  %v2014 = vadd.f32 %v1775, %v2013
  %v2015 = vpop.f32.mrf.mxu0
  %v2016 = vadd.f32 %v1775, %v2015
  %2017 = vmatmul.bf16.gmra.mxu0 %v1737
  %v2018 = vpop.f32.mrf.mxu0
  %v2019 = vadd.f32 %v1775, %v2018
  %v2020 = vpop.f32.mrf.mxu0
  %v2021 = vadd.f32 %v1775, %v2020
  %2022 = vmatmul.bf16.gmra.mxu0 %v1739
  %v2023 = vpop.f32.mrf.mxu0
  %v2024 = vadd.f32 %v1775, %v2023
  %v2025 = vpop.f32.mrf.mxu0
  %v2026 = vadd.f32 %v1775, %v2025
  %2027 = vdwg.mxu0
  %2028 = vmatpush.bf16.msra.mxu0 %v1905
  %2029 = vmatpush.bf16.msra.mxu0 %v1903
  %2030 = vmatpush.bf16.msra.mxu0 %v1901
  %2031 = vmatpush.bf16.msra.mxu0 %v1899
  %2032 = vmatpush.bf16.msra.mxu0 %v1897
  %2033 = vmatpush.bf16.msra.mxu0 %v1895
  %2034 = vmatpush.bf16.msra.mxu0 %v1893
  %2035 = vmatpush.bf16.msra.mxu0 %v1891
  %2036 = vmatmul.bf16.gmra.mxu0 %v1710
  %v2037 = vpop.f32.mrf.mxu0
  %v2038 = vadd.f32 %v1949, %v2037
  %v2039 = vpop.f32.mrf.mxu0
  %v2040 = vadd.f32 %v1951, %v2039
  %2041 = vmatmul.bf16.gmra.mxu0 %v1712
  %v2042 = vpop.f32.mrf.mxu0
  %v2043 = vadd.f32 %v1954, %v2042
  %v2044 = vpop.f32.mrf.mxu0
  %v2045 = vadd.f32 %v1956, %v2044
  %2046 = vmatmul.bf16.gmra.mxu0 %v1714
  %v2047 = vpop.f32.mrf.mxu0
  %v2048 = vadd.f32 %v1959, %v2047
  %v2049 = vpop.f32.mrf.mxu0
  %v2050 = vadd.f32 %v1961, %v2049
  %2051 = vmatmul.bf16.gmra.mxu0 %v1716
  %v2052 = vpop.f32.mrf.mxu0
  %v2053 = vadd.f32 %v1964, %v2052
  %v2054 = vpop.f32.mrf.mxu0
  %v2055 = vadd.f32 %v1966, %v2054
  %2056 = vmatmul.bf16.gmra.mxu0 %v1718
  %v2057 = vpop.f32.mrf.mxu0
  %v2058 = vadd.f32 %v1969, %v2057
  %v2059 = vpop.f32.mrf.mxu0
  %v2060 = vadd.f32 %v1971, %v2059
  %2061 = vmatmul.bf16.gmra.mxu0 %v1720
  %v2062 = vpop.f32.mrf.mxu0
  %v2063 = vadd.f32 %v1974, %v2062
  %v2064 = vpop.f32.mrf.mxu0
  %v2065 = vadd.f32 %v1976, %v2064
  %2066 = vmatmul.bf16.gmra.mxu0 %v1722
  %v2067 = vpop.f32.mrf.mxu0
  %v2068 = vadd.f32 %v1979, %v2067
  %v2069 = vpop.f32.mrf.mxu0
  %v2070 = vadd.f32 %v1981, %v2069
  %2071 = vmatmul.bf16.gmra.mxu0 %v1724
  %v2072 = vpop.f32.mrf.mxu0
  %v2073 = vadd.f32 %v1984, %v2072
  %v2074 = vpop.f32.mrf.mxu0
  %v2075 = vadd.f32 %v1986, %v2074
  %2076 = vmatmul.bf16.gmra.mxu0 %v1726
  %v2077 = vpop.f32.mrf.mxu0
  %v2078 = vadd.f32 %v1989, %v2077
  %v2079 = vpop.f32.mrf.mxu0
  %v2080 = vadd.f32 %v1991, %v2079
  %2081 = vmatmul.bf16.gmra.mxu0 %v1728
  %v2082 = vpop.f32.mrf.mxu0
  %v2083 = vadd.f32 %v1994, %v2082
  %v2084 = vpop.f32.mrf.mxu0
  %v2085 = vadd.f32 %v1996, %v2084
  %2086 = vmatmul.bf16.gmra.mxu0 %v1730
  %v2087 = vpop.f32.mrf.mxu0
  %v2088 = vadd.f32 %v1999, %v2087
  %v2089 = vpop.f32.mrf.mxu0
  %v2090 = vadd.f32 %v2001, %v2089
  %2091 = vmatmul.bf16.gmra.mxu0 %v1732
  %v2092 = vpop.f32.mrf.mxu0
  %v2093 = vadd.f32 %v2004, %v2092
  %v2094 = vpop.f32.mrf.mxu0
  %v2095 = vadd.f32 %v2006, %v2094
  %2096 = vmatmul.bf16.gmra.mxu0 %v1734
  %v2097 = vpop.f32.mrf.mxu0
  %v2098 = vadd.f32 %v2009, %v2097
  %v2099 = vpop.f32.mrf.mxu0
  %v2100 = vadd.f32 %v2011, %v2099
  %2101 = vmatmul.bf16.gmra.mxu0 %v1736
  %v2102 = vpop.f32.mrf.mxu0
  %v2103 = vadd.f32 %v2014, %v2102
  %v2104 = vpop.f32.mrf.mxu0
  %v2105 = vadd.f32 %v2016, %v2104
  %2106 = vmatmul.bf16.gmra.mxu0 %v1738
  %v2107 = vpop.f32.mrf.mxu0
  %v2108 = vadd.f32 %v2019, %v2107
  %v2109 = vpop.f32.mrf.mxu0
  %v2110 = vadd.f32 %v2021, %v2109
  %2111 = vmatmul.bf16.gmra.mxu0 %v1740
  %v2112 = vpop.f32.mrf.mxu0
  %v2113 = vadd.f32 %v2024, %v2112
  %v2114 = vpop.f32.mrf.mxu0
  %v2115 = vadd.f32 %v2026, %v2114
  %2116 = vdwg.mxu0
  %2117 = vmatpush.bf16.msra.mxu0 %v1890
  %2118 = vmatpush.bf16.msra.mxu0 %v1888
  %2119 = vmatpush.bf16.msra.mxu0 %v1886
  %2120 = vmatpush.bf16.msra.mxu0 %v1884
  %2121 = vmatpush.bf16.msra.mxu0 %v1882
  %2122 = vmatpush.bf16.msra.mxu0 %v1880
  %2123 = vmatpush.bf16.msra.mxu0 %v1878
  %2124 = vmatpush.bf16.msra.mxu0 %v1876
  %2125 = vmatmul.bf16.gmra.mxu0 %v1709
  %v2126 = vpop.f32.mrf.mxu0
  %v2127 = vadd.f32 %v1776, %v2126
  %v2128 = vpop.f32.mrf.mxu0
  %v2129 = vadd.f32 %v1776, %v2128
  %2130 = vmatmul.bf16.gmra.mxu0 %v1711
  %v2131 = vpop.f32.mrf.mxu0
  %v2132 = vadd.f32 %v1776, %v2131
  %v2133 = vpop.f32.mrf.mxu0
  %v2134 = vadd.f32 %v1776, %v2133
  %2135 = vmatmul.bf16.gmra.mxu0 %v1713
  %v2136 = vpop.f32.mrf.mxu0
  %v2137 = vadd.f32 %v1776, %v2136
  %v2138 = vpop.f32.mrf.mxu0
  %v2139 = vadd.f32 %v1776, %v2138
  %2140 = vmatmul.bf16.gmra.mxu0 %v1715
  %v2141 = vpop.f32.mrf.mxu0
  %v2142 = vadd.f32 %v1776, %v2141
  %v2143 = vpop.f32.mrf.mxu0
  %v2144 = vadd.f32 %v1776, %v2143
  %2145 = vmatmul.bf16.gmra.mxu0 %v1717
  %v2146 = vpop.f32.mrf.mxu0
  %v2147 = vadd.f32 %v1776, %v2146
  %v2148 = vpop.f32.mrf.mxu0
  %v2149 = vadd.f32 %v1776, %v2148
  %2150 = vmatmul.bf16.gmra.mxu0 %v1719
  %v2151 = vpop.f32.mrf.mxu0
  %v2152 = vadd.f32 %v1776, %v2151
  %v2153 = vpop.f32.mrf.mxu0
  %v2154 = vadd.f32 %v1776, %v2153
  %2155 = vmatmul.bf16.gmra.mxu0 %v1721
  %v2156 = vpop.f32.mrf.mxu0
  %v2157 = vadd.f32 %v1776, %v2156
  %v2158 = vpop.f32.mrf.mxu0
  %v2159 = vadd.f32 %v1776, %v2158
  %2160 = vmatmul.bf16.gmra.mxu0 %v1723
  %v2161 = vpop.f32.mrf.mxu0
  %v2162 = vadd.f32 %v1776, %v2161
  %v2163 = vpop.f32.mrf.mxu0
  %v2164 = vadd.f32 %v1776, %v2163
  %2165 = vmatmul.bf16.gmra.mxu0 %v1725
  %v2166 = vpop.f32.mrf.mxu0
  %v2167 = vadd.f32 %v1776, %v2166
  %v2168 = vpop.f32.mrf.mxu0
  %v2169 = vadd.f32 %v1776, %v2168
  %2170 = vmatmul.bf16.gmra.mxu0 %v1727
  %v2171 = vpop.f32.mrf.mxu0
  %v2172 = vadd.f32 %v1776, %v2171
  %v2173 = vpop.f32.mrf.mxu0
  %v2174 = vadd.f32 %v1776, %v2173
  %2175 = vmatmul.bf16.gmra.mxu0 %v1729
  %v2176 = vpop.f32.mrf.mxu0
  %v2177 = vadd.f32 %v1776, %v2176
  %v2178 = vpop.f32.mrf.mxu0
  %v2179 = vadd.f32 %v1776, %v2178
  %2180 = vmatmul.bf16.gmra.mxu0 %v1731
  %v2181 = vpop.f32.mrf.mxu0
  %v2182 = vadd.f32 %v1776, %v2181
  %v2183 = vpop.f32.mrf.mxu0
  %v2184 = vadd.f32 %v1776, %v2183
  %2185 = vmatmul.bf16.gmra.mxu0 %v1733
  %v2186 = vpop.f32.mrf.mxu0
  %v2187 = vadd.f32 %v1776, %v2186
  %v2188 = vpop.f32.mrf.mxu0
  %v2189 = vadd.f32 %v1776, %v2188
  %2190 = vmatmul.bf16.gmra.mxu0 %v1735
  %v2191 = vpop.f32.mrf.mxu0
  %v2192 = vadd.f32 %v1776, %v2191
  %v2193 = vpop.f32.mrf.mxu0
  %v2194 = vadd.f32 %v1776, %v2193
  %2195 = vmatmul.bf16.gmra.mxu0 %v1737
  %v2196 = vpop.f32.mrf.mxu0
  %v2197 = vadd.f32 %v1776, %v2196
  %v2198 = vpop.f32.mrf.mxu0
  %v2199 = vadd.f32 %v1776, %v2198
  %2200 = vmatmul.bf16.gmra.mxu0 %v1739
  %v2201 = vpop.f32.mrf.mxu0
  %v2202 = vadd.f32 %v1776, %v2201
  %v2203 = vpop.f32.mrf.mxu0
  %v2204 = vadd.f32 %v1776, %v2203
  %2205 = vdwg.mxu0
  %2206 = vmatpush.bf16.msra.mxu0 %v1906
  %2207 = vmatpush.bf16.msra.mxu0 %v1904
  %2208 = vmatpush.bf16.msra.mxu0 %v1902
  %2209 = vmatpush.bf16.msra.mxu0 %v1900
  %2210 = vmatpush.bf16.msra.mxu0 %v1898
  %2211 = vmatpush.bf16.msra.mxu0 %v1896
  %2212 = vmatpush.bf16.msra.mxu0 %v1894
  %2213 = vmatpush.bf16.msra.mxu0 %v1892
  %2214 = vmatmul.bf16.gmra.mxu0 %v1710
  %v2215 = vpop.f32.mrf.mxu0
  %v2216 = vadd.f32 %v2127, %v2215
  %v2217 = vpop.f32.mrf.mxu0
  %v2218 = vadd.f32 %v2129, %v2217
  %2219 = vmatmul.bf16.gmra.mxu0 %v1712
  %v2220 = vpop.f32.mrf.mxu0
  %v2221 = vadd.f32 %v2132, %v2220
  %v2222 = vpop.f32.mrf.mxu0
  %v2223 = vadd.f32 %v2134, %v2222
  %2224 = vmatmul.bf16.gmra.mxu0 %v1714
  %v2225 = vpop.f32.mrf.mxu0
  %v2226 = vadd.f32 %v2137, %v2225
  %v2227 = vpop.f32.mrf.mxu0
  %v2228 = vadd.f32 %v2139, %v2227
  %2229 = vmatmul.bf16.gmra.mxu0 %v1716
  %v2230 = vpop.f32.mrf.mxu0
  %v2231 = vadd.f32 %v2142, %v2230
  %v2232 = vpop.f32.mrf.mxu0
  %v2233 = vadd.f32 %v2144, %v2232
  %2234 = vmatmul.bf16.gmra.mxu0 %v1718
  %v2235 = vpop.f32.mrf.mxu0
  %v2236 = vadd.f32 %v2147, %v2235
  %v2237 = vpop.f32.mrf.mxu0
  %v2238 = vadd.f32 %v2149, %v2237
  %2239 = vmatmul.bf16.gmra.mxu0 %v1720
  %v2240 = vpop.f32.mrf.mxu0
  %v2241 = vadd.f32 %v2152, %v2240
  %v2242 = vpop.f32.mrf.mxu0
  %v2243 = vadd.f32 %v2154, %v2242
  %2244 = vmatmul.bf16.gmra.mxu0 %v1722
  %v2245 = vpop.f32.mrf.mxu0
  %v2246 = vadd.f32 %v2157, %v2245
  %v2247 = vpop.f32.mrf.mxu0
  %v2248 = vadd.f32 %v2159, %v2247
  %2249 = vmatmul.bf16.gmra.mxu0 %v1724
  %v2250 = vpop.f32.mrf.mxu0
  %v2251 = vadd.f32 %v2162, %v2250
  %v2252 = vpop.f32.mrf.mxu0
  %v2253 = vadd.f32 %v2164, %v2252
  %2254 = vmatmul.bf16.gmra.mxu0 %v1726
  %v2255 = vpop.f32.mrf.mxu0
  %v2256 = vadd.f32 %v2167, %v2255
  %v2257 = vpop.f32.mrf.mxu0
  %v2258 = vadd.f32 %v2169, %v2257
  %2259 = vmatmul.bf16.gmra.mxu0 %v1728
  %v2260 = vpop.f32.mrf.mxu0
  %v2261 = vadd.f32 %v2172, %v2260
  %v2262 = vpop.f32.mrf.mxu0
  %v2263 = vadd.f32 %v2174, %v2262
  %2264 = vmatmul.bf16.gmra.mxu0 %v1730
  %v2265 = vpop.f32.mrf.mxu0
  %v2266 = vadd.f32 %v2177, %v2265
  %v2267 = vpop.f32.mrf.mxu0
  %v2268 = vadd.f32 %v2179, %v2267
  %2269 = vmatmul.bf16.gmra.mxu0 %v1732
  %v2270 = vpop.f32.mrf.mxu0
  %v2271 = vadd.f32 %v2182, %v2270
  %v2272 = vpop.f32.mrf.mxu0
  %v2273 = vadd.f32 %v2184, %v2272
  %2274 = vmatmul.bf16.gmra.mxu0 %v1734
  %v2275 = vpop.f32.mrf.mxu0
  %v2276 = vadd.f32 %v2187, %v2275
  %v2277 = vpop.f32.mrf.mxu0
  %v2278 = vadd.f32 %v2189, %v2277
  %2279 = vmatmul.bf16.gmra.mxu0 %v1736
  %v2280 = vpop.f32.mrf.mxu0
  %v2281 = vadd.f32 %v2192, %v2280
  %v2282 = vpop.f32.mrf.mxu0
  %v2283 = vadd.f32 %v2194, %v2282
  %2284 = vmatmul.bf16.gmra.mxu0 %v1738
  %v2285 = vpop.f32.mrf.mxu0
  %v2286 = vadd.f32 %v2197, %v2285
  %v2287 = vpop.f32.mrf.mxu0
  %v2288 = vadd.f32 %v2199, %v2287
  %2289 = vmatmul.bf16.gmra.mxu0 %v1740
  %v2290 = vpop.f32.mrf.mxu0
  %v2291 = vadd.f32 %v2202, %v2290
  %v2292 = vpop.f32.mrf.mxu0
  %v2293 = vadd.f32 %v2204, %v2292
  %2294 = vdwg.mxu0
  %v2295 = vadd.f32 %v241, %v2038
  %v2296 = vadd.f32 %v330, %v2216
  %v2297 = vadd.f32 %v243, %v2040
  %v2298 = vadd.f32 %v332, %v2218
  %v2299 = vadd.f32 %v246, %v2043
  %v2300 = vadd.f32 %v335, %v2221
  %v2301 = vadd.f32 %v248, %v2045
  %v2302 = vadd.f32 %v337, %v2223
  %v2303 = vadd.f32 %v251, %v2048
  %v2304 = vadd.f32 %v340, %v2226
  %v2305 = vadd.f32 %v253, %v2050
  %v2306 = vadd.f32 %v342, %v2228
  %v2307 = vadd.f32 %v256, %v2053
  %v2308 = vadd.f32 %v345, %v2231
  %v2309 = vadd.f32 %v258, %v2055
  %v2310 = vadd.f32 %v347, %v2233
  %v2311 = vadd.f32 %v261, %v2058
  %v2312 = vadd.f32 %v350, %v2236
  %v2313 = vadd.f32 %v263, %v2060
  %v2314 = vadd.f32 %v352, %v2238
  %v2315 = vadd.f32 %v266, %v2063
  %v2316 = vadd.f32 %v355, %v2241
  %v2317 = vadd.f32 %v268, %v2065
  %v2318 = vadd.f32 %v357, %v2243
  %v2319 = vadd.f32 %v271, %v2068
  %v2320 = vadd.f32 %v360, %v2246
  %v2321 = vadd.f32 %v273, %v2070
  %v2322 = vadd.f32 %v362, %v2248
  %v2323 = vadd.f32 %v276, %v2073
  %v2324 = vadd.f32 %v365, %v2251
  %v2325 = vadd.f32 %v278, %v2075
  %v2326 = vadd.f32 %v367, %v2253
  %v2327 = vadd.f32 %v281, %v2078
  %v2328 = vadd.f32 %v370, %v2256
  %v2329 = vadd.f32 %v283, %v2080
  %v2330 = vadd.f32 %v372, %v2258
  %v2331 = vadd.f32 %v286, %v2083
  %v2332 = vadd.f32 %v375, %v2261
  %v2333 = vadd.f32 %v288, %v2085
  %v2334 = vadd.f32 %v377, %v2263
  %v2335 = vadd.f32 %v291, %v2088
  %v2336 = vadd.f32 %v380, %v2266
  %v2337 = vadd.f32 %v293, %v2090
  %v2338 = vadd.f32 %v382, %v2268
  %v2339 = vadd.f32 %v296, %v2093
  %v2340 = vadd.f32 %v385, %v2271
  %v2341 = vadd.f32 %v298, %v2095
  %v2342 = vadd.f32 %v387, %v2273
  %v2343 = vadd.f32 %v301, %v2098
  %v2344 = vadd.f32 %v390, %v2276
  %v2345 = vadd.f32 %v303, %v2100
  %v2346 = vadd.f32 %v392, %v2278
  %v2347 = vadd.f32 %v306, %v2103
  %v2348 = vadd.f32 %v395, %v2281
  %v2349 = vadd.f32 %v308, %v2105
  %v2350 = vadd.f32 %v397, %v2283
  %v2351 = vadd.f32 %v311, %v2108
  %v2352 = vadd.f32 %v400, %v2286
  %v2353 = vadd.f32 %v313, %v2110
  %v2354 = vadd.f32 %v402, %v2288
  %v2355 = vadd.f32 %v316, %v2113
  %v2356 = vadd.f32 %v405, %v2291
  %v2357 = vadd.f32 %v318, %v2115
  %v2358 = vadd.f32 %v407, %v2293
  %v2359 = vpack.c.bf16 %v2297, %v2295
  %v2360 = vpack.c.bf16 %v2298, %v2296
  %v2361 = vpack.c.bf16 %v2301, %v2299
  %v2362 = vpack.c.bf16 %v2302, %v2300
  %v2363 = vpack.c.bf16 %v2305, %v2303
  %v2364 = vpack.c.bf16 %v2306, %v2304
  %v2365 = vpack.c.bf16 %v2309, %v2307
  %v2366 = vpack.c.bf16 %v2310, %v2308
  %v2367 = vpack.c.bf16 %v2313, %v2311
  %v2368 = vpack.c.bf16 %v2314, %v2312
  %v2369 = vpack.c.bf16 %v2317, %v2315
  %v2370 = vpack.c.bf16 %v2318, %v2316
  %v2371 = vpack.c.bf16 %v2321, %v2319
  %v2372 = vpack.c.bf16 %v2322, %v2320
  %v2373 = vpack.c.bf16 %v2325, %v2323
  %v2374 = vpack.c.bf16 %v2326, %v2324
  %v2375 = vpack.c.bf16 %v2329, %v2327
  %v2376 = vpack.c.bf16 %v2330, %v2328
  %v2377 = vpack.c.bf16 %v2333, %v2331
  %v2378 = vpack.c.bf16 %v2334, %v2332
  %v2379 = vpack.c.bf16 %v2337, %v2335
  %v2380 = vpack.c.bf16 %v2338, %v2336
  %v2381 = vpack.c.bf16 %v2341, %v2339
  %v2382 = vpack.c.bf16 %v2342, %v2340
  %v2383 = vpack.c.bf16 %v2345, %v2343
  %v2384 = vpack.c.bf16 %v2346, %v2344
  %v2385 = vpack.c.bf16 %v2349, %v2347
  %v2386 = vpack.c.bf16 %v2350, %v2348
  %v2387 = vpack.c.bf16 %v2353, %v2351
  %v2388 = vpack.c.bf16 %v2354, %v2352
  %v2389 = vpack.c.bf16 %v2357, %v2355
  %v2390 = vpack.c.bf16 %v2358, %v2356
  %s2391 = scalar_lea.vmem %s3, 256
  %v2392 = vld [vmem:[%s2391] sm:$0xff]
  %v2393 = vld [vmem:[%s2391 + $0x8] sm:$0xff]
  %v2394 = vld [vmem:[%s2391 + $0x10] sm:$0xff]
  %v2395 = vld [vmem:[%s2391 + $0x18] sm:$0xff]
  %v2396 = vld [vmem:[%s2391 + $0x20] sm:$0xff]
  %v2397 = vld [vmem:[%s2391 + $0x28] sm:$0xff]
  %v2398 = vld [vmem:[%s2391 + $0x30] sm:$0xff]
  %v2399 = vld [vmem:[%s2391 + $0x38] sm:$0xff]
  %v2400 = vld [vmem:[%s2391 + $0x40] sm:$0xff]
  %v2401 = vld [vmem:[%s2391 + $0x48] sm:$0xff]
  %v2402 = vld [vmem:[%s2391 + $0x50] sm:$0xff]
  %v2403 = vld [vmem:[%s2391 + $0x58] sm:$0xff]
  %v2404 = vld [vmem:[%s2391 + $0x60] sm:$0xff]
  %v2405 = vld [vmem:[%s2391 + $0x68] sm:$0xff]
  %v2406 = vld [vmem:[%s2391 + $0x70] sm:$0xff]
  %v2407 = vld [vmem:[%s2391 + $0x78] sm:$0xff]
  %v2408 = vld [vmem:[%s2391 + $0x80] sm:$0xff]
  %v2409 = vld [vmem:[%s2391 + $0x88] sm:$0xff]
  %v2410 = vld [vmem:[%s2391 + $0x90] sm:$0xff]
  %v2411 = vld [vmem:[%s2391 + $0x98] sm:$0xff]
  %v2412 = vld [vmem:[%s2391 + $0xa0] sm:$0xff]
  %v2413 = vld [vmem:[%s2391 + $0xa8] sm:$0xff]
  %v2414 = vld [vmem:[%s2391 + $0xb0] sm:$0xff]
  %v2415 = vld [vmem:[%s2391 + $0xb8] sm:$0xff]
  %v2416 = vld [vmem:[%s2391 + $0xc0] sm:$0xff]
  %v2417 = vld [vmem:[%s2391 + $0xc8] sm:$0xff]
  %v2418 = vld [vmem:[%s2391 + $0xd0] sm:$0xff]
  %v2419 = vld [vmem:[%s2391 + $0xd8] sm:$0xff]
  %v2420 = vld [vmem:[%s2391 + $0xe0] sm:$0xff]
  %v2421 = vld [vmem:[%s2391 + $0xe8] sm:$0xff]
  %v2422 = vld [vmem:[%s2391 + $0xf0] sm:$0xff]
  %v2423 = vld [vmem:[%s2391 + $0xf8] sm:$0xff]
  %s2424 = scalar_lea.vmem %s4, 2
  %v2425 = vld [vmem:[%s2424] sm:$0x3]
  %v2427 = vperm.slane %v2425, 0
  %v2428 = vperm.slane %v2425, 1
  %v2463 = vunpack.c.l.b16 %v2392
  %v2464 = vunpack.c.h.b16 %v2392
  %v2465 = vunpack.c.l.b16 %v2393
  %v2466 = vunpack.c.h.b16 %v2393
  %v2467 = vunpack.c.l.b16 %v2394
  %v2468 = vunpack.c.h.b16 %v2394
  %v2469 = vunpack.c.l.b16 %v2395
  %v2470 = vunpack.c.h.b16 %v2395
  %v2471 = vunpack.c.l.b16 %v2396
  %v2472 = vunpack.c.h.b16 %v2396
  %v2473 = vunpack.c.l.b16 %v2397
  %v2474 = vunpack.c.h.b16 %v2397
  %v2475 = vunpack.c.l.b16 %v2398
  %v2476 = vunpack.c.h.b16 %v2398
  %v2477 = vunpack.c.l.b16 %v2399
  %v2478 = vunpack.c.h.b16 %v2399
  %v2479 = vunpack.c.l.b16 %v2400
  %v2480 = vunpack.c.h.b16 %v2400
  %v2481 = vunpack.c.l.b16 %v2401
  %v2482 = vunpack.c.h.b16 %v2401
  %v2483 = vunpack.c.l.b16 %v2402
  %v2484 = vunpack.c.h.b16 %v2402
  %v2485 = vunpack.c.l.b16 %v2403
  %v2486 = vunpack.c.h.b16 %v2403
  %v2487 = vunpack.c.l.b16 %v2404
  %v2488 = vunpack.c.h.b16 %v2404
  %v2489 = vunpack.c.l.b16 %v2405
  %v2490 = vunpack.c.h.b16 %v2405
  %v2491 = vunpack.c.l.b16 %v2406
  %v2492 = vunpack.c.h.b16 %v2406
  %v2493 = vunpack.c.l.b16 %v2407
  %v2494 = vunpack.c.h.b16 %v2407
  %v2495 = vunpack.c.l.b16 %v2408
  %v2496 = vunpack.c.h.b16 %v2408
  %v2497 = vunpack.c.l.b16 %v2409
  %v2498 = vunpack.c.h.b16 %v2409
  %v2499 = vunpack.c.l.b16 %v2410
  %v2500 = vunpack.c.h.b16 %v2410
  %v2501 = vunpack.c.l.b16 %v2411
  %v2502 = vunpack.c.h.b16 %v2411
  %v2503 = vunpack.c.l.b16 %v2412
  %v2504 = vunpack.c.h.b16 %v2412
  %v2505 = vunpack.c.l.b16 %v2413
  %v2506 = vunpack.c.h.b16 %v2413
  %v2507 = vunpack.c.l.b16 %v2414
  %v2508 = vunpack.c.h.b16 %v2414
  %v2509 = vunpack.c.l.b16 %v2415
  %v2510 = vunpack.c.h.b16 %v2415
  %v2511 = vunpack.c.l.b16 %v2416
  %v2512 = vunpack.c.h.b16 %v2416
  %v2513 = vunpack.c.l.b16 %v2417
  %v2514 = vunpack.c.h.b16 %v2417
  %v2515 = vunpack.c.l.b16 %v2418
  %v2516 = vunpack.c.h.b16 %v2418
  %v2517 = vunpack.c.l.b16 %v2419
  %v2518 = vunpack.c.h.b16 %v2419
  %v2519 = vunpack.c.l.b16 %v2420
  %v2520 = vunpack.c.h.b16 %v2420
  %v2521 = vunpack.c.l.b16 %v2421
  %v2522 = vunpack.c.h.b16 %v2421
  %v2523 = vunpack.c.l.b16 %v2422
  %v2524 = vunpack.c.h.b16 %v2422
  %v2525 = vunpack.c.l.b16 %v2423
  %v2526 = vunpack.c.h.b16 %v2423
  %v2527 = vpack.c.b16 %v2465, %v2463
  %v2528 = vpack.c.b16 %v2466, %v2464
  %v2529 = vpack.c.b16 %v2469, %v2467
  %v2530 = vpack.c.b16 %v2470, %v2468
  %v2531 = vpack.c.b16 %v2473, %v2471
  %v2532 = vpack.c.b16 %v2474, %v2472
  %v2533 = vpack.c.b16 %v2477, %v2475
  %v2534 = vpack.c.b16 %v2478, %v2476
  %v2535 = vpack.c.b16 %v2481, %v2479
  %v2536 = vpack.c.b16 %v2482, %v2480
  %v2537 = vpack.c.b16 %v2485, %v2483
  %v2538 = vpack.c.b16 %v2486, %v2484
  %v2539 = vpack.c.b16 %v2489, %v2487
  %v2540 = vpack.c.b16 %v2490, %v2488
  %v2541 = vpack.c.b16 %v2493, %v2491
  %v2542 = vpack.c.b16 %v2494, %v2492
  %v2543 = vpack.c.b16 %v2497, %v2495
  %v2544 = vpack.c.b16 %v2498, %v2496
  %v2545 = vpack.c.b16 %v2501, %v2499
  %v2546 = vpack.c.b16 %v2502, %v2500
  %v2547 = vpack.c.b16 %v2505, %v2503
  %v2548 = vpack.c.b16 %v2506, %v2504
  %v2549 = vpack.c.b16 %v2509, %v2507
  %v2550 = vpack.c.b16 %v2510, %v2508
  %v2551 = vpack.c.b16 %v2513, %v2511
  %v2552 = vpack.c.b16 %v2514, %v2512
  %v2553 = vpack.c.b16 %v2517, %v2515
  %v2554 = vpack.c.b16 %v2518, %v2516
  %v2555 = vpack.c.b16 %v2521, %v2519
  %v2556 = vpack.c.b16 %v2522, %v2520
  %v2557 = vpack.c.b16 %v2525, %v2523
  %v2558 = vpack.c.b16 %v2526, %v2524
  %2591 = vmatpush.bf16.msra.mxu0 %v2541
  %2592 = vmatpush.bf16.msra.mxu0 %v2539
  %2593 = vmatpush.bf16.msra.mxu0 %v2537
  %2594 = vmatpush.bf16.msra.mxu0 %v2535
  %2595 = vmatpush.bf16.msra.mxu0 %v2533
  %2596 = vmatpush.bf16.msra.mxu0 %v2531
  %2597 = vmatpush.bf16.msra.mxu0 %v2529
  %2598 = vmatpush.bf16.msra.mxu0 %v2527
  %2599 = vmatmul.bf16.gmra.mxu0 %v2359
  %v2600 = vpop.f32.mrf.mxu0
  %v2601 = vadd.f32 %v2427, %v2600
  %v2602 = vpop.f32.mrf.mxu0
  %v2603 = vadd.f32 %v2427, %v2602
  %2604 = vmatmul.bf16.gmra.mxu0 %v2361
  %v2605 = vpop.f32.mrf.mxu0
  %v2606 = vadd.f32 %v2427, %v2605
  %v2607 = vpop.f32.mrf.mxu0
  %v2608 = vadd.f32 %v2427, %v2607
  %2609 = vmatmul.bf16.gmra.mxu0 %v2363
  %v2610 = vpop.f32.mrf.mxu0
  %v2611 = vadd.f32 %v2427, %v2610
  %v2612 = vpop.f32.mrf.mxu0
  %v2613 = vadd.f32 %v2427, %v2612
  %2614 = vmatmul.bf16.gmra.mxu0 %v2365
  %v2615 = vpop.f32.mrf.mxu0
  %v2616 = vadd.f32 %v2427, %v2615
  %v2617 = vpop.f32.mrf.mxu0
  %v2618 = vadd.f32 %v2427, %v2617
  %2619 = vmatmul.bf16.gmra.mxu0 %v2367
  %v2620 = vpop.f32.mrf.mxu0
  %v2621 = vadd.f32 %v2427, %v2620
  %v2622 = vpop.f32.mrf.mxu0
  %v2623 = vadd.f32 %v2427, %v2622
  %2624 = vmatmul.bf16.gmra.mxu0 %v2369
  %v2625 = vpop.f32.mrf.mxu0
  %v2626 = vadd.f32 %v2427, %v2625
  %v2627 = vpop.f32.mrf.mxu0
  %v2628 = vadd.f32 %v2427, %v2627
  %2629 = vmatmul.bf16.gmra.mxu0 %v2371
  %v2630 = vpop.f32.mrf.mxu0
  %v2631 = vadd.f32 %v2427, %v2630
  %v2632 = vpop.f32.mrf.mxu0
  %v2633 = vadd.f32 %v2427, %v2632
  %2634 = vmatmul.bf16.gmra.mxu0 %v2373
  %v2635 = vpop.f32.mrf.mxu0
  %v2636 = vadd.f32 %v2427, %v2635
  %v2637 = vpop.f32.mrf.mxu0
  %v2638 = vadd.f32 %v2427, %v2637
  %2639 = vmatmul.bf16.gmra.mxu0 %v2375
  %v2640 = vpop.f32.mrf.mxu0
  %v2641 = vadd.f32 %v2427, %v2640
  %v2642 = vpop.f32.mrf.mxu0
  %v2643 = vadd.f32 %v2427, %v2642
  %2644 = vmatmul.bf16.gmra.mxu0 %v2377
  %v2645 = vpop.f32.mrf.mxu0
  %v2646 = vadd.f32 %v2427, %v2645
  %v2647 = vpop.f32.mrf.mxu0
  %v2648 = vadd.f32 %v2427, %v2647
  %2649 = vmatmul.bf16.gmra.mxu0 %v2379
  %v2650 = vpop.f32.mrf.mxu0
  %v2651 = vadd.f32 %v2427, %v2650
  %v2652 = vpop.f32.mrf.mxu0
  %v2653 = vadd.f32 %v2427, %v2652
  %2654 = vmatmul.bf16.gmra.mxu0 %v2381
  %v2655 = vpop.f32.mrf.mxu0
  %v2656 = vadd.f32 %v2427, %v2655
  %v2657 = vpop.f32.mrf.mxu0
  %v2658 = vadd.f32 %v2427, %v2657
  %2659 = vmatmul.bf16.gmra.mxu0 %v2383
  %v2660 = vpop.f32.mrf.mxu0
  %v2661 = vadd.f32 %v2427, %v2660
  %v2662 = vpop.f32.mrf.mxu0
  %v2663 = vadd.f32 %v2427, %v2662
  %2664 = vmatmul.bf16.gmra.mxu0 %v2385
  %v2665 = vpop.f32.mrf.mxu0
  %v2666 = vadd.f32 %v2427, %v2665
  %v2667 = vpop.f32.mrf.mxu0
  %v2668 = vadd.f32 %v2427, %v2667
  %2669 = vmatmul.bf16.gmra.mxu0 %v2387
  %v2670 = vpop.f32.mrf.mxu0
  %v2671 = vadd.f32 %v2427, %v2670
  %v2672 = vpop.f32.mrf.mxu0
  %v2673 = vadd.f32 %v2427, %v2672
  %2674 = vmatmul.bf16.gmra.mxu0 %v2389
  %v2675 = vpop.f32.mrf.mxu0
  %v2676 = vadd.f32 %v2427, %v2675
  %v2677 = vpop.f32.mrf.mxu0
  %v2678 = vadd.f32 %v2427, %v2677
  %2679 = vdwg.mxu0
  %2680 = vmatpush.bf16.msra.mxu0 %v2557
  %2681 = vmatpush.bf16.msra.mxu0 %v2555
  %2682 = vmatpush.bf16.msra.mxu0 %v2553
  %2683 = vmatpush.bf16.msra.mxu0 %v2551
  %2684 = vmatpush.bf16.msra.mxu0 %v2549
  %2685 = vmatpush.bf16.msra.mxu0 %v2547
  %2686 = vmatpush.bf16.msra.mxu0 %v2545
  %2687 = vmatpush.bf16.msra.mxu0 %v2543
  %2688 = vmatmul.bf16.gmra.mxu0 %v2360
  %v2689 = vpop.f32.mrf.mxu0
  %v2690 = vadd.f32 %v2601, %v2689
  %v2691 = vpop.f32.mrf.mxu0
  %v2692 = vadd.f32 %v2603, %v2691
  %2693 = vmatmul.bf16.gmra.mxu0 %v2362
  %v2694 = vpop.f32.mrf.mxu0
  %v2695 = vadd.f32 %v2606, %v2694
  %v2696 = vpop.f32.mrf.mxu0
  %v2697 = vadd.f32 %v2608, %v2696
  %2698 = vmatmul.bf16.gmra.mxu0 %v2364
  %v2699 = vpop.f32.mrf.mxu0
  %v2700 = vadd.f32 %v2611, %v2699
  %v2701 = vpop.f32.mrf.mxu0
  %v2702 = vadd.f32 %v2613, %v2701
  %2703 = vmatmul.bf16.gmra.mxu0 %v2366
  %v2704 = vpop.f32.mrf.mxu0
  %v2705 = vadd.f32 %v2616, %v2704
  %v2706 = vpop.f32.mrf.mxu0
  %v2707 = vadd.f32 %v2618, %v2706
  %2708 = vmatmul.bf16.gmra.mxu0 %v2368
  %v2709 = vpop.f32.mrf.mxu0
  %v2710 = vadd.f32 %v2621, %v2709
  %v2711 = vpop.f32.mrf.mxu0
  %v2712 = vadd.f32 %v2623, %v2711
  %2713 = vmatmul.bf16.gmra.mxu0 %v2370
  %v2714 = vpop.f32.mrf.mxu0
  %v2715 = vadd.f32 %v2626, %v2714
  %v2716 = vpop.f32.mrf.mxu0
  %v2717 = vadd.f32 %v2628, %v2716
  %2718 = vmatmul.bf16.gmra.mxu0 %v2372
  %v2719 = vpop.f32.mrf.mxu0
  %v2720 = vadd.f32 %v2631, %v2719
  %v2721 = vpop.f32.mrf.mxu0
  %v2722 = vadd.f32 %v2633, %v2721
  %2723 = vmatmul.bf16.gmra.mxu0 %v2374
  %v2724 = vpop.f32.mrf.mxu0
  %v2725 = vadd.f32 %v2636, %v2724
  %v2726 = vpop.f32.mrf.mxu0
  %v2727 = vadd.f32 %v2638, %v2726
  %2728 = vmatmul.bf16.gmra.mxu0 %v2376
  %v2729 = vpop.f32.mrf.mxu0
  %v2730 = vadd.f32 %v2641, %v2729
  %v2731 = vpop.f32.mrf.mxu0
  %v2732 = vadd.f32 %v2643, %v2731
  %2733 = vmatmul.bf16.gmra.mxu0 %v2378
  %v2734 = vpop.f32.mrf.mxu0
  %v2735 = vadd.f32 %v2646, %v2734
  %v2736 = vpop.f32.mrf.mxu0
  %v2737 = vadd.f32 %v2648, %v2736
  %2738 = vmatmul.bf16.gmra.mxu0 %v2380
  %v2739 = vpop.f32.mrf.mxu0
  %v2740 = vadd.f32 %v2651, %v2739
  %v2741 = vpop.f32.mrf.mxu0
  %v2742 = vadd.f32 %v2653, %v2741
  %2743 = vmatmul.bf16.gmra.mxu0 %v2382
  %v2744 = vpop.f32.mrf.mxu0
  %v2745 = vadd.f32 %v2656, %v2744
  %v2746 = vpop.f32.mrf.mxu0
  %v2747 = vadd.f32 %v2658, %v2746
  %2748 = vmatmul.bf16.gmra.mxu0 %v2384
  %v2749 = vpop.f32.mrf.mxu0
  %v2750 = vadd.f32 %v2661, %v2749
  %v2751 = vpop.f32.mrf.mxu0
  %v2752 = vadd.f32 %v2663, %v2751
  %2753 = vmatmul.bf16.gmra.mxu0 %v2386
  %v2754 = vpop.f32.mrf.mxu0
  %v2755 = vadd.f32 %v2666, %v2754
  %v2756 = vpop.f32.mrf.mxu0
  %v2757 = vadd.f32 %v2668, %v2756
  %2758 = vmatmul.bf16.gmra.mxu0 %v2388
  %v2759 = vpop.f32.mrf.mxu0
  %v2760 = vadd.f32 %v2671, %v2759
  %v2761 = vpop.f32.mrf.mxu0
  %v2762 = vadd.f32 %v2673, %v2761
  %2763 = vmatmul.bf16.gmra.mxu0 %v2390
  %v2764 = vpop.f32.mrf.mxu0
  %v2765 = vadd.f32 %v2676, %v2764
  %v2766 = vpop.f32.mrf.mxu0
  %v2767 = vadd.f32 %v2678, %v2766
  %2768 = vdwg.mxu0
  %2769 = vmatpush.bf16.msra.mxu0 %v2542
  %2770 = vmatpush.bf16.msra.mxu0 %v2540
  %2771 = vmatpush.bf16.msra.mxu0 %v2538
  %2772 = vmatpush.bf16.msra.mxu0 %v2536
  %2773 = vmatpush.bf16.msra.mxu0 %v2534
  %2774 = vmatpush.bf16.msra.mxu0 %v2532
  %2775 = vmatpush.bf16.msra.mxu0 %v2530
  %2776 = vmatpush.bf16.msra.mxu0 %v2528
  %2777 = vmatmul.bf16.gmra.mxu0 %v2359
  %v2778 = vpop.f32.mrf.mxu0
  %v2779 = vadd.f32 %v2428, %v2778
  %v2780 = vpop.f32.mrf.mxu0
  %v2781 = vadd.f32 %v2428, %v2780
  %2782 = vmatmul.bf16.gmra.mxu0 %v2361
  %v2783 = vpop.f32.mrf.mxu0
  %v2784 = vadd.f32 %v2428, %v2783
  %v2785 = vpop.f32.mrf.mxu0
  %v2786 = vadd.f32 %v2428, %v2785
  %2787 = vmatmul.bf16.gmra.mxu0 %v2363
  %v2788 = vpop.f32.mrf.mxu0
  %v2789 = vadd.f32 %v2428, %v2788
  %v2790 = vpop.f32.mrf.mxu0
  %v2791 = vadd.f32 %v2428, %v2790
  %2792 = vmatmul.bf16.gmra.mxu0 %v2365
  %v2793 = vpop.f32.mrf.mxu0
  %v2794 = vadd.f32 %v2428, %v2793
  %v2795 = vpop.f32.mrf.mxu0
  %v2796 = vadd.f32 %v2428, %v2795
  %2797 = vmatmul.bf16.gmra.mxu0 %v2367
  %v2798 = vpop.f32.mrf.mxu0
  %v2799 = vadd.f32 %v2428, %v2798
  %v2800 = vpop.f32.mrf.mxu0
  %v2801 = vadd.f32 %v2428, %v2800
  %2802 = vmatmul.bf16.gmra.mxu0 %v2369
  %v2803 = vpop.f32.mrf.mxu0
  %v2804 = vadd.f32 %v2428, %v2803
  %v2805 = vpop.f32.mrf.mxu0
  %v2806 = vadd.f32 %v2428, %v2805
  %2807 = vmatmul.bf16.gmra.mxu0 %v2371
  %v2808 = vpop.f32.mrf.mxu0
  %v2809 = vadd.f32 %v2428, %v2808
  %v2810 = vpop.f32.mrf.mxu0
  %v2811 = vadd.f32 %v2428, %v2810
  %2812 = vmatmul.bf16.gmra.mxu0 %v2373
  %v2813 = vpop.f32.mrf.mxu0
  %v2814 = vadd.f32 %v2428, %v2813
  %v2815 = vpop.f32.mrf.mxu0
  %v2816 = vadd.f32 %v2428, %v2815
  %2817 = vmatmul.bf16.gmra.mxu0 %v2375
  %v2818 = vpop.f32.mrf.mxu0
  %v2819 = vadd.f32 %v2428, %v2818
  %v2820 = vpop.f32.mrf.mxu0
  %v2821 = vadd.f32 %v2428, %v2820
  %2822 = vmatmul.bf16.gmra.mxu0 %v2377
  %v2823 = vpop.f32.mrf.mxu0
  %v2824 = vadd.f32 %v2428, %v2823
  %v2825 = vpop.f32.mrf.mxu0
  %v2826 = vadd.f32 %v2428, %v2825
  %2827 = vmatmul.bf16.gmra.mxu0 %v2379
  %v2828 = vpop.f32.mrf.mxu0
  %v2829 = vadd.f32 %v2428, %v2828
  %v2830 = vpop.f32.mrf.mxu0
  %v2831 = vadd.f32 %v2428, %v2830
  %2832 = vmatmul.bf16.gmra.mxu0 %v2381
  %v2833 = vpop.f32.mrf.mxu0
  %v2834 = vadd.f32 %v2428, %v2833
  %v2835 = vpop.f32.mrf.mxu0
  %v2836 = vadd.f32 %v2428, %v2835
  %2837 = vmatmul.bf16.gmra.mxu0 %v2383
  %v2838 = vpop.f32.mrf.mxu0
  %v2839 = vadd.f32 %v2428, %v2838
  %v2840 = vpop.f32.mrf.mxu0
  %v2841 = vadd.f32 %v2428, %v2840
  %2842 = vmatmul.bf16.gmra.mxu0 %v2385
  %v2843 = vpop.f32.mrf.mxu0
  %v2844 = vadd.f32 %v2428, %v2843
  %v2845 = vpop.f32.mrf.mxu0
  %v2846 = vadd.f32 %v2428, %v2845
  %2847 = vmatmul.bf16.gmra.mxu0 %v2387
  %v2848 = vpop.f32.mrf.mxu0
  %v2849 = vadd.f32 %v2428, %v2848
  %v2850 = vpop.f32.mrf.mxu0
  %v2851 = vadd.f32 %v2428, %v2850
  %2852 = vmatmul.bf16.gmra.mxu0 %v2389
  %v2853 = vpop.f32.mrf.mxu0
  %v2854 = vadd.f32 %v2428, %v2853
  %v2855 = vpop.f32.mrf.mxu0
  %v2856 = vadd.f32 %v2428, %v2855
  %2857 = vdwg.mxu0
  %2858 = vmatpush.bf16.msra.mxu0 %v2558
  %2859 = vmatpush.bf16.msra.mxu0 %v2556
  %2860 = vmatpush.bf16.msra.mxu0 %v2554
  %2861 = vmatpush.bf16.msra.mxu0 %v2552
  %2862 = vmatpush.bf16.msra.mxu0 %v2550
  %2863 = vmatpush.bf16.msra.mxu0 %v2548
  %2864 = vmatpush.bf16.msra.mxu0 %v2546
  %2865 = vmatpush.bf16.msra.mxu0 %v2544
  %2866 = vmatmul.bf16.gmra.mxu0 %v2360
  %v2867 = vpop.f32.mrf.mxu0
  %v2868 = vadd.f32 %v2779, %v2867
  %v2869 = vpop.f32.mrf.mxu0
  %v2870 = vadd.f32 %v2781, %v2869
  %2871 = vmatmul.bf16.gmra.mxu0 %v2362
  %v2872 = vpop.f32.mrf.mxu0
  %v2873 = vadd.f32 %v2784, %v2872
  %v2874 = vpop.f32.mrf.mxu0
  %v2875 = vadd.f32 %v2786, %v2874
  %2876 = vmatmul.bf16.gmra.mxu0 %v2364
  %v2877 = vpop.f32.mrf.mxu0
  %v2878 = vadd.f32 %v2789, %v2877
  %v2879 = vpop.f32.mrf.mxu0
  %v2880 = vadd.f32 %v2791, %v2879
  %2881 = vmatmul.bf16.gmra.mxu0 %v2366
  %v2882 = vpop.f32.mrf.mxu0
  %v2883 = vadd.f32 %v2794, %v2882
  %v2884 = vpop.f32.mrf.mxu0
  %v2885 = vadd.f32 %v2796, %v2884
  %2886 = vmatmul.bf16.gmra.mxu0 %v2368
  %v2887 = vpop.f32.mrf.mxu0
  %v2888 = vadd.f32 %v2799, %v2887
  %v2889 = vpop.f32.mrf.mxu0
  %v2890 = vadd.f32 %v2801, %v2889
  %2891 = vmatmul.bf16.gmra.mxu0 %v2370
  %v2892 = vpop.f32.mrf.mxu0
  %v2893 = vadd.f32 %v2804, %v2892
  %v2894 = vpop.f32.mrf.mxu0
  %v2895 = vadd.f32 %v2806, %v2894
  %2896 = vmatmul.bf16.gmra.mxu0 %v2372
  %v2897 = vpop.f32.mrf.mxu0
  %v2898 = vadd.f32 %v2809, %v2897
  %v2899 = vpop.f32.mrf.mxu0
  %v2900 = vadd.f32 %v2811, %v2899
  %2901 = vmatmul.bf16.gmra.mxu0 %v2374
  %v2902 = vpop.f32.mrf.mxu0
  %v2903 = vadd.f32 %v2814, %v2902
  %v2904 = vpop.f32.mrf.mxu0
  %v2905 = vadd.f32 %v2816, %v2904
  %2906 = vmatmul.bf16.gmra.mxu0 %v2376
  %v2907 = vpop.f32.mrf.mxu0
  %v2908 = vadd.f32 %v2819, %v2907
  %v2909 = vpop.f32.mrf.mxu0
  %v2910 = vadd.f32 %v2821, %v2909
  %2911 = vmatmul.bf16.gmra.mxu0 %v2378
  %v2912 = vpop.f32.mrf.mxu0
  %v2913 = vadd.f32 %v2824, %v2912
  %v2914 = vpop.f32.mrf.mxu0
  %v2915 = vadd.f32 %v2826, %v2914
  %2916 = vmatmul.bf16.gmra.mxu0 %v2380
  %v2917 = vpop.f32.mrf.mxu0
  %v2918 = vadd.f32 %v2829, %v2917
  %v2919 = vpop.f32.mrf.mxu0
  %v2920 = vadd.f32 %v2831, %v2919
  %2921 = vmatmul.bf16.gmra.mxu0 %v2382
  %v2922 = vpop.f32.mrf.mxu0
  %v2923 = vadd.f32 %v2834, %v2922
  %v2924 = vpop.f32.mrf.mxu0
  %v2925 = vadd.f32 %v2836, %v2924
  %2926 = vmatmul.bf16.gmra.mxu0 %v2384
  %v2927 = vpop.f32.mrf.mxu0
  %v2928 = vadd.f32 %v2839, %v2927
  %v2929 = vpop.f32.mrf.mxu0
  %v2930 = vadd.f32 %v2841, %v2929
  %2931 = vmatmul.bf16.gmra.mxu0 %v2386
  %v2932 = vpop.f32.mrf.mxu0
  %v2933 = vadd.f32 %v2844, %v2932
  %v2934 = vpop.f32.mrf.mxu0
  %v2935 = vadd.f32 %v2846, %v2934
  %2936 = vmatmul.bf16.gmra.mxu0 %v2388
  %v2937 = vpop.f32.mrf.mxu0
  %v2938 = vadd.f32 %v2849, %v2937
  %v2939 = vpop.f32.mrf.mxu0
  %v2940 = vadd.f32 %v2851, %v2939
  %2941 = vmatmul.bf16.gmra.mxu0 %v2390
  %v2942 = vpop.f32.mrf.mxu0
  %v2943 = vadd.f32 %v2854, %v2942
  %v2944 = vpop.f32.mrf.mxu0
  %v2945 = vadd.f32 %v2856, %v2944
  %2946 = vdwg.mxu0
  %v2947 = vmax.f32 %v2690, 0.0
  %v2948 = vmax.f32 %v2868, 0.0
  %v2949 = vmax.f32 %v2692, 0.0
  %v2950 = vmax.f32 %v2870, 0.0
  %v2951 = vmax.f32 %v2695, 0.0
  %v2952 = vmax.f32 %v2873, 0.0
  %v2953 = vmax.f32 %v2697, 0.0
  %v2954 = vmax.f32 %v2875, 0.0
  %v2955 = vmax.f32 %v2700, 0.0
  %v2956 = vmax.f32 %v2878, 0.0
  %v2957 = vmax.f32 %v2702, 0.0
  %v2958 = vmax.f32 %v2880, 0.0
  %v2959 = vmax.f32 %v2705, 0.0
  %v2960 = vmax.f32 %v2883, 0.0
  %v2961 = vmax.f32 %v2707, 0.0
  %v2962 = vmax.f32 %v2885, 0.0
  %v2963 = vmax.f32 %v2710, 0.0
  %v2964 = vmax.f32 %v2888, 0.0
  %v2965 = vmax.f32 %v2712, 0.0
  %v2966 = vmax.f32 %v2890, 0.0
  %v2967 = vmax.f32 %v2715, 0.0
  %v2968 = vmax.f32 %v2893, 0.0
  %v2969 = vmax.f32 %v2717, 0.0
  %v2970 = vmax.f32 %v2895, 0.0
  %v2971 = vmax.f32 %v2720, 0.0
  %v2972 = vmax.f32 %v2898, 0.0
  %v2973 = vmax.f32 %v2722, 0.0
  %v2974 = vmax.f32 %v2900, 0.0
  %v2975 = vmax.f32 %v2725, 0.0
  %v2976 = vmax.f32 %v2903, 0.0
  %v2977 = vmax.f32 %v2727, 0.0
  %v2978 = vmax.f32 %v2905, 0.0
  %v2979 = vmax.f32 %v2730, 0.0
  %v2980 = vmax.f32 %v2908, 0.0
  %v2981 = vmax.f32 %v2732, 0.0
  %v2982 = vmax.f32 %v2910, 0.0
  %v2983 = vmax.f32 %v2735, 0.0
  %v2984 = vmax.f32 %v2913, 0.0
  %v2985 = vmax.f32 %v2737, 0.0
  %v2986 = vmax.f32 %v2915, 0.0
  %v2987 = vmax.f32 %v2740, 0.0
  %v2988 = vmax.f32 %v2918, 0.0
  %v2989 = vmax.f32 %v2742, 0.0
  %v2990 = vmax.f32 %v2920, 0.0
  %v2991 = vmax.f32 %v2745, 0.0
  %v2992 = vmax.f32 %v2923, 0.0
  %v2993 = vmax.f32 %v2747, 0.0
  %v2994 = vmax.f32 %v2925, 0.0
  %v2995 = vmax.f32 %v2750, 0.0
  %v2996 = vmax.f32 %v2928, 0.0
  %v2997 = vmax.f32 %v2752, 0.0
  %v2998 = vmax.f32 %v2930, 0.0
  %v2999 = vmax.f32 %v2755, 0.0
  %v3000 = vmax.f32 %v2933, 0.0
  %v3001 = vmax.f32 %v2757, 0.0
  %v3002 = vmax.f32 %v2935, 0.0
  %v3003 = vmax.f32 %v2760, 0.0
  %v3004 = vmax.f32 %v2938, 0.0
  %v3005 = vmax.f32 %v2762, 0.0
  %v3006 = vmax.f32 %v2940, 0.0
  %v3007 = vmax.f32 %v2765, 0.0
  %v3008 = vmax.f32 %v2943, 0.0
  %v3009 = vmax.f32 %v2767, 0.0
  %v3010 = vmax.f32 %v2945, 0.0
  %v3011 = vpack.c.bf16 %v2949, %v2947
  %v3012 = vpack.c.bf16 %v2950, %v2948
  %v3013 = vpack.c.bf16 %v2953, %v2951
  %v3014 = vpack.c.bf16 %v2954, %v2952
  %v3015 = vpack.c.bf16 %v2957, %v2955
  %v3016 = vpack.c.bf16 %v2958, %v2956
  %v3017 = vpack.c.bf16 %v2961, %v2959
  %v3018 = vpack.c.bf16 %v2962, %v2960
  %v3019 = vpack.c.bf16 %v2965, %v2963
  %v3020 = vpack.c.bf16 %v2966, %v2964
  %v3021 = vpack.c.bf16 %v2969, %v2967
  %v3022 = vpack.c.bf16 %v2970, %v2968
  %v3023 = vpack.c.bf16 %v2973, %v2971
  %v3024 = vpack.c.bf16 %v2974, %v2972
  %v3025 = vpack.c.bf16 %v2977, %v2975
  %v3026 = vpack.c.bf16 %v2978, %v2976
  %v3027 = vpack.c.bf16 %v2981, %v2979
  %v3028 = vpack.c.bf16 %v2982, %v2980
  %v3029 = vpack.c.bf16 %v2985, %v2983
  %v3030 = vpack.c.bf16 %v2986, %v2984
  %v3031 = vpack.c.bf16 %v2989, %v2987
  %v3032 = vpack.c.bf16 %v2990, %v2988
  %v3033 = vpack.c.bf16 %v2993, %v2991
  %v3034 = vpack.c.bf16 %v2994, %v2992
  %v3035 = vpack.c.bf16 %v2997, %v2995
  %v3036 = vpack.c.bf16 %v2998, %v2996
  %v3037 = vpack.c.bf16 %v3001, %v2999
  %v3038 = vpack.c.bf16 %v3002, %v3000
  %v3039 = vpack.c.bf16 %v3005, %v3003
  %v3040 = vpack.c.bf16 %v3006, %v3004
  %v3041 = vpack.c.bf16 %v3009, %v3007
  %v3042 = vpack.c.bf16 %v3010, %v3008
  %s3043 = scalar_lea.vmem %s5, 256
  %v3044 = vld [vmem:[%s3043] sm:$0xff]
  %v3045 = vld [vmem:[%s3043 + $0x8] sm:$0xff]
  %v3046 = vld [vmem:[%s3043 + $0x10] sm:$0xff]
  %v3047 = vld [vmem:[%s3043 + $0x18] sm:$0xff]
  %v3048 = vld [vmem:[%s3043 + $0x20] sm:$0xff]
  %v3049 = vld [vmem:[%s3043 + $0x28] sm:$0xff]
  %v3050 = vld [vmem:[%s3043 + $0x30] sm:$0xff]
  %v3051 = vld [vmem:[%s3043 + $0x38] sm:$0xff]
  %v3052 = vld [vmem:[%s3043 + $0x40] sm:$0xff]
  %v3053 = vld [vmem:[%s3043 + $0x48] sm:$0xff]
  %v3054 = vld [vmem:[%s3043 + $0x50] sm:$0xff]
  %v3055 = vld [vmem:[%s3043 + $0x58] sm:$0xff]
  %v3056 = vld [vmem:[%s3043 + $0x60] sm:$0xff]
  %v3057 = vld [vmem:[%s3043 + $0x68] sm:$0xff]
  %v3058 = vld [vmem:[%s3043 + $0x70] sm:$0xff]
  %v3059 = vld [vmem:[%s3043 + $0x78] sm:$0xff]
  %v3060 = vld [vmem:[%s3043 + $0x80] sm:$0xff]
  %v3061 = vld [vmem:[%s3043 + $0x88] sm:$0xff]
  %v3062 = vld [vmem:[%s3043 + $0x90] sm:$0xff]
  %v3063 = vld [vmem:[%s3043 + $0x98] sm:$0xff]
  %v3064 = vld [vmem:[%s3043 + $0xa0] sm:$0xff]
  %v3065 = vld [vmem:[%s3043 + $0xa8] sm:$0xff]
  %v3066 = vld [vmem:[%s3043 + $0xb0] sm:$0xff]
  %v3067 = vld [vmem:[%s3043 + $0xb8] sm:$0xff]
  %v3068 = vld [vmem:[%s3043 + $0xc0] sm:$0xff]
  %v3069 = vld [vmem:[%s3043 + $0xc8] sm:$0xff]
  %v3070 = vld [vmem:[%s3043 + $0xd0] sm:$0xff]
  %v3071 = vld [vmem:[%s3043 + $0xd8] sm:$0xff]
  %v3072 = vld [vmem:[%s3043 + $0xe0] sm:$0xff]
  %v3073 = vld [vmem:[%s3043 + $0xe8] sm:$0xff]
  %v3074 = vld [vmem:[%s3043 + $0xf0] sm:$0xff]
  %v3075 = vld [vmem:[%s3043 + $0xf8] sm:$0xff]
  %s3076 = scalar_lea.vmem %s6, 2
  %v3077 = vld [vmem:[%s3076] sm:$0x3]
  %v3079 = vperm.slane %v3077, 0
  %v3080 = vperm.slane %v3077, 1
  %v3115 = vunpack.c.l.b16 %v3044
  %v3116 = vunpack.c.h.b16 %v3044
  %v3117 = vunpack.c.l.b16 %v3045
  %v3118 = vunpack.c.h.b16 %v3045
  %v3119 = vunpack.c.l.b16 %v3046
  %v3120 = vunpack.c.h.b16 %v3046
  %v3121 = vunpack.c.l.b16 %v3047
  %v3122 = vunpack.c.h.b16 %v3047
  %v3123 = vunpack.c.l.b16 %v3048
  %v3124 = vunpack.c.h.b16 %v3048
  %v3125 = vunpack.c.l.b16 %v3049
  %v3126 = vunpack.c.h.b16 %v3049
  %v3127 = vunpack.c.l.b16 %v3050
  %v3128 = vunpack.c.h.b16 %v3050
  %v3129 = vunpack.c.l.b16 %v3051
  %v3130 = vunpack.c.h.b16 %v3051
  %v3131 = vunpack.c.l.b16 %v3052
  %v3132 = vunpack.c.h.b16 %v3052
  %v3133 = vunpack.c.l.b16 %v3053
  %v3134 = vunpack.c.h.b16 %v3053
  %v3135 = vunpack.c.l.b16 %v3054
  %v3136 = vunpack.c.h.b16 %v3054
  %v3137 = vunpack.c.l.b16 %v3055
  %v3138 = vunpack.c.h.b16 %v3055
  %v3139 = vunpack.c.l.b16 %v3056
  %v3140 = vunpack.c.h.b16 %v3056
  %v3141 = vunpack.c.l.b16 %v3057
  %v3142 = vunpack.c.h.b16 %v3057
  %v3143 = vunpack.c.l.b16 %v3058
  %v3144 = vunpack.c.h.b16 %v3058
  %v3145 = vunpack.c.l.b16 %v3059
  %v3146 = vunpack.c.h.b16 %v3059
  %v3147 = vunpack.c.l.b16 %v3060
  %v3148 = vunpack.c.h.b16 %v3060
  %v3149 = vunpack.c.l.b16 %v3061
  %v3150 = vunpack.c.h.b16 %v3061
  %v3151 = vunpack.c.l.b16 %v3062
  %v3152 = vunpack.c.h.b16 %v3062
  %v3153 = vunpack.c.l.b16 %v3063
  %v3154 = vunpack.c.h.b16 %v3063
  %v3155 = vunpack.c.l.b16 %v3064
  %v3156 = vunpack.c.h.b16 %v3064
  %v3157 = vunpack.c.l.b16 %v3065
  %v3158 = vunpack.c.h.b16 %v3065
  %v3159 = vunpack.c.l.b16 %v3066
  %v3160 = vunpack.c.h.b16 %v3066
  %v3161 = vunpack.c.l.b16 %v3067
  %v3162 = vunpack.c.h.b16 %v3067
  %v3163 = vunpack.c.l.b16 %v3068
  %v3164 = vunpack.c.h.b16 %v3068
  %v3165 = vunpack.c.l.b16 %v3069
  %v3166 = vunpack.c.h.b16 %v3069
  %v3167 = vunpack.c.l.b16 %v3070
  %v3168 = vunpack.c.h.b16 %v3070
  %v3169 = vunpack.c.l.b16 %v3071
  %v3170 = vunpack.c.h.b16 %v3071
  %v3171 = vunpack.c.l.b16 %v3072
  %v3172 = vunpack.c.h.b16 %v3072
  %v3173 = vunpack.c.l.b16 %v3073
  %v3174 = vunpack.c.h.b16 %v3073
  %v3175 = vunpack.c.l.b16 %v3074
  %v3176 = vunpack.c.h.b16 %v3074
  %v3177 = vunpack.c.l.b16 %v3075
  %v3178 = vunpack.c.h.b16 %v3075
  %v3179 = vpack.c.b16 %v3117, %v3115
  %v3180 = vpack.c.b16 %v3118, %v3116
  %v3181 = vpack.c.b16 %v3121, %v3119
  %v3182 = vpack.c.b16 %v3122, %v3120
  %v3183 = vpack.c.b16 %v3125, %v3123
  %v3184 = vpack.c.b16 %v3126, %v3124
  %v3185 = vpack.c.b16 %v3129, %v3127
  %v3186 = vpack.c.b16 %v3130, %v3128
  %v3187 = vpack.c.b16 %v3133, %v3131
  %v3188 = vpack.c.b16 %v3134, %v3132
  %v3189 = vpack.c.b16 %v3137, %v3135
  %v3190 = vpack.c.b16 %v3138, %v3136
  %v3191 = vpack.c.b16 %v3141, %v3139
  %v3192 = vpack.c.b16 %v3142, %v3140
  %v3193 = vpack.c.b16 %v3145, %v3143
  %v3194 = vpack.c.b16 %v3146, %v3144
  %v3195 = vpack.c.b16 %v3149, %v3147
  %v3196 = vpack.c.b16 %v3150, %v3148
  %v3197 = vpack.c.b16 %v3153, %v3151
  %v3198 = vpack.c.b16 %v3154, %v3152
  %v3199 = vpack.c.b16 %v3157, %v3155
  %v3200 = vpack.c.b16 %v3158, %v3156
  %v3201 = vpack.c.b16 %v3161, %v3159
  %v3202 = vpack.c.b16 %v3162, %v3160
  %v3203 = vpack.c.b16 %v3165, %v3163
  %v3204 = vpack.c.b16 %v3166, %v3164
  %v3205 = vpack.c.b16 %v3169, %v3167
  %v3206 = vpack.c.b16 %v3170, %v3168
  %v3207 = vpack.c.b16 %v3173, %v3171
  %v3208 = vpack.c.b16 %v3174, %v3172
  %v3209 = vpack.c.b16 %v3177, %v3175
  %v3210 = vpack.c.b16 %v3178, %v3176
  %3243 = vmatpush.bf16.msra.mxu0 %v3193
  %3244 = vmatpush.bf16.msra.mxu0 %v3191
  %3245 = vmatpush.bf16.msra.mxu0 %v3189
  %3246 = vmatpush.bf16.msra.mxu0 %v3187
  %3247 = vmatpush.bf16.msra.mxu0 %v3185
  %3248 = vmatpush.bf16.msra.mxu0 %v3183
  %3249 = vmatpush.bf16.msra.mxu0 %v3181
  %3250 = vmatpush.bf16.msra.mxu0 %v3179
  %3251 = vmatmul.bf16.gmra.mxu0 %v3011
  %v3252 = vpop.f32.mrf.mxu0
  %v3253 = vadd.f32 %v3079, %v3252
  %v3254 = vpop.f32.mrf.mxu0
  %v3255 = vadd.f32 %v3079, %v3254
  %3256 = vmatmul.bf16.gmra.mxu0 %v3013
  %v3257 = vpop.f32.mrf.mxu0
  %v3258 = vadd.f32 %v3079, %v3257
  %v3259 = vpop.f32.mrf.mxu0
  %v3260 = vadd.f32 %v3079, %v3259
  %3261 = vmatmul.bf16.gmra.mxu0 %v3015
  %v3262 = vpop.f32.mrf.mxu0
  %v3263 = vadd.f32 %v3079, %v3262
  %v3264 = vpop.f32.mrf.mxu0
  %v3265 = vadd.f32 %v3079, %v3264
  %3266 = vmatmul.bf16.gmra.mxu0 %v3017
  %v3267 = vpop.f32.mrf.mxu0
  %v3268 = vadd.f32 %v3079, %v3267
  %v3269 = vpop.f32.mrf.mxu0
  %v3270 = vadd.f32 %v3079, %v3269
  %3271 = vmatmul.bf16.gmra.mxu0 %v3019
  %v3272 = vpop.f32.mrf.mxu0
  %v3273 = vadd.f32 %v3079, %v3272
  %v3274 = vpop.f32.mrf.mxu0
  %v3275 = vadd.f32 %v3079, %v3274
  %3276 = vmatmul.bf16.gmra.mxu0 %v3021
  %v3277 = vpop.f32.mrf.mxu0
  %v3278 = vadd.f32 %v3079, %v3277
  %v3279 = vpop.f32.mrf.mxu0
  %v3280 = vadd.f32 %v3079, %v3279
  %3281 = vmatmul.bf16.gmra.mxu0 %v3023
  %v3282 = vpop.f32.mrf.mxu0
  %v3283 = vadd.f32 %v3079, %v3282
  %v3284 = vpop.f32.mrf.mxu0
  %v3285 = vadd.f32 %v3079, %v3284
  %3286 = vmatmul.bf16.gmra.mxu0 %v3025
  %v3287 = vpop.f32.mrf.mxu0
  %v3288 = vadd.f32 %v3079, %v3287
  %v3289 = vpop.f32.mrf.mxu0
  %v3290 = vadd.f32 %v3079, %v3289
  %3291 = vmatmul.bf16.gmra.mxu0 %v3027
  %v3292 = vpop.f32.mrf.mxu0
  %v3293 = vadd.f32 %v3079, %v3292
  %v3294 = vpop.f32.mrf.mxu0
  %v3295 = vadd.f32 %v3079, %v3294
  %3296 = vmatmul.bf16.gmra.mxu0 %v3029
  %v3297 = vpop.f32.mrf.mxu0
  %v3298 = vadd.f32 %v3079, %v3297
  %v3299 = vpop.f32.mrf.mxu0
  %v3300 = vadd.f32 %v3079, %v3299
  %3301 = vmatmul.bf16.gmra.mxu0 %v3031
  %v3302 = vpop.f32.mrf.mxu0
  %v3303 = vadd.f32 %v3079, %v3302
  %v3304 = vpop.f32.mrf.mxu0
  %v3305 = vadd.f32 %v3079, %v3304
  %3306 = vmatmul.bf16.gmra.mxu0 %v3033
  %v3307 = vpop.f32.mrf.mxu0
  %v3308 = vadd.f32 %v3079, %v3307
  %v3309 = vpop.f32.mrf.mxu0
  %v3310 = vadd.f32 %v3079, %v3309
  %3311 = vmatmul.bf16.gmra.mxu0 %v3035
  %v3312 = vpop.f32.mrf.mxu0
  %v3313 = vadd.f32 %v3079, %v3312
  %v3314 = vpop.f32.mrf.mxu0
  %v3315 = vadd.f32 %v3079, %v3314
  %3316 = vmatmul.bf16.gmra.mxu0 %v3037
  %v3317 = vpop.f32.mrf.mxu0
  %v3318 = vadd.f32 %v3079, %v3317
  %v3319 = vpop.f32.mrf.mxu0
  %v3320 = vadd.f32 %v3079, %v3319
  %3321 = vmatmul.bf16.gmra.mxu0 %v3039
  %v3322 = vpop.f32.mrf.mxu0
  %v3323 = vadd.f32 %v3079, %v3322
  %v3324 = vpop.f32.mrf.mxu0
  %v3325 = vadd.f32 %v3079, %v3324
  %3326 = vmatmul.bf16.gmra.mxu0 %v3041
  %v3327 = vpop.f32.mrf.mxu0
  %v3328 = vadd.f32 %v3079, %v3327
  %v3329 = vpop.f32.mrf.mxu0
  %v3330 = vadd.f32 %v3079, %v3329
  %3331 = vdwg.mxu0
  %3332 = vmatpush.bf16.msra.mxu0 %v3209
  %3333 = vmatpush.bf16.msra.mxu0 %v3207
  %3334 = vmatpush.bf16.msra.mxu0 %v3205
  %3335 = vmatpush.bf16.msra.mxu0 %v3203
  %3336 = vmatpush.bf16.msra.mxu0 %v3201
  %3337 = vmatpush.bf16.msra.mxu0 %v3199
  %3338 = vmatpush.bf16.msra.mxu0 %v3197
  %3339 = vmatpush.bf16.msra.mxu0 %v3195
  %3340 = vmatmul.bf16.gmra.mxu0 %v3012
  %v3341 = vpop.f32.mrf.mxu0
  %v3342 = vadd.f32 %v3253, %v3341
  %v3343 = vpop.f32.mrf.mxu0
  %v3344 = vadd.f32 %v3255, %v3343
  %3345 = vmatmul.bf16.gmra.mxu0 %v3014
  %v3346 = vpop.f32.mrf.mxu0
  %v3347 = vadd.f32 %v3258, %v3346
  %v3348 = vpop.f32.mrf.mxu0
  %v3349 = vadd.f32 %v3260, %v3348
  %3350 = vmatmul.bf16.gmra.mxu0 %v3016
  %v3351 = vpop.f32.mrf.mxu0
  %v3352 = vadd.f32 %v3263, %v3351
  %v3353 = vpop.f32.mrf.mxu0
  %v3354 = vadd.f32 %v3265, %v3353
  %3355 = vmatmul.bf16.gmra.mxu0 %v3018
  %v3356 = vpop.f32.mrf.mxu0
  %v3357 = vadd.f32 %v3268, %v3356
  %v3358 = vpop.f32.mrf.mxu0
  %v3359 = vadd.f32 %v3270, %v3358
  %3360 = vmatmul.bf16.gmra.mxu0 %v3020
  %v3361 = vpop.f32.mrf.mxu0
  %v3362 = vadd.f32 %v3273, %v3361
  %v3363 = vpop.f32.mrf.mxu0
  %v3364 = vadd.f32 %v3275, %v3363
  %3365 = vmatmul.bf16.gmra.mxu0 %v3022
  %v3366 = vpop.f32.mrf.mxu0
  %v3367 = vadd.f32 %v3278, %v3366
  %v3368 = vpop.f32.mrf.mxu0
  %v3369 = vadd.f32 %v3280, %v3368
  %3370 = vmatmul.bf16.gmra.mxu0 %v3024
  %v3371 = vpop.f32.mrf.mxu0
  %v3372 = vadd.f32 %v3283, %v3371
  %v3373 = vpop.f32.mrf.mxu0
  %v3374 = vadd.f32 %v3285, %v3373
  %3375 = vmatmul.bf16.gmra.mxu0 %v3026
  %v3376 = vpop.f32.mrf.mxu0
  %v3377 = vadd.f32 %v3288, %v3376
  %v3378 = vpop.f32.mrf.mxu0
  %v3379 = vadd.f32 %v3290, %v3378
  %3380 = vmatmul.bf16.gmra.mxu0 %v3028
  %v3381 = vpop.f32.mrf.mxu0
  %v3382 = vadd.f32 %v3293, %v3381
  %v3383 = vpop.f32.mrf.mxu0
  %v3384 = vadd.f32 %v3295, %v3383
  %3385 = vmatmul.bf16.gmra.mxu0 %v3030
  %v3386 = vpop.f32.mrf.mxu0
  %v3387 = vadd.f32 %v3298, %v3386
  %v3388 = vpop.f32.mrf.mxu0
  %v3389 = vadd.f32 %v3300, %v3388
  %3390 = vmatmul.bf16.gmra.mxu0 %v3032
  %v3391 = vpop.f32.mrf.mxu0
  %v3392 = vadd.f32 %v3303, %v3391
  %v3393 = vpop.f32.mrf.mxu0
  %v3394 = vadd.f32 %v3305, %v3393
  %3395 = vmatmul.bf16.gmra.mxu0 %v3034
  %v3396 = vpop.f32.mrf.mxu0
  %v3397 = vadd.f32 %v3308, %v3396
  %v3398 = vpop.f32.mrf.mxu0
  %v3399 = vadd.f32 %v3310, %v3398
  %3400 = vmatmul.bf16.gmra.mxu0 %v3036
  %v3401 = vpop.f32.mrf.mxu0
  %v3402 = vadd.f32 %v3313, %v3401
  %v3403 = vpop.f32.mrf.mxu0
  %v3404 = vadd.f32 %v3315, %v3403
  %3405 = vmatmul.bf16.gmra.mxu0 %v3038
  %v3406 = vpop.f32.mrf.mxu0
  %v3407 = vadd.f32 %v3318, %v3406
  %v3408 = vpop.f32.mrf.mxu0
  %v3409 = vadd.f32 %v3320, %v3408
  %3410 = vmatmul.bf16.gmra.mxu0 %v3040
  %v3411 = vpop.f32.mrf.mxu0
  %v3412 = vadd.f32 %v3323, %v3411
  %v3413 = vpop.f32.mrf.mxu0
  %v3414 = vadd.f32 %v3325, %v3413
  %3415 = vmatmul.bf16.gmra.mxu0 %v3042
  %v3416 = vpop.f32.mrf.mxu0
  %v3417 = vadd.f32 %v3328, %v3416
  %v3418 = vpop.f32.mrf.mxu0
  %v3419 = vadd.f32 %v3330, %v3418
  %3420 = vdwg.mxu0
  %3421 = vmatpush.bf16.msra.mxu0 %v3194
  %3422 = vmatpush.bf16.msra.mxu0 %v3192
  %3423 = vmatpush.bf16.msra.mxu0 %v3190
  %3424 = vmatpush.bf16.msra.mxu0 %v3188
  %3425 = vmatpush.bf16.msra.mxu0 %v3186
  %3426 = vmatpush.bf16.msra.mxu0 %v3184
  %3427 = vmatpush.bf16.msra.mxu0 %v3182
  %3428 = vmatpush.bf16.msra.mxu0 %v3180
  %3429 = vmatmul.bf16.gmra.mxu0 %v3011
  %v3430 = vpop.f32.mrf.mxu0
  %v3431 = vadd.f32 %v3080, %v3430
  %v3432 = vpop.f32.mrf.mxu0
  %v3433 = vadd.f32 %v3080, %v3432
  %3434 = vmatmul.bf16.gmra.mxu0 %v3013
  %v3435 = vpop.f32.mrf.mxu0
  %v3436 = vadd.f32 %v3080, %v3435
  %v3437 = vpop.f32.mrf.mxu0
  %v3438 = vadd.f32 %v3080, %v3437
  %3439 = vmatmul.bf16.gmra.mxu0 %v3015
  %v3440 = vpop.f32.mrf.mxu0
  %v3441 = vadd.f32 %v3080, %v3440
  %v3442 = vpop.f32.mrf.mxu0
  %v3443 = vadd.f32 %v3080, %v3442
  %3444 = vmatmul.bf16.gmra.mxu0 %v3017
  %v3445 = vpop.f32.mrf.mxu0
  %v3446 = vadd.f32 %v3080, %v3445
  %v3447 = vpop.f32.mrf.mxu0
  %v3448 = vadd.f32 %v3080, %v3447
  %3449 = vmatmul.bf16.gmra.mxu0 %v3019
  %v3450 = vpop.f32.mrf.mxu0
  %v3451 = vadd.f32 %v3080, %v3450
  %v3452 = vpop.f32.mrf.mxu0
  %v3453 = vadd.f32 %v3080, %v3452
  %3454 = vmatmul.bf16.gmra.mxu0 %v3021
  %v3455 = vpop.f32.mrf.mxu0
  %v3456 = vadd.f32 %v3080, %v3455
  %v3457 = vpop.f32.mrf.mxu0
  %v3458 = vadd.f32 %v3080, %v3457
  %3459 = vmatmul.bf16.gmra.mxu0 %v3023
  %v3460 = vpop.f32.mrf.mxu0
  %v3461 = vadd.f32 %v3080, %v3460
  %v3462 = vpop.f32.mrf.mxu0
  %v3463 = vadd.f32 %v3080, %v3462
  %3464 = vmatmul.bf16.gmra.mxu0 %v3025
  %v3465 = vpop.f32.mrf.mxu0
  %v3466 = vadd.f32 %v3080, %v3465
  %v3467 = vpop.f32.mrf.mxu0
  %v3468 = vadd.f32 %v3080, %v3467
  %3469 = vmatmul.bf16.gmra.mxu0 %v3027
  %v3470 = vpop.f32.mrf.mxu0
  %v3471 = vadd.f32 %v3080, %v3470
  %v3472 = vpop.f32.mrf.mxu0
  %v3473 = vadd.f32 %v3080, %v3472
  %3474 = vmatmul.bf16.gmra.mxu0 %v3029
  %v3475 = vpop.f32.mrf.mxu0
  %v3476 = vadd.f32 %v3080, %v3475
  %v3477 = vpop.f32.mrf.mxu0
  %v3478 = vadd.f32 %v3080, %v3477
  %3479 = vmatmul.bf16.gmra.mxu0 %v3031
  %v3480 = vpop.f32.mrf.mxu0
  %v3481 = vadd.f32 %v3080, %v3480
  %v3482 = vpop.f32.mrf.mxu0
  %v3483 = vadd.f32 %v3080, %v3482
  %3484 = vmatmul.bf16.gmra.mxu0 %v3033
  %v3485 = vpop.f32.mrf.mxu0
  %v3486 = vadd.f32 %v3080, %v3485
  %v3487 = vpop.f32.mrf.mxu0
  %v3488 = vadd.f32 %v3080, %v3487
  %3489 = vmatmul.bf16.gmra.mxu0 %v3035
  %v3490 = vpop.f32.mrf.mxu0
  %v3491 = vadd.f32 %v3080, %v3490
  %v3492 = vpop.f32.mrf.mxu0
  %v3493 = vadd.f32 %v3080, %v3492
  %3494 = vmatmul.bf16.gmra.mxu0 %v3037
  %v3495 = vpop.f32.mrf.mxu0
  %v3496 = vadd.f32 %v3080, %v3495
  %v3497 = vpop.f32.mrf.mxu0
  %v3498 = vadd.f32 %v3080, %v3497
  %3499 = vmatmul.bf16.gmra.mxu0 %v3039
  %v3500 = vpop.f32.mrf.mxu0
  %v3501 = vadd.f32 %v3080, %v3500
  %v3502 = vpop.f32.mrf.mxu0
  %v3503 = vadd.f32 %v3080, %v3502
  %3504 = vmatmul.bf16.gmra.mxu0 %v3041
  %v3505 = vpop.f32.mrf.mxu0
  %v3506 = vadd.f32 %v3080, %v3505
  %v3507 = vpop.f32.mrf.mxu0
  %v3508 = vadd.f32 %v3080, %v3507
  %3509 = vdwg.mxu0
  %3510 = vmatpush.bf16.msra.mxu0 %v3210
  %3511 = vmatpush.bf16.msra.mxu0 %v3208
  %3512 = vmatpush.bf16.msra.mxu0 %v3206
  %3513 = vmatpush.bf16.msra.mxu0 %v3204
  %3514 = vmatpush.bf16.msra.mxu0 %v3202
  %3515 = vmatpush.bf16.msra.mxu0 %v3200
  %3516 = vmatpush.bf16.msra.mxu0 %v3198
  %3517 = vmatpush.bf16.msra.mxu0 %v3196
  %3518 = vmatmul.bf16.gmra.mxu0 %v3012
  %v3519 = vpop.f32.mrf.mxu0
  %v3520 = vadd.f32 %v3431, %v3519
  %v3521 = vpop.f32.mrf.mxu0
  %v3522 = vadd.f32 %v3433, %v3521
  %3523 = vmatmul.bf16.gmra.mxu0 %v3014
  %v3524 = vpop.f32.mrf.mxu0
  %v3525 = vadd.f32 %v3436, %v3524
  %v3526 = vpop.f32.mrf.mxu0
  %v3527 = vadd.f32 %v3438, %v3526
  %3528 = vmatmul.bf16.gmra.mxu0 %v3016
  %v3529 = vpop.f32.mrf.mxu0
  %v3530 = vadd.f32 %v3441, %v3529
  %v3531 = vpop.f32.mrf.mxu0
  %v3532 = vadd.f32 %v3443, %v3531
  %3533 = vmatmul.bf16.gmra.mxu0 %v3018
  %v3534 = vpop.f32.mrf.mxu0
  %v3535 = vadd.f32 %v3446, %v3534
  %v3536 = vpop.f32.mrf.mxu0
  %v3537 = vadd.f32 %v3448, %v3536
  %3538 = vmatmul.bf16.gmra.mxu0 %v3020
  %v3539 = vpop.f32.mrf.mxu0
  %v3540 = vadd.f32 %v3451, %v3539
  %v3541 = vpop.f32.mrf.mxu0
  %v3542 = vadd.f32 %v3453, %v3541
  %3543 = vmatmul.bf16.gmra.mxu0 %v3022
  %v3544 = vpop.f32.mrf.mxu0
  %v3545 = vadd.f32 %v3456, %v3544
  %v3546 = vpop.f32.mrf.mxu0
  %v3547 = vadd.f32 %v3458, %v3546
  %3548 = vmatmul.bf16.gmra.mxu0 %v3024
  %v3549 = vpop.f32.mrf.mxu0
  %v3550 = vadd.f32 %v3461, %v3549
  %v3551 = vpop.f32.mrf.mxu0
  %v3552 = vadd.f32 %v3463, %v3551
  %3553 = vmatmul.bf16.gmra.mxu0 %v3026
  %v3554 = vpop.f32.mrf.mxu0
  %v3555 = vadd.f32 %v3466, %v3554
  %v3556 = vpop.f32.mrf.mxu0
  %v3557 = vadd.f32 %v3468, %v3556
  %3558 = vmatmul.bf16.gmra.mxu0 %v3028
  %v3559 = vpop.f32.mrf.mxu0
  %v3560 = vadd.f32 %v3471, %v3559
  %v3561 = vpop.f32.mrf.mxu0
  %v3562 = vadd.f32 %v3473, %v3561
  %3563 = vmatmul.bf16.gmra.mxu0 %v3030
  %v3564 = vpop.f32.mrf.mxu0
  %v3565 = vadd.f32 %v3476, %v3564
  %v3566 = vpop.f32.mrf.mxu0
  %v3567 = vadd.f32 %v3478, %v3566
  %3568 = vmatmul.bf16.gmra.mxu0 %v3032
  %v3569 = vpop.f32.mrf.mxu0
  %v3570 = vadd.f32 %v3481, %v3569
  %v3571 = vpop.f32.mrf.mxu0
  %v3572 = vadd.f32 %v3483, %v3571
  %3573 = vmatmul.bf16.gmra.mxu0 %v3034
  %v3574 = vpop.f32.mrf.mxu0
  %v3575 = vadd.f32 %v3486, %v3574
  %v3576 = vpop.f32.mrf.mxu0
  %v3577 = vadd.f32 %v3488, %v3576
  %3578 = vmatmul.bf16.gmra.mxu0 %v3036
  %v3579 = vpop.f32.mrf.mxu0
  %v3580 = vadd.f32 %v3491, %v3579
  %v3581 = vpop.f32.mrf.mxu0
  %v3582 = vadd.f32 %v3493, %v3581
  %3583 = vmatmul.bf16.gmra.mxu0 %v3038
  %v3584 = vpop.f32.mrf.mxu0
  %v3585 = vadd.f32 %v3496, %v3584
  %v3586 = vpop.f32.mrf.mxu0
  %v3587 = vadd.f32 %v3498, %v3586
  %3588 = vmatmul.bf16.gmra.mxu0 %v3040
  %v3589 = vpop.f32.mrf.mxu0
  %v3590 = vadd.f32 %v3501, %v3589
  %v3591 = vpop.f32.mrf.mxu0
  %v3592 = vadd.f32 %v3503, %v3591
  %3593 = vmatmul.bf16.gmra.mxu0 %v3042
  %v3594 = vpop.f32.mrf.mxu0
  %v3595 = vadd.f32 %v3506, %v3594
  %v3596 = vpop.f32.mrf.mxu0
  %v3597 = vadd.f32 %v3508, %v3596
  %3598 = vdwg.mxu0
  %v3599 = vmax.f32 %v3342, 0.0
  %v3600 = vmax.f32 %v3520, 0.0
  %v3601 = vmax.f32 %v3344, 0.0
  %v3602 = vmax.f32 %v3522, 0.0
  %v3603 = vmax.f32 %v3347, 0.0
  %v3604 = vmax.f32 %v3525, 0.0
  %v3605 = vmax.f32 %v3349, 0.0
  %v3606 = vmax.f32 %v3527, 0.0
  %v3607 = vmax.f32 %v3352, 0.0
  %v3608 = vmax.f32 %v3530, 0.0
  %v3609 = vmax.f32 %v3354, 0.0
  %v3610 = vmax.f32 %v3532, 0.0
  %v3611 = vmax.f32 %v3357, 0.0
  %v3612 = vmax.f32 %v3535, 0.0
  %v3613 = vmax.f32 %v3359, 0.0
  %v3614 = vmax.f32 %v3537, 0.0
  %v3615 = vmax.f32 %v3362, 0.0
  %v3616 = vmax.f32 %v3540, 0.0
  %v3617 = vmax.f32 %v3364, 0.0
  %v3618 = vmax.f32 %v3542, 0.0
  %v3619 = vmax.f32 %v3367, 0.0
  %v3620 = vmax.f32 %v3545, 0.0
  %v3621 = vmax.f32 %v3369, 0.0
  %v3622 = vmax.f32 %v3547, 0.0
  %v3623 = vmax.f32 %v3372, 0.0
  %v3624 = vmax.f32 %v3550, 0.0
  %v3625 = vmax.f32 %v3374, 0.0
  %v3626 = vmax.f32 %v3552, 0.0
  %v3627 = vmax.f32 %v3377, 0.0
  %v3628 = vmax.f32 %v3555, 0.0
  %v3629 = vmax.f32 %v3379, 0.0
  %v3630 = vmax.f32 %v3557, 0.0
  %v3631 = vmax.f32 %v3382, 0.0
  %v3632 = vmax.f32 %v3560, 0.0
  %v3633 = vmax.f32 %v3384, 0.0
  %v3634 = vmax.f32 %v3562, 0.0
  %v3635 = vmax.f32 %v3387, 0.0
  %v3636 = vmax.f32 %v3565, 0.0
  %v3637 = vmax.f32 %v3389, 0.0
  %v3638 = vmax.f32 %v3567, 0.0
  %v3639 = vmax.f32 %v3392, 0.0
  %v3640 = vmax.f32 %v3570, 0.0
  %v3641 = vmax.f32 %v3394, 0.0
  %v3642 = vmax.f32 %v3572, 0.0
  %v3643 = vmax.f32 %v3397, 0.0
  %v3644 = vmax.f32 %v3575, 0.0
  %v3645 = vmax.f32 %v3399, 0.0
  %v3646 = vmax.f32 %v3577, 0.0
  %v3647 = vmax.f32 %v3402, 0.0
  %v3648 = vmax.f32 %v3580, 0.0
  %v3649 = vmax.f32 %v3404, 0.0
  %v3650 = vmax.f32 %v3582, 0.0
  %v3651 = vmax.f32 %v3407, 0.0
  %v3652 = vmax.f32 %v3585, 0.0
  %v3653 = vmax.f32 %v3409, 0.0
  %v3654 = vmax.f32 %v3587, 0.0
  %v3655 = vmax.f32 %v3412, 0.0
  %v3656 = vmax.f32 %v3590, 0.0
  %v3657 = vmax.f32 %v3414, 0.0
  %v3658 = vmax.f32 %v3592, 0.0
  %v3659 = vmax.f32 %v3417, 0.0
  %v3660 = vmax.f32 %v3595, 0.0
  %v3661 = vmax.f32 %v3419, 0.0
  %v3662 = vmax.f32 %v3597, 0.0
  %v3663 = vpack.c.bf16 %v3601, %v3599
  %v3664 = vpack.c.bf16 %v3602, %v3600
  %v3665 = vpack.c.bf16 %v3605, %v3603
  %v3666 = vpack.c.bf16 %v3606, %v3604
  %v3667 = vpack.c.bf16 %v3609, %v3607
  %v3668 = vpack.c.bf16 %v3610, %v3608
  %v3669 = vpack.c.bf16 %v3613, %v3611
  %v3670 = vpack.c.bf16 %v3614, %v3612
  %v3671 = vpack.c.bf16 %v3617, %v3615
  %v3672 = vpack.c.bf16 %v3618, %v3616
  %v3673 = vpack.c.bf16 %v3621, %v3619
  %v3674 = vpack.c.bf16 %v3622, %v3620
  %v3675 = vpack.c.bf16 %v3625, %v3623
  %v3676 = vpack.c.bf16 %v3626, %v3624
  %v3677 = vpack.c.bf16 %v3629, %v3627
  %v3678 = vpack.c.bf16 %v3630, %v3628
  %v3679 = vpack.c.bf16 %v3633, %v3631
  %v3680 = vpack.c.bf16 %v3634, %v3632
  %v3681 = vpack.c.bf16 %v3637, %v3635
  %v3682 = vpack.c.bf16 %v3638, %v3636
  %v3683 = vpack.c.bf16 %v3641, %v3639
  %v3684 = vpack.c.bf16 %v3642, %v3640
  %v3685 = vpack.c.bf16 %v3645, %v3643
  %v3686 = vpack.c.bf16 %v3646, %v3644
  %v3687 = vpack.c.bf16 %v3649, %v3647
  %v3688 = vpack.c.bf16 %v3650, %v3648
  %v3689 = vpack.c.bf16 %v3653, %v3651
  %v3690 = vpack.c.bf16 %v3654, %v3652
  %v3691 = vpack.c.bf16 %v3657, %v3655
  %v3692 = vpack.c.bf16 %v3658, %v3656
  %v3693 = vpack.c.bf16 %v3661, %v3659
  %v3694 = vpack.c.bf16 %v3662, %v3660
  %s3695 = scalar_lea.vmem %s7, 256
  %v3696 = vld [vmem:[%s3695] sm:$0xff]
  %v3697 = vld [vmem:[%s3695 + $0x8] sm:$0xff]
  %v3698 = vld [vmem:[%s3695 + $0x10] sm:$0xff]
  %v3699 = vld [vmem:[%s3695 + $0x18] sm:$0xff]
  %v3700 = vld [vmem:[%s3695 + $0x20] sm:$0xff]
  %v3701 = vld [vmem:[%s3695 + $0x28] sm:$0xff]
  %v3702 = vld [vmem:[%s3695 + $0x30] sm:$0xff]
  %v3703 = vld [vmem:[%s3695 + $0x38] sm:$0xff]
  %v3704 = vld [vmem:[%s3695 + $0x40] sm:$0xff]
  %v3705 = vld [vmem:[%s3695 + $0x48] sm:$0xff]
  %v3706 = vld [vmem:[%s3695 + $0x50] sm:$0xff]
  %v3707 = vld [vmem:[%s3695 + $0x58] sm:$0xff]
  %v3708 = vld [vmem:[%s3695 + $0x60] sm:$0xff]
  %v3709 = vld [vmem:[%s3695 + $0x68] sm:$0xff]
  %v3710 = vld [vmem:[%s3695 + $0x70] sm:$0xff]
  %v3711 = vld [vmem:[%s3695 + $0x78] sm:$0xff]
  %v3712 = vld [vmem:[%s3695 + $0x80] sm:$0xff]
  %v3713 = vld [vmem:[%s3695 + $0x88] sm:$0xff]
  %v3714 = vld [vmem:[%s3695 + $0x90] sm:$0xff]
  %v3715 = vld [vmem:[%s3695 + $0x98] sm:$0xff]
  %v3716 = vld [vmem:[%s3695 + $0xa0] sm:$0xff]
  %v3717 = vld [vmem:[%s3695 + $0xa8] sm:$0xff]
  %v3718 = vld [vmem:[%s3695 + $0xb0] sm:$0xff]
  %v3719 = vld [vmem:[%s3695 + $0xb8] sm:$0xff]
  %v3720 = vld [vmem:[%s3695 + $0xc0] sm:$0xff]
  %v3721 = vld [vmem:[%s3695 + $0xc8] sm:$0xff]
  %v3722 = vld [vmem:[%s3695 + $0xd0] sm:$0xff]
  %v3723 = vld [vmem:[%s3695 + $0xd8] sm:$0xff]
  %v3724 = vld [vmem:[%s3695 + $0xe0] sm:$0xff]
  %v3725 = vld [vmem:[%s3695 + $0xe8] sm:$0xff]
  %v3726 = vld [vmem:[%s3695 + $0xf0] sm:$0xff]
  %v3727 = vld [vmem:[%s3695 + $0xf8] sm:$0xff]
  %s3728 = scalar_lea.vmem %s8, 2
  %v3729 = vld [vmem:[%s3728] sm:$0x3]
  %v3731 = vperm.slane %v3729, 0
  %v3732 = vperm.slane %v3729, 1
  %v3767 = vunpack.c.l.b16 %v3696
  %v3768 = vunpack.c.h.b16 %v3696
  %v3769 = vunpack.c.l.b16 %v3697
  %v3770 = vunpack.c.h.b16 %v3697
  %v3771 = vunpack.c.l.b16 %v3698
  %v3772 = vunpack.c.h.b16 %v3698
  %v3773 = vunpack.c.l.b16 %v3699
  %v3774 = vunpack.c.h.b16 %v3699
  %v3775 = vunpack.c.l.b16 %v3700
  %v3776 = vunpack.c.h.b16 %v3700
  %v3777 = vunpack.c.l.b16 %v3701
  %v3778 = vunpack.c.h.b16 %v3701
  %v3779 = vunpack.c.l.b16 %v3702
  %v3780 = vunpack.c.h.b16 %v3702
  %v3781 = vunpack.c.l.b16 %v3703
  %v3782 = vunpack.c.h.b16 %v3703
  %v3783 = vunpack.c.l.b16 %v3704
  %v3784 = vunpack.c.h.b16 %v3704
  %v3785 = vunpack.c.l.b16 %v3705
  %v3786 = vunpack.c.h.b16 %v3705
  %v3787 = vunpack.c.l.b16 %v3706
  %v3788 = vunpack.c.h.b16 %v3706
  %v3789 = vunpack.c.l.b16 %v3707
  %v3790 = vunpack.c.h.b16 %v3707
  %v3791 = vunpack.c.l.b16 %v3708
  %v3792 = vunpack.c.h.b16 %v3708
  %v3793 = vunpack.c.l.b16 %v3709
  %v3794 = vunpack.c.h.b16 %v3709
  %v3795 = vunpack.c.l.b16 %v3710
  %v3796 = vunpack.c.h.b16 %v3710
  %v3797 = vunpack.c.l.b16 %v3711
  %v3798 = vunpack.c.h.b16 %v3711
  %v3799 = vunpack.c.l.b16 %v3712
  %v3800 = vunpack.c.h.b16 %v3712
  %v3801 = vunpack.c.l.b16 %v3713
  %v3802 = vunpack.c.h.b16 %v3713
  %v3803 = vunpack.c.l.b16 %v3714
  %v3804 = vunpack.c.h.b16 %v3714
  %v3805 = vunpack.c.l.b16 %v3715
  %v3806 = vunpack.c.h.b16 %v3715
  %v3807 = vunpack.c.l.b16 %v3716
  %v3808 = vunpack.c.h.b16 %v3716
  %v3809 = vunpack.c.l.b16 %v3717
  %v3810 = vunpack.c.h.b16 %v3717
  %v3811 = vunpack.c.l.b16 %v3718
  %v3812 = vunpack.c.h.b16 %v3718
  %v3813 = vunpack.c.l.b16 %v3719
  %v3814 = vunpack.c.h.b16 %v3719
  %v3815 = vunpack.c.l.b16 %v3720
  %v3816 = vunpack.c.h.b16 %v3720
  %v3817 = vunpack.c.l.b16 %v3721
  %v3818 = vunpack.c.h.b16 %v3721
  %v3819 = vunpack.c.l.b16 %v3722
  %v3820 = vunpack.c.h.b16 %v3722
  %v3821 = vunpack.c.l.b16 %v3723
  %v3822 = vunpack.c.h.b16 %v3723
  %v3823 = vunpack.c.l.b16 %v3724
  %v3824 = vunpack.c.h.b16 %v3724
  %v3825 = vunpack.c.l.b16 %v3725
  %v3826 = vunpack.c.h.b16 %v3725
  %v3827 = vunpack.c.l.b16 %v3726
  %v3828 = vunpack.c.h.b16 %v3726
  %v3829 = vunpack.c.l.b16 %v3727
  %v3830 = vunpack.c.h.b16 %v3727
  %v3831 = vpack.c.b16 %v3769, %v3767
  %v3832 = vpack.c.b16 %v3770, %v3768
  %v3833 = vpack.c.b16 %v3773, %v3771
  %v3834 = vpack.c.b16 %v3774, %v3772
  %v3835 = vpack.c.b16 %v3777, %v3775
  %v3836 = vpack.c.b16 %v3778, %v3776
  %v3837 = vpack.c.b16 %v3781, %v3779
  %v3838 = vpack.c.b16 %v3782, %v3780
  %v3839 = vpack.c.b16 %v3785, %v3783
  %v3840 = vpack.c.b16 %v3786, %v3784
  %v3841 = vpack.c.b16 %v3789, %v3787
  %v3842 = vpack.c.b16 %v3790, %v3788
  %v3843 = vpack.c.b16 %v3793, %v3791
  %v3844 = vpack.c.b16 %v3794, %v3792
  %v3845 = vpack.c.b16 %v3797, %v3795
  %v3846 = vpack.c.b16 %v3798, %v3796
  %v3847 = vpack.c.b16 %v3801, %v3799
  %v3848 = vpack.c.b16 %v3802, %v3800
  %v3849 = vpack.c.b16 %v3805, %v3803
  %v3850 = vpack.c.b16 %v3806, %v3804
  %v3851 = vpack.c.b16 %v3809, %v3807
  %v3852 = vpack.c.b16 %v3810, %v3808
  %v3853 = vpack.c.b16 %v3813, %v3811
  %v3854 = vpack.c.b16 %v3814, %v3812
  %v3855 = vpack.c.b16 %v3817, %v3815
  %v3856 = vpack.c.b16 %v3818, %v3816
  %v3857 = vpack.c.b16 %v3821, %v3819
  %v3858 = vpack.c.b16 %v3822, %v3820
  %v3859 = vpack.c.b16 %v3825, %v3823
  %v3860 = vpack.c.b16 %v3826, %v3824
  %v3861 = vpack.c.b16 %v3829, %v3827
  %v3862 = vpack.c.b16 %v3830, %v3828
  %3895 = vmatpush.bf16.msra.mxu0 %v3845
  %3896 = vmatpush.bf16.msra.mxu0 %v3843
  %3897 = vmatpush.bf16.msra.mxu0 %v3841
  %3898 = vmatpush.bf16.msra.mxu0 %v3839
  %3899 = vmatpush.bf16.msra.mxu0 %v3837
  %3900 = vmatpush.bf16.msra.mxu0 %v3835
  %3901 = vmatpush.bf16.msra.mxu0 %v3833
  %3902 = vmatpush.bf16.msra.mxu0 %v3831
  %3903 = vmatmul.bf16.gmra.mxu0 %v3663
  %v3904 = vpop.f32.mrf.mxu0
  %v3905 = vadd.f32 %v3731, %v3904
  %v3906 = vpop.f32.mrf.mxu0
  %v3907 = vadd.f32 %v3731, %v3906
  %3908 = vmatmul.bf16.gmra.mxu0 %v3665
  %v3909 = vpop.f32.mrf.mxu0
  %v3910 = vadd.f32 %v3731, %v3909
  %v3911 = vpop.f32.mrf.mxu0
  %v3912 = vadd.f32 %v3731, %v3911
  %3913 = vmatmul.bf16.gmra.mxu0 %v3667
  %v3914 = vpop.f32.mrf.mxu0
  %v3915 = vadd.f32 %v3731, %v3914
  %v3916 = vpop.f32.mrf.mxu0
  %v3917 = vadd.f32 %v3731, %v3916
  %3918 = vmatmul.bf16.gmra.mxu0 %v3669
  %v3919 = vpop.f32.mrf.mxu0
  %v3920 = vadd.f32 %v3731, %v3919
  %v3921 = vpop.f32.mrf.mxu0
  %v3922 = vadd.f32 %v3731, %v3921
  %3923 = vmatmul.bf16.gmra.mxu0 %v3671
  %v3924 = vpop.f32.mrf.mxu0
  %v3925 = vadd.f32 %v3731, %v3924
  %v3926 = vpop.f32.mrf.mxu0
  %v3927 = vadd.f32 %v3731, %v3926
  %3928 = vmatmul.bf16.gmra.mxu0 %v3673
  %v3929 = vpop.f32.mrf.mxu0
  %v3930 = vadd.f32 %v3731, %v3929
  %v3931 = vpop.f32.mrf.mxu0
  %v3932 = vadd.f32 %v3731, %v3931
  %3933 = vmatmul.bf16.gmra.mxu0 %v3675
  %v3934 = vpop.f32.mrf.mxu0
  %v3935 = vadd.f32 %v3731, %v3934
  %v3936 = vpop.f32.mrf.mxu0
  %v3937 = vadd.f32 %v3731, %v3936
  %3938 = vmatmul.bf16.gmra.mxu0 %v3677
  %v3939 = vpop.f32.mrf.mxu0
  %v3940 = vadd.f32 %v3731, %v3939
  %v3941 = vpop.f32.mrf.mxu0
  %v3942 = vadd.f32 %v3731, %v3941
  %3943 = vmatmul.bf16.gmra.mxu0 %v3679
  %v3944 = vpop.f32.mrf.mxu0
  %v3945 = vadd.f32 %v3731, %v3944
  %v3946 = vpop.f32.mrf.mxu0
  %v3947 = vadd.f32 %v3731, %v3946
  %3948 = vmatmul.bf16.gmra.mxu0 %v3681
  %v3949 = vpop.f32.mrf.mxu0
  %v3950 = vadd.f32 %v3731, %v3949
  %v3951 = vpop.f32.mrf.mxu0
  %v3952 = vadd.f32 %v3731, %v3951
  %3953 = vmatmul.bf16.gmra.mxu0 %v3683
  %v3954 = vpop.f32.mrf.mxu0
  %v3955 = vadd.f32 %v3731, %v3954
  %v3956 = vpop.f32.mrf.mxu0
  %v3957 = vadd.f32 %v3731, %v3956
  %3958 = vmatmul.bf16.gmra.mxu0 %v3685
  %v3959 = vpop.f32.mrf.mxu0
  %v3960 = vadd.f32 %v3731, %v3959
  %v3961 = vpop.f32.mrf.mxu0
  %v3962 = vadd.f32 %v3731, %v3961
  %3963 = vmatmul.bf16.gmra.mxu0 %v3687
  %v3964 = vpop.f32.mrf.mxu0
  %v3965 = vadd.f32 %v3731, %v3964
  %v3966 = vpop.f32.mrf.mxu0
  %v3967 = vadd.f32 %v3731, %v3966
  %3968 = vmatmul.bf16.gmra.mxu0 %v3689
  %v3969 = vpop.f32.mrf.mxu0
  %v3970 = vadd.f32 %v3731, %v3969
  %v3971 = vpop.f32.mrf.mxu0
  %v3972 = vadd.f32 %v3731, %v3971
  %3973 = vmatmul.bf16.gmra.mxu0 %v3691
  %v3974 = vpop.f32.mrf.mxu0
  %v3975 = vadd.f32 %v3731, %v3974
  %v3976 = vpop.f32.mrf.mxu0
  %v3977 = vadd.f32 %v3731, %v3976
  %3978 = vmatmul.bf16.gmra.mxu0 %v3693
  %v3979 = vpop.f32.mrf.mxu0
  %v3980 = vadd.f32 %v3731, %v3979
  %v3981 = vpop.f32.mrf.mxu0
  %v3982 = vadd.f32 %v3731, %v3981
  %3983 = vdwg.mxu0
  %3984 = vmatpush.bf16.msra.mxu0 %v3861
  %3985 = vmatpush.bf16.msra.mxu0 %v3859
  %3986 = vmatpush.bf16.msra.mxu0 %v3857
  %3987 = vmatpush.bf16.msra.mxu0 %v3855
  %3988 = vmatpush.bf16.msra.mxu0 %v3853
  %3989 = vmatpush.bf16.msra.mxu0 %v3851
  %3990 = vmatpush.bf16.msra.mxu0 %v3849
  %3991 = vmatpush.bf16.msra.mxu0 %v3847
  %3992 = vmatmul.bf16.gmra.mxu0 %v3664
  %v3993 = vpop.f32.mrf.mxu0
  %v3994 = vadd.f32 %v3905, %v3993
  %v3995 = vpop.f32.mrf.mxu0
  %v3996 = vadd.f32 %v3907, %v3995
  %3997 = vmatmul.bf16.gmra.mxu0 %v3666
  %v3998 = vpop.f32.mrf.mxu0
  %v3999 = vadd.f32 %v3910, %v3998
  %v4000 = vpop.f32.mrf.mxu0
  %v4001 = vadd.f32 %v3912, %v4000
  %4002 = vmatmul.bf16.gmra.mxu0 %v3668
  %v4003 = vpop.f32.mrf.mxu0
  %v4004 = vadd.f32 %v3915, %v4003
  %v4005 = vpop.f32.mrf.mxu0
  %v4006 = vadd.f32 %v3917, %v4005
  %4007 = vmatmul.bf16.gmra.mxu0 %v3670
  %v4008 = vpop.f32.mrf.mxu0
  %v4009 = vadd.f32 %v3920, %v4008
  %v4010 = vpop.f32.mrf.mxu0
  %v4011 = vadd.f32 %v3922, %v4010
  %4012 = vmatmul.bf16.gmra.mxu0 %v3672
  %v4013 = vpop.f32.mrf.mxu0
  %v4014 = vadd.f32 %v3925, %v4013
  %v4015 = vpop.f32.mrf.mxu0
  %v4016 = vadd.f32 %v3927, %v4015
  %4017 = vmatmul.bf16.gmra.mxu0 %v3674
  %v4018 = vpop.f32.mrf.mxu0
  %v4019 = vadd.f32 %v3930, %v4018
  %v4020 = vpop.f32.mrf.mxu0
  %v4021 = vadd.f32 %v3932, %v4020
  %4022 = vmatmul.bf16.gmra.mxu0 %v3676
  %v4023 = vpop.f32.mrf.mxu0
  %v4024 = vadd.f32 %v3935, %v4023
  %v4025 = vpop.f32.mrf.mxu0
  %v4026 = vadd.f32 %v3937, %v4025
  %4027 = vmatmul.bf16.gmra.mxu0 %v3678
  %v4028 = vpop.f32.mrf.mxu0
  %v4029 = vadd.f32 %v3940, %v4028
  %v4030 = vpop.f32.mrf.mxu0
  %v4031 = vadd.f32 %v3942, %v4030
  %4032 = vmatmul.bf16.gmra.mxu0 %v3680
  %v4033 = vpop.f32.mrf.mxu0
  %v4034 = vadd.f32 %v3945, %v4033
  %v4035 = vpop.f32.mrf.mxu0
  %v4036 = vadd.f32 %v3947, %v4035
  %4037 = vmatmul.bf16.gmra.mxu0 %v3682
  %v4038 = vpop.f32.mrf.mxu0
  %v4039 = vadd.f32 %v3950, %v4038
  %v4040 = vpop.f32.mrf.mxu0
  %v4041 = vadd.f32 %v3952, %v4040
  %4042 = vmatmul.bf16.gmra.mxu0 %v3684
  %v4043 = vpop.f32.mrf.mxu0
  %v4044 = vadd.f32 %v3955, %v4043
  %v4045 = vpop.f32.mrf.mxu0
  %v4046 = vadd.f32 %v3957, %v4045
  %4047 = vmatmul.bf16.gmra.mxu0 %v3686
  %v4048 = vpop.f32.mrf.mxu0
  %v4049 = vadd.f32 %v3960, %v4048
  %v4050 = vpop.f32.mrf.mxu0
  %v4051 = vadd.f32 %v3962, %v4050
  %4052 = vmatmul.bf16.gmra.mxu0 %v3688
  %v4053 = vpop.f32.mrf.mxu0
  %v4054 = vadd.f32 %v3965, %v4053
  %v4055 = vpop.f32.mrf.mxu0
  %v4056 = vadd.f32 %v3967, %v4055
  %4057 = vmatmul.bf16.gmra.mxu0 %v3690
  %v4058 = vpop.f32.mrf.mxu0
  %v4059 = vadd.f32 %v3970, %v4058
  %v4060 = vpop.f32.mrf.mxu0
  %v4061 = vadd.f32 %v3972, %v4060
  %4062 = vmatmul.bf16.gmra.mxu0 %v3692
  %v4063 = vpop.f32.mrf.mxu0
  %v4064 = vadd.f32 %v3975, %v4063
  %v4065 = vpop.f32.mrf.mxu0
  %v4066 = vadd.f32 %v3977, %v4065
  %4067 = vmatmul.bf16.gmra.mxu0 %v3694
  %v4068 = vpop.f32.mrf.mxu0
  %v4069 = vadd.f32 %v3980, %v4068
  %v4070 = vpop.f32.mrf.mxu0
  %v4071 = vadd.f32 %v3982, %v4070
  %4072 = vdwg.mxu0
  %4073 = vmatpush.bf16.msra.mxu0 %v3846
  %4074 = vmatpush.bf16.msra.mxu0 %v3844
  %4075 = vmatpush.bf16.msra.mxu0 %v3842
  %4076 = vmatpush.bf16.msra.mxu0 %v3840
  %4077 = vmatpush.bf16.msra.mxu0 %v3838
  %4078 = vmatpush.bf16.msra.mxu0 %v3836
  %4079 = vmatpush.bf16.msra.mxu0 %v3834
  %4080 = vmatpush.bf16.msra.mxu0 %v3832
  %4081 = vmatmul.bf16.gmra.mxu0 %v3663
  %v4082 = vpop.f32.mrf.mxu0
  %v4083 = vadd.f32 %v3732, %v4082
  %v4084 = vpop.f32.mrf.mxu0
  %v4085 = vadd.f32 %v3732, %v4084
  %4086 = vmatmul.bf16.gmra.mxu0 %v3665
  %v4087 = vpop.f32.mrf.mxu0
  %v4088 = vadd.f32 %v3732, %v4087
  %v4089 = vpop.f32.mrf.mxu0
  %v4090 = vadd.f32 %v3732, %v4089
  %4091 = vmatmul.bf16.gmra.mxu0 %v3667
  %v4092 = vpop.f32.mrf.mxu0
  %v4093 = vadd.f32 %v3732, %v4092
  %v4094 = vpop.f32.mrf.mxu0
  %v4095 = vadd.f32 %v3732, %v4094
  %4096 = vmatmul.bf16.gmra.mxu0 %v3669
  %v4097 = vpop.f32.mrf.mxu0
  %v4098 = vadd.f32 %v3732, %v4097
  %v4099 = vpop.f32.mrf.mxu0
  %v4100 = vadd.f32 %v3732, %v4099
  %4101 = vmatmul.bf16.gmra.mxu0 %v3671
  %v4102 = vpop.f32.mrf.mxu0
  %v4103 = vadd.f32 %v3732, %v4102
  %v4104 = vpop.f32.mrf.mxu0
  %v4105 = vadd.f32 %v3732, %v4104
  %4106 = vmatmul.bf16.gmra.mxu0 %v3673
  %v4107 = vpop.f32.mrf.mxu0
  %v4108 = vadd.f32 %v3732, %v4107
  %v4109 = vpop.f32.mrf.mxu0
  %v4110 = vadd.f32 %v3732, %v4109
  %4111 = vmatmul.bf16.gmra.mxu0 %v3675
  %v4112 = vpop.f32.mrf.mxu0
  %v4113 = vadd.f32 %v3732, %v4112
  %v4114 = vpop.f32.mrf.mxu0
  %v4115 = vadd.f32 %v3732, %v4114
  %4116 = vmatmul.bf16.gmra.mxu0 %v3677
  %v4117 = vpop.f32.mrf.mxu0
  %v4118 = vadd.f32 %v3732, %v4117
  %v4119 = vpop.f32.mrf.mxu0
  %v4120 = vadd.f32 %v3732, %v4119
  %4121 = vmatmul.bf16.gmra.mxu0 %v3679
  %v4122 = vpop.f32.mrf.mxu0
  %v4123 = vadd.f32 %v3732, %v4122
  %v4124 = vpop.f32.mrf.mxu0
  %v4125 = vadd.f32 %v3732, %v4124
  %4126 = vmatmul.bf16.gmra.mxu0 %v3681
  %v4127 = vpop.f32.mrf.mxu0
  %v4128 = vadd.f32 %v3732, %v4127
  %v4129 = vpop.f32.mrf.mxu0
  %v4130 = vadd.f32 %v3732, %v4129
  %4131 = vmatmul.bf16.gmra.mxu0 %v3683
  %v4132 = vpop.f32.mrf.mxu0
  %v4133 = vadd.f32 %v3732, %v4132
  %v4134 = vpop.f32.mrf.mxu0
  %v4135 = vadd.f32 %v3732, %v4134
  %4136 = vmatmul.bf16.gmra.mxu0 %v3685
  %v4137 = vpop.f32.mrf.mxu0
  %v4138 = vadd.f32 %v3732, %v4137
  %v4139 = vpop.f32.mrf.mxu0
  %v4140 = vadd.f32 %v3732, %v4139
  %4141 = vmatmul.bf16.gmra.mxu0 %v3687
  %v4142 = vpop.f32.mrf.mxu0
  %v4143 = vadd.f32 %v3732, %v4142
  %v4144 = vpop.f32.mrf.mxu0
  %v4145 = vadd.f32 %v3732, %v4144
  %4146 = vmatmul.bf16.gmra.mxu0 %v3689
  %v4147 = vpop.f32.mrf.mxu0
  %v4148 = vadd.f32 %v3732, %v4147
  %v4149 = vpop.f32.mrf.mxu0
  %v4150 = vadd.f32 %v3732, %v4149
  %4151 = vmatmul.bf16.gmra.mxu0 %v3691
  %v4152 = vpop.f32.mrf.mxu0
  %v4153 = vadd.f32 %v3732, %v4152
  %v4154 = vpop.f32.mrf.mxu0
  %v4155 = vadd.f32 %v3732, %v4154
  %4156 = vmatmul.bf16.gmra.mxu0 %v3693
  %v4157 = vpop.f32.mrf.mxu0
  %v4158 = vadd.f32 %v3732, %v4157
  %v4159 = vpop.f32.mrf.mxu0
  %v4160 = vadd.f32 %v3732, %v4159
  %4161 = vdwg.mxu0
  %4162 = vmatpush.bf16.msra.mxu0 %v3862
  %4163 = vmatpush.bf16.msra.mxu0 %v3860
  %4164 = vmatpush.bf16.msra.mxu0 %v3858
  %4165 = vmatpush.bf16.msra.mxu0 %v3856
  %4166 = vmatpush.bf16.msra.mxu0 %v3854
  %4167 = vmatpush.bf16.msra.mxu0 %v3852
  %4168 = vmatpush.bf16.msra.mxu0 %v3850
  %4169 = vmatpush.bf16.msra.mxu0 %v3848
  %4170 = vmatmul.bf16.gmra.mxu0 %v3664
  %v4171 = vpop.f32.mrf.mxu0
  %v4172 = vadd.f32 %v4083, %v4171
  %v4173 = vpop.f32.mrf.mxu0
  %v4174 = vadd.f32 %v4085, %v4173
  %4175 = vmatmul.bf16.gmra.mxu0 %v3666
  %v4176 = vpop.f32.mrf.mxu0
  %v4177 = vadd.f32 %v4088, %v4176
  %v4178 = vpop.f32.mrf.mxu0
  %v4179 = vadd.f32 %v4090, %v4178
  %4180 = vmatmul.bf16.gmra.mxu0 %v3668
  %v4181 = vpop.f32.mrf.mxu0
  %v4182 = vadd.f32 %v4093, %v4181
  %v4183 = vpop.f32.mrf.mxu0
  %v4184 = vadd.f32 %v4095, %v4183
  %4185 = vmatmul.bf16.gmra.mxu0 %v3670
  %v4186 = vpop.f32.mrf.mxu0
  %v4187 = vadd.f32 %v4098, %v4186
  %v4188 = vpop.f32.mrf.mxu0
  %v4189 = vadd.f32 %v4100, %v4188
  %4190 = vmatmul.bf16.gmra.mxu0 %v3672
  %v4191 = vpop.f32.mrf.mxu0
  %v4192 = vadd.f32 %v4103, %v4191
  %v4193 = vpop.f32.mrf.mxu0
  %v4194 = vadd.f32 %v4105, %v4193
  %4195 = vmatmul.bf16.gmra.mxu0 %v3674
  %v4196 = vpop.f32.mrf.mxu0
  %v4197 = vadd.f32 %v4108, %v4196
  %v4198 = vpop.f32.mrf.mxu0
  %v4199 = vadd.f32 %v4110, %v4198
  %4200 = vmatmul.bf16.gmra.mxu0 %v3676
  %v4201 = vpop.f32.mrf.mxu0
  %v4202 = vadd.f32 %v4113, %v4201
  %v4203 = vpop.f32.mrf.mxu0
  %v4204 = vadd.f32 %v4115, %v4203
  %4205 = vmatmul.bf16.gmra.mxu0 %v3678
  %v4206 = vpop.f32.mrf.mxu0
  %v4207 = vadd.f32 %v4118, %v4206
  %v4208 = vpop.f32.mrf.mxu0
  %v4209 = vadd.f32 %v4120, %v4208
  %4210 = vmatmul.bf16.gmra.mxu0 %v3680
  %v4211 = vpop.f32.mrf.mxu0
  %v4212 = vadd.f32 %v4123, %v4211
  %v4213 = vpop.f32.mrf.mxu0
  %v4214 = vadd.f32 %v4125, %v4213
  %4215 = vmatmul.bf16.gmra.mxu0 %v3682
  %v4216 = vpop.f32.mrf.mxu0
  %v4217 = vadd.f32 %v4128, %v4216
  %v4218 = vpop.f32.mrf.mxu0
  %v4219 = vadd.f32 %v4130, %v4218
  %4220 = vmatmul.bf16.gmra.mxu0 %v3684
  %v4221 = vpop.f32.mrf.mxu0
  %v4222 = vadd.f32 %v4133, %v4221
  %v4223 = vpop.f32.mrf.mxu0
  %v4224 = vadd.f32 %v4135, %v4223
  %4225 = vmatmul.bf16.gmra.mxu0 %v3686
  %v4226 = vpop.f32.mrf.mxu0
  %v4227 = vadd.f32 %v4138, %v4226
  %v4228 = vpop.f32.mrf.mxu0
  %v4229 = vadd.f32 %v4140, %v4228
  %4230 = vmatmul.bf16.gmra.mxu0 %v3688
  %v4231 = vpop.f32.mrf.mxu0
  %v4232 = vadd.f32 %v4143, %v4231
  %v4233 = vpop.f32.mrf.mxu0
  %v4234 = vadd.f32 %v4145, %v4233
  %4235 = vmatmul.bf16.gmra.mxu0 %v3690
  %v4236 = vpop.f32.mrf.mxu0
  %v4237 = vadd.f32 %v4148, %v4236
  %v4238 = vpop.f32.mrf.mxu0
  %v4239 = vadd.f32 %v4150, %v4238
  %4240 = vmatmul.bf16.gmra.mxu0 %v3692
  %v4241 = vpop.f32.mrf.mxu0
  %v4242 = vadd.f32 %v4153, %v4241
  %v4243 = vpop.f32.mrf.mxu0
  %v4244 = vadd.f32 %v4155, %v4243
  %4245 = vmatmul.bf16.gmra.mxu0 %v3694
  %v4246 = vpop.f32.mrf.mxu0
  %v4247 = vadd.f32 %v4158, %v4246
  %v4248 = vpop.f32.mrf.mxu0
  %v4249 = vadd.f32 %v4160, %v4248
  %4250 = vdwg.mxu0
  %v4251 = vadd.f32 %v2295, %v3994
  %v4252 = vadd.f32 %v2296, %v4172
  %v4253 = vadd.f32 %v2297, %v3996
  %v4254 = vadd.f32 %v2298, %v4174
  %v4255 = vadd.f32 %v2299, %v3999
  %v4256 = vadd.f32 %v2300, %v4177
  %v4257 = vadd.f32 %v2301, %v4001
  %v4258 = vadd.f32 %v2302, %v4179
  %v4259 = vadd.f32 %v2303, %v4004
  %v4260 = vadd.f32 %v2304, %v4182
  %v4261 = vadd.f32 %v2305, %v4006
  %v4262 = vadd.f32 %v2306, %v4184
  %v4263 = vadd.f32 %v2307, %v4009
  %v4264 = vadd.f32 %v2308, %v4187
  %v4265 = vadd.f32 %v2309, %v4011
  %v4266 = vadd.f32 %v2310, %v4189
  %v4267 = vadd.f32 %v2311, %v4014
  %v4268 = vadd.f32 %v2312, %v4192
  %v4269 = vadd.f32 %v2313, %v4016
  %v4270 = vadd.f32 %v2314, %v4194
  %v4271 = vadd.f32 %v2315, %v4019
  %v4272 = vadd.f32 %v2316, %v4197
  %v4273 = vadd.f32 %v2317, %v4021
  %v4274 = vadd.f32 %v2318, %v4199
  %v4275 = vadd.f32 %v2319, %v4024
  %v4276 = vadd.f32 %v2320, %v4202
  %v4277 = vadd.f32 %v2321, %v4026
  %v4278 = vadd.f32 %v2322, %v4204
  %v4279 = vadd.f32 %v2323, %v4029
  %v4280 = vadd.f32 %v2324, %v4207
  %v4281 = vadd.f32 %v2325, %v4031
  %v4282 = vadd.f32 %v2326, %v4209
  %v4283 = vadd.f32 %v2327, %v4034
  %v4284 = vadd.f32 %v2328, %v4212
  %v4285 = vadd.f32 %v2329, %v4036
  %v4286 = vadd.f32 %v2330, %v4214
  %v4287 = vadd.f32 %v2331, %v4039
  %v4288 = vadd.f32 %v2332, %v4217
  %v4289 = vadd.f32 %v2333, %v4041
  %v4290 = vadd.f32 %v2334, %v4219
  %v4291 = vadd.f32 %v2335, %v4044
  %v4292 = vadd.f32 %v2336, %v4222
  %v4293 = vadd.f32 %v2337, %v4046
  %v4294 = vadd.f32 %v2338, %v4224
  %v4295 = vadd.f32 %v2339, %v4049
  %v4296 = vadd.f32 %v2340, %v4227
  %v4297 = vadd.f32 %v2341, %v4051
  %v4298 = vadd.f32 %v2342, %v4229
  %v4299 = vadd.f32 %v2343, %v4054
  %v4300 = vadd.f32 %v2344, %v4232
  %v4301 = vadd.f32 %v2345, %v4056
  %v4302 = vadd.f32 %v2346, %v4234
  %v4303 = vadd.f32 %v2347, %v4059
  %v4304 = vadd.f32 %v2348, %v4237
  %v4305 = vadd.f32 %v2349, %v4061
  %v4306 = vadd.f32 %v2350, %v4239
  %v4307 = vadd.f32 %v2351, %v4064
  %v4308 = vadd.f32 %v2352, %v4242
  %v4309 = vadd.f32 %v2353, %v4066
  %v4310 = vadd.f32 %v2354, %v4244
  %v4311 = vadd.f32 %v2355, %v4069
  %v4312 = vadd.f32 %v2356, %v4247
  %v4313 = vadd.f32 %v2357, %v4071
  %v4314 = vadd.f32 %v2358, %v4249
  %v4315 = vpack.c.bf16 %v4253, %v4251
  %v4316 = vpack.c.bf16 %v4254, %v4252
  %v4317 = vpack.c.bf16 %v4257, %v4255
  %v4318 = vpack.c.bf16 %v4258, %v4256
  %v4319 = vpack.c.bf16 %v4261, %v4259
  %v4320 = vpack.c.bf16 %v4262, %v4260
  %v4321 = vpack.c.bf16 %v4265, %v4263
  %v4322 = vpack.c.bf16 %v4266, %v4264
  %v4323 = vpack.c.bf16 %v4269, %v4267
  %v4324 = vpack.c.bf16 %v4270, %v4268
  %v4325 = vpack.c.bf16 %v4273, %v4271
  %v4326 = vpack.c.bf16 %v4274, %v4272
  %v4327 = vpack.c.bf16 %v4277, %v4275
  %v4328 = vpack.c.bf16 %v4278, %v4276
  %v4329 = vpack.c.bf16 %v4281, %v4279
  %v4330 = vpack.c.bf16 %v4282, %v4280
  %v4331 = vpack.c.bf16 %v4285, %v4283
  %v4332 = vpack.c.bf16 %v4286, %v4284
  %v4333 = vpack.c.bf16 %v4289, %v4287
  %v4334 = vpack.c.bf16 %v4290, %v4288
  %v4335 = vpack.c.bf16 %v4293, %v4291
  %v4336 = vpack.c.bf16 %v4294, %v4292
  %v4337 = vpack.c.bf16 %v4297, %v4295
  %v4338 = vpack.c.bf16 %v4298, %v4296
  %v4339 = vpack.c.bf16 %v4301, %v4299
  %v4340 = vpack.c.bf16 %v4302, %v4300
  %v4341 = vpack.c.bf16 %v4305, %v4303
  %v4342 = vpack.c.bf16 %v4306, %v4304
  %v4343 = vpack.c.bf16 %v4309, %v4307
  %v4344 = vpack.c.bf16 %v4310, %v4308
  %v4345 = vpack.c.bf16 %v4313, %v4311
  %v4346 = vpack.c.bf16 %v4314, %v4312
  %v4347 = vld [vmem:[%s9] sm:$0xf]
  %v4348 = vld [vmem:[%s9 + $0x4] sm:$0xf]
  %v4349 = vld [vmem:[%s9 + $0x8] sm:$0xf]
  %v4350 = vld [vmem:[%s9 + $0xc] sm:$0xf]
  %v4351 = vld [vmem:[%s9 + $0x10] sm:$0xf]
  %v4352 = vld [vmem:[%s9 + $0x14] sm:$0xf]
  %v4353 = vld [vmem:[%s9 + $0x18] sm:$0xf]
  %v4354 = vld [vmem:[%s9 + $0x1c] sm:$0xf]
  %v4355 = vld [vmem:[%s9 + $0x20] sm:$0xf]
  %v4356 = vld [vmem:[%s9 + $0x24] sm:$0xf]
  %v4357 = vld [vmem:[%s9 + $0x28] sm:$0xf]
  %v4358 = vld [vmem:[%s9 + $0x2c] sm:$0xf]
  %v4359 = vld [vmem:[%s9 + $0x30] sm:$0xf]
  %v4360 = vld [vmem:[%s9 + $0x34] sm:$0xf]
  %v4361 = vld [vmem:[%s9 + $0x38] sm:$0xf]
  %v4362 = vld [vmem:[%s9 + $0x3c] sm:$0xf]
  %v4363 = vld [vmem:[%s9 + $0x40] sm:$0xf]
  %v4364 = vld [vmem:[%s9 + $0x44] sm:$0xf]
  %v4365 = vld [vmem:[%s9 + $0x48] sm:$0xf]
  %v4366 = vld [vmem:[%s9 + $0x4c] sm:$0xf]
  %v4367 = vld [vmem:[%s9 + $0x50] sm:$0xf]
  %v4368 = vld [vmem:[%s9 + $0x54] sm:$0xf]
  %v4369 = vld [vmem:[%s9 + $0x58] sm:$0xf]
  %v4370 = vld [vmem:[%s9 + $0x5c] sm:$0xf]
  %v4371 = vld [vmem:[%s9 + $0x60] sm:$0xf]
  %v4372 = vld [vmem:[%s9 + $0x64] sm:$0xf]
  %v4373 = vld [vmem:[%s9 + $0x68] sm:$0xf]
  %v4374 = vld [vmem:[%s9 + $0x6c] sm:$0xf]
  %v4375 = vld [vmem:[%s9 + $0x70] sm:$0xf]
  %v4376 = vld [vmem:[%s9 + $0x74] sm:$0xf]
  %v4377 = vld [vmem:[%s9 + $0x78] sm:$0xf]
  %v4378 = vld [vmem:[%s9 + $0x7c] sm:$0xf]
  %v4379 = vld [vmem:[%s10] sm:$0x1]
  %v4381 = vperm.slane %v4379, 0
  %v4415 = vunpack.c.l.b16 %v4347
  %v4416 = vunpack.c.l.b16 %v4348
  %v4417 = vunpack.c.l.b16 %v4349
  %v4418 = vunpack.c.l.b16 %v4350
  %v4419 = vunpack.c.l.b16 %v4351
  %v4420 = vunpack.c.l.b16 %v4352
  %v4421 = vunpack.c.l.b16 %v4353
  %v4422 = vunpack.c.l.b16 %v4354
  %v4423 = vunpack.c.l.b16 %v4355
  %v4424 = vunpack.c.l.b16 %v4356
  %v4425 = vunpack.c.l.b16 %v4357
  %v4426 = vunpack.c.l.b16 %v4358
  %v4427 = vunpack.c.l.b16 %v4359
  %v4428 = vunpack.c.l.b16 %v4360
  %v4429 = vunpack.c.l.b16 %v4361
  %v4430 = vunpack.c.l.b16 %v4362
  %v4431 = vunpack.c.l.b16 %v4363
  %v4432 = vunpack.c.l.b16 %v4364
  %v4433 = vunpack.c.l.b16 %v4365
  %v4434 = vunpack.c.l.b16 %v4366
  %v4435 = vunpack.c.l.b16 %v4367
  %v4436 = vunpack.c.l.b16 %v4368
  %v4437 = vunpack.c.l.b16 %v4369
  %v4438 = vunpack.c.l.b16 %v4370
  %v4439 = vunpack.c.l.b16 %v4371
  %v4440 = vunpack.c.l.b16 %v4372
  %v4441 = vunpack.c.l.b16 %v4373
  %v4442 = vunpack.c.l.b16 %v4374
  %v4443 = vunpack.c.l.b16 %v4375
  %v4444 = vunpack.c.l.b16 %v4376
  %v4445 = vunpack.c.l.b16 %v4377
  %v4446 = vunpack.c.l.b16 %v4378
  %v4447 = vpack.c.b16 %v4416, %v4415
  %v4448 = vpack.c.b16 %v4418, %v4417
  %v4449 = vpack.c.b16 %v4420, %v4419
  %v4450 = vpack.c.b16 %v4422, %v4421
  %v4451 = vpack.c.b16 %v4424, %v4423
  %v4452 = vpack.c.b16 %v4426, %v4425
  %v4453 = vpack.c.b16 %v4428, %v4427
  %v4454 = vpack.c.b16 %v4430, %v4429
  %v4455 = vpack.c.b16 %v4432, %v4431
  %v4456 = vpack.c.b16 %v4434, %v4433
  %v4457 = vpack.c.b16 %v4436, %v4435
  %v4458 = vpack.c.b16 %v4438, %v4437
  %v4459 = vpack.c.b16 %v4440, %v4439
  %v4460 = vpack.c.b16 %v4442, %v4441
  %v4461 = vpack.c.b16 %v4444, %v4443
  %v4462 = vpack.c.b16 %v4446, %v4445
  %4479 = vmatpush.bf16.msra.mxu0 %v4454
  %4480 = vmatpush.bf16.msra.mxu0 %v4453
  %4481 = vmatpush.bf16.msra.mxu0 %v4452
  %4482 = vmatpush.bf16.msra.mxu0 %v4451
  %4483 = vmatpush.bf16.msra.mxu0 %v4450
  %4484 = vmatpush.bf16.msra.mxu0 %v4449
  %4485 = vmatpush.bf16.msra.mxu0 %v4448
  %4486 = vmatpush.bf16.msra.mxu0 %v4447
  %4487 = vmatmul.bf16.gmra.mxu0 %v4315
  %v4488 = vpop.f32.mrf.mxu0
  %v4489 = vadd.f32 %v4381, %v4488
  %v4490 = vpop.f32.mrf.mxu0
  %v4491 = vadd.f32 %v4381, %v4490
  %4492 = vmatmul.bf16.gmra.mxu0 %v4317
  %v4493 = vpop.f32.mrf.mxu0
  %v4494 = vadd.f32 %v4381, %v4493
  %v4495 = vpop.f32.mrf.mxu0
  %v4496 = vadd.f32 %v4381, %v4495
  %4497 = vmatmul.bf16.gmra.mxu0 %v4319
  %v4498 = vpop.f32.mrf.mxu0
  %v4499 = vadd.f32 %v4381, %v4498
  %v4500 = vpop.f32.mrf.mxu0
  %v4501 = vadd.f32 %v4381, %v4500
  %4502 = vmatmul.bf16.gmra.mxu0 %v4321
  %v4503 = vpop.f32.mrf.mxu0
  %v4504 = vadd.f32 %v4381, %v4503
  %v4505 = vpop.f32.mrf.mxu0
  %v4506 = vadd.f32 %v4381, %v4505
  %4507 = vmatmul.bf16.gmra.mxu0 %v4323
  %v4508 = vpop.f32.mrf.mxu0
  %v4509 = vadd.f32 %v4381, %v4508
  %v4510 = vpop.f32.mrf.mxu0
  %v4511 = vadd.f32 %v4381, %v4510
  %4512 = vmatmul.bf16.gmra.mxu0 %v4325
  %v4513 = vpop.f32.mrf.mxu0
  %v4514 = vadd.f32 %v4381, %v4513
  %v4515 = vpop.f32.mrf.mxu0
  %v4516 = vadd.f32 %v4381, %v4515
  %4517 = vmatmul.bf16.gmra.mxu0 %v4327
  %v4518 = vpop.f32.mrf.mxu0
  %v4519 = vadd.f32 %v4381, %v4518
  %v4520 = vpop.f32.mrf.mxu0
  %v4521 = vadd.f32 %v4381, %v4520
  %4522 = vmatmul.bf16.gmra.mxu0 %v4329
  %v4523 = vpop.f32.mrf.mxu0
  %v4524 = vadd.f32 %v4381, %v4523
  %v4525 = vpop.f32.mrf.mxu0
  %v4526 = vadd.f32 %v4381, %v4525
  %4527 = vmatmul.bf16.gmra.mxu0 %v4331
  %v4528 = vpop.f32.mrf.mxu0
  %v4529 = vadd.f32 %v4381, %v4528
  %v4530 = vpop.f32.mrf.mxu0
  %v4531 = vadd.f32 %v4381, %v4530
  %4532 = vmatmul.bf16.gmra.mxu0 %v4333
  %v4533 = vpop.f32.mrf.mxu0
  %v4534 = vadd.f32 %v4381, %v4533
  %v4535 = vpop.f32.mrf.mxu0
  %v4536 = vadd.f32 %v4381, %v4535
  %4537 = vmatmul.bf16.gmra.mxu0 %v4335
  %v4538 = vpop.f32.mrf.mxu0
  %v4539 = vadd.f32 %v4381, %v4538
  %v4540 = vpop.f32.mrf.mxu0
  %v4541 = vadd.f32 %v4381, %v4540
  %4542 = vmatmul.bf16.gmra.mxu0 %v4337
  %v4543 = vpop.f32.mrf.mxu0
  %v4544 = vadd.f32 %v4381, %v4543
  %v4545 = vpop.f32.mrf.mxu0
  %v4546 = vadd.f32 %v4381, %v4545
  %4547 = vmatmul.bf16.gmra.mxu0 %v4339
  %v4548 = vpop.f32.mrf.mxu0
  %v4549 = vadd.f32 %v4381, %v4548
  %v4550 = vpop.f32.mrf.mxu0
  %v4551 = vadd.f32 %v4381, %v4550
  %4552 = vmatmul.bf16.gmra.mxu0 %v4341
  %v4553 = vpop.f32.mrf.mxu0
  %v4554 = vadd.f32 %v4381, %v4553
  %v4555 = vpop.f32.mrf.mxu0
  %v4556 = vadd.f32 %v4381, %v4555
  %4557 = vmatmul.bf16.gmra.mxu0 %v4343
  %v4558 = vpop.f32.mrf.mxu0
  %v4559 = vadd.f32 %v4381, %v4558
  %v4560 = vpop.f32.mrf.mxu0
  %v4561 = vadd.f32 %v4381, %v4560
  %4562 = vmatmul.bf16.gmra.mxu0 %v4345
  %v4563 = vpop.f32.mrf.mxu0
  %v4564 = vadd.f32 %v4381, %v4563
  %v4565 = vpop.f32.mrf.mxu0
  %v4566 = vadd.f32 %v4381, %v4565
  %4567 = vdwg.mxu0
  %4568 = vmatpush.bf16.msra.mxu0 %v4462
  %4569 = vmatpush.bf16.msra.mxu0 %v4461
  %4570 = vmatpush.bf16.msra.mxu0 %v4460
  %4571 = vmatpush.bf16.msra.mxu0 %v4459
  %4572 = vmatpush.bf16.msra.mxu0 %v4458
  %4573 = vmatpush.bf16.msra.mxu0 %v4457
  %4574 = vmatpush.bf16.msra.mxu0 %v4456
  %4575 = vmatpush.bf16.msra.mxu0 %v4455
  %4576 = vmatmul.bf16.gmra.mxu0 %v4316
  %v4577 = vpop.f32.mrf.mxu0
  %v4578 = vadd.f32 %v4489, %v4577
  %v4579 = vpop.f32.mrf.mxu0
  %v4580 = vadd.f32 %v4491, %v4579
  %4581 = vmatmul.bf16.gmra.mxu0 %v4318
  %v4582 = vpop.f32.mrf.mxu0
  %v4583 = vadd.f32 %v4494, %v4582
  %v4584 = vpop.f32.mrf.mxu0
  %v4585 = vadd.f32 %v4496, %v4584
  %4586 = vmatmul.bf16.gmra.mxu0 %v4320
  %v4587 = vpop.f32.mrf.mxu0
  %v4588 = vadd.f32 %v4499, %v4587
  %v4589 = vpop.f32.mrf.mxu0
  %v4590 = vadd.f32 %v4501, %v4589
  %4591 = vmatmul.bf16.gmra.mxu0 %v4322
  %v4592 = vpop.f32.mrf.mxu0
  %v4593 = vadd.f32 %v4504, %v4592
  %v4594 = vpop.f32.mrf.mxu0
  %v4595 = vadd.f32 %v4506, %v4594
  %4596 = vmatmul.bf16.gmra.mxu0 %v4324
  %v4597 = vpop.f32.mrf.mxu0
  %v4598 = vadd.f32 %v4509, %v4597
  %v4599 = vpop.f32.mrf.mxu0
  %v4600 = vadd.f32 %v4511, %v4599
  %4601 = vmatmul.bf16.gmra.mxu0 %v4326
  %v4602 = vpop.f32.mrf.mxu0
  %v4603 = vadd.f32 %v4514, %v4602
  %v4604 = vpop.f32.mrf.mxu0
  %v4605 = vadd.f32 %v4516, %v4604
  %4606 = vmatmul.bf16.gmra.mxu0 %v4328
  %v4607 = vpop.f32.mrf.mxu0
  %v4608 = vadd.f32 %v4519, %v4607
  %v4609 = vpop.f32.mrf.mxu0
  %v4610 = vadd.f32 %v4521, %v4609
  %4611 = vmatmul.bf16.gmra.mxu0 %v4330
  %v4612 = vpop.f32.mrf.mxu0
  %v4613 = vadd.f32 %v4524, %v4612
  %v4614 = vpop.f32.mrf.mxu0
  %v4615 = vadd.f32 %v4526, %v4614
  %4616 = vmatmul.bf16.gmra.mxu0 %v4332
  %v4617 = vpop.f32.mrf.mxu0
  %v4618 = vadd.f32 %v4529, %v4617
  %v4619 = vpop.f32.mrf.mxu0
  %v4620 = vadd.f32 %v4531, %v4619
  %4621 = vmatmul.bf16.gmra.mxu0 %v4334
  %v4622 = vpop.f32.mrf.mxu0
  %v4623 = vadd.f32 %v4534, %v4622
  %v4624 = vpop.f32.mrf.mxu0
  %v4625 = vadd.f32 %v4536, %v4624
  %4626 = vmatmul.bf16.gmra.mxu0 %v4336
  %v4627 = vpop.f32.mrf.mxu0
  %v4628 = vadd.f32 %v4539, %v4627
  %v4629 = vpop.f32.mrf.mxu0
  %v4630 = vadd.f32 %v4541, %v4629
  %4631 = vmatmul.bf16.gmra.mxu0 %v4338
  %v4632 = vpop.f32.mrf.mxu0
  %v4633 = vadd.f32 %v4544, %v4632
  %v4634 = vpop.f32.mrf.mxu0
  %v4635 = vadd.f32 %v4546, %v4634
  %4636 = vmatmul.bf16.gmra.mxu0 %v4340
  %v4637 = vpop.f32.mrf.mxu0
  %v4638 = vadd.f32 %v4549, %v4637
  %v4639 = vpop.f32.mrf.mxu0
  %v4640 = vadd.f32 %v4551, %v4639
  %4641 = vmatmul.bf16.gmra.mxu0 %v4342
  %v4642 = vpop.f32.mrf.mxu0
  %v4643 = vadd.f32 %v4554, %v4642
  %v4644 = vpop.f32.mrf.mxu0
  %v4645 = vadd.f32 %v4556, %v4644
  %4646 = vmatmul.bf16.gmra.mxu0 %v4344
  %v4647 = vpop.f32.mrf.mxu0
  %v4648 = vadd.f32 %v4559, %v4647
  %v4649 = vpop.f32.mrf.mxu0
  %v4650 = vadd.f32 %v4561, %v4649
  %4651 = vmatmul.bf16.gmra.mxu0 %v4346
  %v4652 = vpop.f32.mrf.mxu0
  %v4653 = vadd.f32 %v4564, %v4652
  %v4654 = vpop.f32.mrf.mxu0
  %v4655 = vadd.f32 %v4566, %v4654
  %4656 = vdwg.mxu0
  %4657 = vst [vmem:[%s11] sm:$0xff] %v4578
  %4658 = vst [vmem:[%s11 + $0x8] sm:$0xff] %v4580
  %4659 = vst [vmem:[%s11 + $0x10] sm:$0xff] %v4583
  %4660 = vst [vmem:[%s11 + $0x18] sm:$0xff] %v4585
  %4661 = vst [vmem:[%s11 + $0x20] sm:$0xff] %v4588
  %4662 = vst [vmem:[%s11 + $0x28] sm:$0xff] %v4590
  %4663 = vst [vmem:[%s11 + $0x30] sm:$0xff] %v4593
  %4664 = vst [vmem:[%s11 + $0x38] sm:$0xff] %v4595
  %4665 = vst [vmem:[%s11 + $0x40] sm:$0xff] %v4598
  %4666 = vst [vmem:[%s11 + $0x48] sm:$0xff] %v4600
  %4667 = vst [vmem:[%s11 + $0x50] sm:$0xff] %v4603
  %4668 = vst [vmem:[%s11 + $0x58] sm:$0xff] %v4605
  %4669 = vst [vmem:[%s11 + $0x60] sm:$0xff] %v4608
  %4670 = vst [vmem:[%s11 + $0x68] sm:$0xff] %v4610
  %4671 = vst [vmem:[%s11 + $0x70] sm:$0xff] %v4613
  %4672 = vst [vmem:[%s11 + $0x78] sm:$0xff] %v4615
  %4673 = vst [vmem:[%s11 + $0x80] sm:$0xff] %v4618
  %4674 = vst [vmem:[%s11 + $0x88] sm:$0xff] %v4620
  %4675 = vst [vmem:[%s11 + $0x90] sm:$0xff] %v4623
  %4676 = vst [vmem:[%s11 + $0x98] sm:$0xff] %v4625
  %4677 = vst [vmem:[%s11 + $0xa0] sm:$0xff] %v4628
  %4678 = vst [vmem:[%s11 + $0xa8] sm:$0xff] %v4630
  %4679 = vst [vmem:[%s11 + $0xb0] sm:$0xff] %v4633
  %4680 = vst [vmem:[%s11 + $0xb8] sm:$0xff] %v4635
  %4681 = vst [vmem:[%s11 + $0xc0] sm:$0xff] %v4638
  %4682 = vst [vmem:[%s11 + $0xc8] sm:$0xff] %v4640
  %4683 = vst [vmem:[%s11 + $0xd0] sm:$0xff] %v4643
  %4684 = vst [vmem:[%s11 + $0xd8] sm:$0xff] %v4645
  %4685 = vst [vmem:[%s11 + $0xe0] sm:$0xff] %v4648
  %4686 = vst [vmem:[%s11 + $0xe8] sm:$0xff] %v4650
  %4687 = vst [vmem:[%s11 + $0xf0] sm:$0xff] %v4653
  %4688 = vst [vmem:[%s11 + $0xf8] sm:$0xff] %v4655
  // Predicated region
  $region46: #{epd_forward.1} parent=0 // pred_check
    _
  $region47: #{epd_forward.1} parent=0 // pred_check_branch
    %4690 = sbr.rel (0) target = $region49
  $region48: #{epd_forward.1} parent=0 // pred_region
    _
  $region49: #{epd_forward.1} parent=0 // pred_fallthru
    _
  // Predicated region
  $region50: #{epd_forward.1} parent=0 // pred_check
    _
  $region51: #{epd_forward.1} parent=0 // pred_check_branch
    %4692 = sbr.rel (0) target = $region53
  $region52: #{epd_forward.1} parent=0 // pred_region
    _
  $region53: #{epd_forward.1} parent=0 // pred_fallthru
    _

</llo_original>
